<compile_context>
chip_gen: v5e
topology: v5e:2x2
jax: 0.10.0
libtpu: 0.0.40
codegen_flags: <defaults>
</compile_context>

<pallas_src>
import math

import jax
import jax.numpy as jnp
from jax.experimental import pallas as pl
from jax.experimental.pallas import tpu as pltpu


# ----------------------------------------------------------------------------
# Config (mirrors model_conf.embed / model_conf used by the PyTorch module)
# ----------------------------------------------------------------------------
INDEX_EMBED_SIZE = 32          # index_embed_size == t_embed_size
AATYPE_EMBED_SIZE = 16
NUM_AATYPES = 21
RAW_ESM_SIZE = 32
ESM_EMBED_SIZE = 16
NUM_BINS = 22
MIN_BIN = 1e-5
MAX_BIN = 20.0
NODE_EMBED_SIZE = 128
EDGE_EMBED_SIZE = 128

T_DIM = INDEX_EMBED_SIZE + 1                                                # 33
NODE_IN = T_DIM + INDEX_EMBED_SIZE + AATYPE_EMBED_SIZE + ESM_EMBED_SIZE     # 97
EDGE_IN = (2 * T_DIM + INDEX_EMBED_SIZE + 2 * AATYPE_EMBED_SIZE
           + 2 * ESM_EMBED_SIZE + NUM_BINS)                                 # 184
K_REL = INDEX_EMBED_SIZE // 2                                               # 16

LN_EPS = 1e-5
NODE_PALLAS_MIN_ROWS = 2048          # below this plain XLA beats launch overhead
NODE_VMEM_LIMIT = 32 * 1024 * 1024


def _tpu_vmem_capacity_bytes():
    """Physical VMEM of the attached TPU (per TensorCore); conservative default."""
    try:
        info = pltpu.get_tpu_info()
        cap = getattr(info, "vmem_capacity_bytes", None)
        if cap:
            return int(cap)
    except Exception:
        pass
    return 64 * 1024 * 1024


_VMEM_CAP = _tpu_vmem_capacity_bytes()
if _VMEM_CAP >= 100 * 1024 * 1024:           # v5e / v6e: 128 MiB physical VMEM
    EDGE_TARGET_PAIRS = 16384
    EDGE_VMEM_LIMIT = 96 * 1024 * 1024
else:                                        # v7x (64 MiB per TC) or unknown
    EDGE_TARGET_PAIRS = 8192
    EDGE_VMEM_LIMIT = 48 * 1024 * 1024


# ----------------------------------------------------------------------------
# Pallas kernel 1: row-tiled Linear-ReLU-Linear-ReLU-Linear-LayerNorm
# (node path when B*N is large; bf16 MXU operands, f32 accumulation/epilogue)
# ----------------------------------------------------------------------------
def _mlp_ln_kernel(x_ref, w1_ref, w2_ref, w3_ref, bias_ref, o_ref):
    b1 = bias_ref[0:1, :]
    b2 = bias_ref[1:2, :]
    b3 = bias_ref[2:3, :]
    g = bias_ref[3:4, :]
    be = bias_ref[4:5, :]
    H = o_ref.shape[-1]

    h = jnp.dot(x_ref[...], w1_ref[...], preferred_element_type=jnp.float32) + b1
    h = jnp.maximum(h, 0.0).astype(jnp.bfloat16)
    h = jnp.dot(h, w2_ref[...], preferred_element_type=jnp.float32) + b2
    h = jnp.maximum(h, 0.0).astype(jnp.bfloat16)
    h = jnp.dot(h, w3_ref[...], preferred_element_type=jnp.float32) + b3

    # one-pass LayerNorm stats (f32, clamped variance)
    inv_h = 1.0 / H
    mu = jnp.sum(h, axis=-1, keepdims=True) * inv_h
    var = jnp.maximum(jnp.sum(h * h, axis=-1, keepdims=True) * inv_h - mu * mu, 0.0)
    o_ref[...] = (h - mu) * jax.lax.rsqrt(var + LN_EPS) * g + be


def mlp_ln_pallas(x, w1, b1, w2, b2, w3, b3, gamma, beta, *, tile_m=512):
    """x: [R, D_in] -> [R, H] float32.  Ragged tails handled by Pallas masked
    boundary blocks via pl.cdiv grids (no full-slab pad)."""
    R, din = x.shape
    H = w1.shape[1]
    if tile_m >= R:
        tile_m = R                               # single full-extent block
    else:
        tile_m = max(16, (tile_m // 16) * 16)    # bf16 sublane-pack aligned
    grid = (pl.cdiv(R, tile_m),)

    bias_pack = jnp.concatenate(
        [jnp.stack([b1, b2, b3, gamma, beta]).astype(jnp.float32),
         jnp.zeros((3, H), jnp.float32)], axis=0)                 # (8, H)

    full = lambda i: (0, 0)
    return pl.pallas_call(
        _mlp_ln_kernel,
        out_shape=jax.ShapeDtypeStruct((R, H), jnp.float32),
        grid_spec=pltpu.PrefetchScalarGridSpec(
            num_scalar_prefetch=0,
            grid=grid,
            in_specs=[
                pl.BlockSpec((tile_m, din), lambda i: (i, 0)),
                pl.BlockSpec((din, H), full),
                pl.BlockSpec((H, H), full),
                pl.BlockSpec((H, H), full),
                pl.BlockSpec((8, H), full),
            ],
            out_specs=pl.BlockSpec((tile_m, H), lambda i: (i, 0)),
        ),
        compiler_params=pltpu.CompilerParams(
            dimension_semantics=("parallel",),
            vmem_limit_bytes=NODE_VMEM_LIMIT),
    )(x.astype(jnp.bfloat16), w1.astype(jnp.bfloat16), w2.astype(jnp.bfloat16),
      w3.astype(jnp.bfloat16), bias_pack)


# ----------------------------------------------------------------------------
# Pallas kernel 2: fused edge embedder.
#   Pair features are generated in VMEM from per-residue inputs:
#     rel sin/cos via  sin(a_i - a_j) = s_i c_j - c_i s_j,
#                      cos(a_i - a_j) = c_i c_j + s_i s_j
#     distogram via squared pairwise CA distances vs squared bin edges.
#   h1(i,j) = rel @ W_rel + dgram @ W_dg + A_i[i] + A_j[j]   (edge b1 in A_i)
#   then ReLU -> Linear -> ReLU -> Linear -> LayerNorm, all per (i,j) pair.
# ----------------------------------------------------------------------------
def _edge_mlp_kernel(ai_ref, aj_ref, phi_ref, phj_ref, cai_ref, caj_ref,
                     wrel_ref, wdg_ref, w2_ref, w3_ref, bias_ref, o_ref):
    _, ti, H = ai_ref.shape
    tj = aj_ref.shape[1]
    nb = wdg_ref.shape[0]

    b2 = bias_ref[0:1, :]
    b3 = bias_ref[1:2, :]
    g = bias_ref[2:3, :]
    be = bias_ref[3:4, :]
    lo2 = bias_ref[4:5, 0:nb]       # squared lower bin edges, (1, 22)
    hi2 = bias_ref[5:6, 0:nb]       # squared upper bin edges, (1, 22)

    # ---- pair features generated in VMEM (no [N,N,F] slab crosses HBM) ----
    phi = phi_ref[0]                # [ti, 32] = [sin(arg_i) | cos(arg_i)]
    phj = phj_ref[0]                # [tj, 32]
    sin_i = phi[:, None, :K_REL]
    cos_i = phi[:, None, K_REL:]
    sin_j = phj[None, :, :K_REL]
    cos_j = phj[None, :, K_REL:]
    rel_sin = (sin_i * cos_j - cos_i * sin_j).astype(jnp.bfloat16)   # [ti,tj,16]
    rel_cos = (cos_i * cos_j + sin_i * sin_j).astype(jnp.bfloat16)   # [ti,tj,16]

    cai = cai_ref[0]                # [ti, 3]
    caj = caj_ref[0]                # [tj, 3]
    d2 = None
    for d in range(3):
        dd = cai[:, None, d:d + 1] - caj[None, :, d:d + 1]           # [ti,tj,1]
        d2 = dd * dd if d2 is None else d2 + dd * dd
    dgram = jnp.where((d2 > lo2) & (d2 < hi2), 1.0, 0.0).astype(jnp.bfloat16)

    # ---- h1 = rel @ Wrel + dgram @ Wdg + a_i + a_j (edge b1 folded in a_i) ----
    M = ti * tj
    h = jnp.dot(rel_sin.reshape(M, K_REL), wrel_ref[0:K_REL, :],
                preferred_element_type=jnp.float32)
    h = h + jnp.dot(rel_cos.reshape(M, K_REL), wrel_ref[K_REL:, :],
                    preferred_element_type=jnp.float32)
    h = h + jnp.dot(dgram.reshape(M, nb), wdg_ref[...],
                    preferred_element_type=jnp.float32)
    h = h.reshape(ti, tj, H) + ai_ref[0][:, None, :] + aj_ref[0][None, :, :]
    h = jnp.maximum(h, 0.0).astype(jnp.bfloat16).reshape(M, H)

    h = jnp.dot(h, w2_ref[...], preferred_element_type=jnp.float32) + b2
    h = jnp.maximum(h, 0.0).astype(jnp.bfloat16)
    h = jnp.dot(h, w3_ref[...], preferred_element_type=jnp.float32) + b3

    # ---- one-pass LayerNorm (f32 stats, clamped variance) ----
    inv_h = 1.0 / H
    mu = jnp.sum(h, axis=-1, keepdims=True) * inv_h
    var = jnp.maximum(jnp.sum(h * h, axis=-1, keepdims=True) * inv_h - mu * mu, 0.0)
    out = (h - mu) * jax.lax.rsqrt(var + LN_EPS) * g + be
    o_ref[0] = out.reshape(ti, tj, H).astype(o_ref.dtype)


def _pick_edge_tiles(num_res, target_pairs=EDGE_TARGET_PAIRS,
                     vmem_limit=EDGE_VMEM_LIMIT):
    """Pick (tile_i, tile_j): ~target_pairs pairs per grid step, tj aligned to
    the bf16 sublane pack (16), ti to 8, or full-extent when tile >= N.
    ~2.5 KiB of live VMEM per pair in flight (double-buffered bf16 output block
    + f32/bf16 intermediates); keep the tile under ~60% of the scoped limit."""
    max_pairs = max(256, int(0.6 * vmem_limit) // 2560)
    pairs = min(target_pairs, max_pairs)

    def clamp(v, mult):
        if v >= num_res:
            return num_res
        return max(mult, (v // mult) * mult)

    tj = clamp(min(num_res, 128), 16)
    ti = clamp(max(8, pairs // max(tj, 1)), 8)
    return ti, tj


def edge_mlp_pallas(a_i, a_j, phase, ca, w_rel, w_dg, w2, w3, bias_pack, *,
                    tile_i, tile_j, out_dtype=jnp.bfloat16,
                    vmem_limit=EDGE_VMEM_LIMIT):
    B, N, H = a_i.shape
    grid = (B, pl.cdiv(N, tile_i), pl.cdiv(N, tile_j))
    full = lambda b, i, j: (0, 0)
    row_i = lambda b, i, j: (b, i, 0)
    row_j = lambda b, i, j: (b, j, 0)
    return pl.pallas_call(
        _edge_mlp_kernel,
        out_shape=jax.ShapeDtypeStruct((B, N, N, H), out_dtype),
        grid_spec=pltpu.PrefetchScalarGridSpec(
            num_scalar_prefetch=0,
            grid=grid,
            in_specs=[
                pl.BlockSpec((1, tile_i, H), row_i),                 # A_i (incl. b1)
                pl.BlockSpec((1, tile_j, H), row_j),                 # A_j
                pl.BlockSpec((1, tile_i, phase.shape[-1]), row_i),   # phase_i
                pl.BlockSpec((1, tile_j, phase.shape[-1]), row_j),   # phase_j
                pl.BlockSpec((1, tile_i, ca.shape[-1]), row_i),      # ca_i
                pl.BlockSpec((1, tile_j, ca.shape[-1]), row_j),      # ca_j
                pl.BlockSpec((w_rel.shape[0], H), full),
                pl.BlockSpec((w_dg.shape[0], H), full),
                pl.BlockSpec((H, H), full),
                pl.BlockSpec((H, H), full),
                pl.BlockSpec((8, H), full),
            ],
            out_specs=pl.BlockSpec((1, tile_i, tile_j, H),
                                   lambda b, i, j: (b, i, j, 0)),
        ),
        compiler_params=pltpu.CompilerParams(
            dimension_semantics=("parallel", "parallel", "parallel"),
            vmem_limit_bytes=vmem_limit),
    )(a_i, a_j, phase, phase, ca, ca,
      w_rel.astype(jnp.bfloat16), w_dg.astype(jnp.bfloat16),
      w2.astype(jnp.bfloat16), w3.astype(jnp.bfloat16), bias_pack)


# ----------------------------------------------------------------------------
# Pure-JAX references (node path / numerics-matched kernel mirrors for tests)
# ----------------------------------------------------------------------------
def mlp_ln_ref(x, w1, b1, w2, b2, w3, b3, gamma, beta):
    x = x.astype(jnp.float32)
    h = jnp.maximum(jnp.dot(x, w1) + b1, 0.0)
    h = jnp.maximum(jnp.dot(h, w2) + b2, 0.0)
    h = jnp.dot(h, w3) + b3
    mu = jnp.mean(h, axis=-1, keepdims=True)
    var = jnp.mean((h - mu) ** 2, axis=-1, keepdims=True)
    return (h - mu) / jnp.sqrt(var + LN_EPS) * gamma + beta


def mlp_ln_bf16_ref(x, w1, b1, w2, b2, w3, b3, gamma, beta):
    """Mirror of _mlp_ln_kernel numerics (bf16 MXU operands, f32 accum)."""
    bf = jnp.bfloat16
    h = jnp.dot(x.astype(bf), w1.astype(bf), preferred_element_type=jnp.float32) + b1
    h = jnp.maximum(h, 0.0).astype(bf)
    h = jnp.dot(h, w2.astype(bf), preferred_element_type=jnp.float32) + b2
    h = jnp.maximum(h, 0.0).astype(bf)
    h = jnp.dot(h, w3.astype(bf), preferred_element_type=jnp.float32) + b3
    mu = jnp.mean(h, axis=-1, keepdims=True)
    var = jnp.maximum(jnp.mean(h * h, axis=-1, keepdims=True) - mu * mu, 0.0)
    return (h - mu) * jax.lax.rsqrt(var + LN_EPS) * gamma + beta


def _sq_bin_edges():
    lower = jnp.linspace(MIN_BIN, MAX_BIN, NUM_BINS)
    upper = jnp.concatenate([lower[1:], jnp.array([1e8], lower.dtype)])
    return jnp.square(lower), jnp.square(upper)


def edge_mlp_bf16_ref(a_i, a_j, phase, ca, w_rel, w_dg, w2, w3, b2, b3, gamma, beta):
    """Mirror of _edge_mlp_kernel numerics in plain JAX."""
    bf = jnp.bfloat16
    B, N, H = a_i.shape
    sin, cos = phase[..., :K_REL], phase[..., K_REL:]
    rel_sin = (sin[:, :, None, :] * cos[:, None, :, :]
               - cos[:, :, None, :] * sin[:, None, :, :]).astype(bf)
    rel_cos = (cos[:, :, None, :] * cos[:, None, :, :]
               + sin[:, :, None, :] * sin[:, None, :, :]).astype(bf)
    diff = ca[:, :, None, :] - ca[:, None, :, :]
    d2 = jnp.sum(diff * diff, axis=-1, keepdims=True)
    lo2, hi2 = _sq_bin_edges()
    dgram = jnp.where((d2 > lo2) & (d2 < hi2), 1.0, 0.0).astype(bf)
    wr = w_rel.astype(bf)
    h = (jnp.einsum("bijk,kh->bijh", rel_sin, wr[:K_REL],
                    preferred_element_type=jnp.float32)
         + jnp.einsum("bijk,kh->bijh", rel_cos, wr[K_REL:],
                      preferred_element_type=jnp.float32)
         + jnp.einsum("bijk,kh->bijh", dgram, w_dg.astype(bf),
                      preferred_element_type=jnp.float32))
    h = h + a_i[:, :, None, :] + a_j[:, None, :, :]
    h = jnp.maximum(h, 0.0).astype(bf).reshape(B * N * N, H)
    h = jnp.dot(h, w2.astype(bf), preferred_element_type=jnp.float32) + b2
    h = jnp.maximum(h, 0.0).astype(bf)
    h = jnp.dot(h, w3.astype(bf), preferred_element_type=jnp.float32) + b3
    mu = jnp.mean(h, axis=-1, keepdims=True)
    var = jnp.maximum(jnp.mean(h * h, axis=-1, keepdims=True) - mu * mu, 0.0)
    out = (h - mu) * jax.lax.rsqrt(var + LN_EPS) * gamma + beta
    return out.reshape(B, N, N, H)


# ----------------------------------------------------------------------------
# Glue: feature construction (cheap O(B*N) work, plain JAX)
# ----------------------------------------------------------------------------
def get_index_embedding(indices, embed_size, max_len=2056):
    K = jnp.arange(embed_size // 2, dtype=jnp.float32)
    scale = max_len ** (2.0 * K / embed_size)
    arg = indices[..., None].astype(jnp.float32) * math.pi / scale
    return jnp.concatenate([jnp.sin(arg), jnp.cos(arg)], axis=-1)


def get_timestep_embedding(timesteps, embedding_dim, max_positions=10000):
    assert timesteps.ndim == 1
    ts = timesteps * max_positions
    half_dim = embedding_dim // 2
    emb = math.log(max_positions) / (half_dim - 1)
    emb = jnp.exp(jnp.arange(half_dim, dtype=jnp.float32) * -emb)
    emb = ts.astype(jnp.float32)[:, None] * emb[None, :]
    emb = jnp.concatenate([jnp.sin(emb), jnp.cos(emb)], axis=1)
    if embedding_dim % 2 == 1:
        emb = jnp.pad(emb, ((0, 0), (0, 1)))
    return emb


def calc_distogram(pos, min_bin, max_bin, num_bins):
    d = jnp.linalg.norm(pos[:, :, None, :] - pos[:, None, :, :], axis=-1)[..., None]
    lower = jnp.linspace(min_bin, max_bin, num_bins)
    upper = jnp.concatenate([lower[1:], jnp.array([1e8], dtype=lower.dtype)])
    return ((d > lower) & (d < upper)).astype(pos.dtype)


def cross_concat(feats_1d, batch_size, num_res):
    # Used only by the validation code in __main__ (the forward pass fuses it).
    a = jnp.tile(feats_1d[:, :, None, :], (1, 1, num_res, 1))
    b = jnp.tile(feats_1d[:, None, :, :], (1, num_res, 1, 1))
    return jnp.concatenate([a, b], axis=-1).astype(jnp.float32).reshape(
        batch_size, num_res * num_res, -1)


def _residue_feats(params, aatype, seq_idx, t, fixed_mask, esm_embed):
    B, N = seq_idx.shape
    t_emb = get_timestep_embedding(t, INDEX_EMBED_SIZE)                       # [B, 32]
    prot_t = jnp.concatenate(
        [jnp.tile(t_emb[:, None, :], (1, N, 1)),
         fixed_mask[..., None].astype(jnp.float32)], axis=-1)                 # [B, N, 33]
    idx_emb = get_index_embedding(seq_idx, INDEX_EMBED_SIZE)                  # [B, N, 32]
    aatype_m = jnp.where(fixed_mask == 0, jnp.full_like(aatype, NUM_AATYPES), aatype)
    aa_emb = params["aatype_table"][aatype_m]                                 # [B, N, 16]
    esm = esm_embed @ params["esm_w"] + params["esm_b"]                       # [B, N, 16]
    return prot_t, idx_emb, aa_emb, esm


def _split_edge_w1(w1):
    """Split the [184, H] edge first-layer weight by the edge_in column layout:
       [ t_i | t_j | rel_idx_emb | aa_i | aa_j | esm_i | esm_j | distogram ]."""
    o = 0

    def take(n):
        nonlocal o
        w = w1[o:o + n]
        o += n
        return w

    w_t_i = take(T_DIM)
    w_t_j = take(T_DIM)
    w_rel = take(INDEX_EMBED_SIZE)
    w_aa_i = take(AATYPE_EMBED_SIZE)
    w_aa_j = take(AATYPE_EMBED_SIZE)
    w_es_i = take(ESM_EMBED_SIZE)
    w_es_j = take(ESM_EMBED_SIZE)
    w_dg = take(NUM_BINS)
    assert o == EDGE_IN
    w_i = jnp.concatenate([w_t_i, w_aa_i, w_es_i], axis=0)    # [65, H]
    w_j = jnp.concatenate([w_t_j, w_aa_j, w_es_j], axis=0)    # [65, H]
    return w_i, w_j, w_rel, w_dg


def _edge_linear_operands(params, prot_t, aa_emb, esm):
    """Per-residue halves of the first edge Linear (cross-concat fused away)."""
    w_i, w_j, w_rel, w_dg = _split_edge_w1(params["e_w1"])
    u = jnp.concatenate([prot_t, aa_emb, esm], axis=-1)        # [B, N, 65]
    hi = jax.lax.Precision.HIGHEST
    a_i = jnp.einsum("bnf,fh->bnh", u, w_i, precision=hi) + params["e_b1"]
    a_j = jnp.einsum("bnf,fh->bnh", u, w_j, precision=hi)
    return a_i, a_j, w_rel, w_dg


def _edge_bias_pack(params):
    """(8, H) f32: b2, b3, gamma, beta, lo^2 bin edges, hi^2 bin edges, 0, 0."""
    H = EDGE_EMBED_SIZE
    lo2, hi2 = _sq_bin_edges()
    lo2_row = jnp.zeros((H,), jnp.float32).at[:NUM_BINS].set(lo2)
    hi2_row = jnp.zeros((H,), jnp.float32).at[:NUM_BINS].set(hi2)
    zero = jnp.zeros((H,), jnp.float32)
    return jnp.stack([params["e_b2"], params["e_b3"], params["e_g"],
                      params["e_be"], lo2_row, hi2_row, zero, zero]
                     ).astype(jnp.float32)


# ----------------------------------------------------------------------------
# Deterministic parameter init
# ----------------------------------------------------------------------------
def _linear_params(key, fan_in, fan_out):
    kw, kb = jax.random.split(key)
    bound = 1.0 / math.sqrt(fan_in)
    w = jax.random.uniform(kw, (fan_in, fan_out), jnp.float32, -bound, bound)
    b = jax.random.uniform(kb, (fan_out,), jnp.float32, -bound, bound)
    return w, b


def init_params(seed=0):
    key = jax.random.PRNGKey(seed)
    keys = jax.random.split(key, 16)
    p = {}
    p["n_w1"], p["n_b1"] = _linear_params(keys[0], NODE_IN, NODE_EMBED_SIZE)
    p["n_w2"], p["n_b2"] = _linear_params(keys[1], NODE_EMBED_SIZE, NODE_EMBED_SIZE)
    p["n_w3"], p["n_b3"] = _linear_params(keys[2], NODE_EMBED_SIZE, NODE_EMBED_SIZE)
    p["n_g"] = jnp.ones((NODE_EMBED_SIZE,), jnp.float32)
    p["n_be"] = jnp.zeros((NODE_EMBED_SIZE,), jnp.float32)
    p["e_w1"], p["e_b1"] = _linear_params(keys[3], EDGE_IN, EDGE_EMBED_SIZE)
    p["e_w2"], p["e_b2"] = _linear_params(keys[4], EDGE_EMBED_SIZE, EDGE_EMBED_SIZE)
    p["e_w3"], p["e_b3"] = _linear_params(keys[5], EDGE_EMBED_SIZE, EDGE_EMBED_SIZE)
    p["e_g"] = jnp.ones((EDGE_EMBED_SIZE,), jnp.float32)
    p["e_be"] = jnp.zeros((EDGE_EMBED_SIZE,), jnp.float32)
    p["aatype_table"] = jax.random.normal(keys[6], (NUM_AATYPES + 1, AATYPE_EMBED_SIZE),
                                          jnp.float32)
    p["esm_w"], p["esm_b"] = _linear_params(keys[7], RAW_ESM_SIZE, ESM_EMBED_SIZE)
    return p


# ----------------------------------------------------------------------------
# Embedder forward
# ----------------------------------------------------------------------------
def embedder_forward(params, aatype, seq_idx, t, fixed_mask, self_conditioning_ca,
                     esm_embed, *, edge_out_dtype=jnp.bfloat16):
    B, N = seq_idx.shape
    prot_t, idx_emb, aa_emb, esm = _residue_feats(
        params, aatype, seq_idx, t, fixed_mask, esm_embed)

    # --- node path (B*N rows): tiny -> plain XLA; large -> Pallas row MLP ---
    node_in = jnp.concatenate([prot_t, idx_emb, aa_emb, esm],
                              axis=-1).astype(jnp.bfloat16)
    node_args = (params["n_w1"], params["n_b1"], params["n_w2"], params["n_b2"],
                 params["n_w3"], params["n_b3"], params["n_g"], params["n_be"])
    rows = B * N
    if rows >= NODE_PALLAS_MIN_ROWS:
        node_flat = mlp_ln_pallas(node_in.reshape(rows, -1), *node_args, tile_m=512)
    else:
        node_flat = mlp_ln_ref(node_in.reshape(rows, -1), *node_args)
    node_embed = node_flat.reshape(B, N, NODE_EMBED_SIZE)

    # --- edge path: O(B*N) kernel inputs, pair features generated in VMEM ---
    a_i, a_j, w_rel, w_dg = _edge_linear_operands(params, prot_t, aa_emb, esm)
    phase = idx_emb                                   # [B, N, 32] sin|cos phases
    ca = self_conditioning_ca.astype(jnp.float32)     # [B, N, 3]
    ti, tj = _pick_edge_tiles(N)
    edge_embed = edge_mlp_pallas(
        a_i, a_j, phase, ca, w_rel, w_dg,
        params["e_w2"], params["e_w3"], _edge_bias_pack(params),
        tile_i=ti, tile_j=tj, out_dtype=edge_out_dtype)

    return node_embed, edge_embed


# ----------------------------------------------------------------------------
if __name__ == "__main__":
    B, N = 2, 16
    key = jax.random.PRNGKey(0)
    k1, k2, k3, k4, k5 = jax.random.split(key, 5)

    aatype = jax.random.randint(k1, (B, N), 0, NUM_AATYPES, dtype=jnp.int32)
    seq_idx = jnp.tile(jnp.arange(N, dtype=jnp.int32)[None, :], (B, 1))
    t = jax.random.uniform(k2, (B,), jnp.float32)
    fixed_mask = (jax.random.uniform(k3, (B, N)) > 0.5).astype(jnp.float32)
    self_conditioning_ca = jax.random.normal(k4, (B, N, 3), jnp.float32) * 5.0
    esm_embed = jax.random.normal(k5, (B, N, RAW_ESM_SIZE), jnp.float32)

    params = init_params(seed=0)

    fwd = jax.jit(embedder_forward)
    node_embed, edge_embed = fwd(params, aatype, seq_idx, t, fixed_mask,
                                 self_conditioning_ca, esm_embed)
    jax.block_until_ready((node_embed, edge_embed))

    assert node_embed.shape == (B, N, NODE_EMBED_SIZE)
    assert edge_embed.shape == (B, N, N, EDGE_EMBED_SIZE)
    assert edge_embed.dtype == jnp.bfloat16
    assert bool(jnp.all(jnp.isfinite(node_embed)))
    assert bool(jnp.all(jnp.isfinite(edge_embed.astype(jnp.float32))))

    # --- check 1: first-layer decomposition == original cross-concat layout (f32) ---
    prot_t, idx_emb, aa_emb, esm = _residue_feats(
        params, aatype, seq_idx, t, fixed_mask, esm_embed)
    a_i, a_j, w_rel, w_dg = _edge_linear_operands(params, prot_t, aa_emb, esm)
    rel_off = (seq_idx[:, :, None] - seq_idx[:, None, :]).reshape(B, N * N)
    rel_emb = get_index_embedding(rel_off, INDEX_EMBED_SIZE).reshape(B, N, N, -1)
    dgram_ref = calc_distogram(self_conditioning_ca, MIN_BIN, MAX_BIN, NUM_BINS)
    edge_in_full = jnp.concatenate([
        cross_concat(prot_t, B, N),
        rel_emb.reshape(B, N * N, -1),
        cross_concat(aa_emb, B, N),
        cross_concat(esm, B, N),
        dgram_ref.reshape(B, N * N, -1),
    ], axis=-1).astype(jnp.float32)
    hi = jax.lax.Precision.HIGHEST
    h_full = jnp.einsum("brf,fh->brh", edge_in_full, params["e_w1"],
                        precision=hi) + params["e_b1"]
    h_dec = (a_i[:, :, None, :] + a_j[:, None, :, :]
             + jnp.einsum("bijp,ph->bijh", rel_emb, w_rel, precision=hi)
             + jnp.einsum("bijp,ph->bijh", dgram_ref, w_dg, precision=hi)
             ).reshape(B, N * N, -1)
    assert jnp.allclose(h_full, h_dec, atol=2e-4, rtol=2e-4)

    # --- check 2: in-kernel-style pair features == reference features ---
    sin, cos = idx_emb[..., :K_REL], idx_emb[..., K_REL:]
    rel_id = jnp.concatenate(
        [sin[:, :, None, :] * cos[:, None, :, :] - cos[:, :, None, :] * sin[:, None, :, :],
         cos[:, :, None, :] * cos[:, None, :, :] + sin[:, :, None, :] * sin[:, None, :, :]],
        axis=-1)
    assert jnp.allclose(rel_id, rel_emb, atol=5e-4)
    diff = self_conditioning_ca[:, :, None, :] - self_conditioning_ca[:, None, :, :]
    d2 = jnp.sum(diff * diff, axis=-1, keepdims=True)
    lo2, hi2 = _sq_bin_edges()
    dgram_sq = jnp.where((d2 > lo2) & (d2 < hi2), 1.0, 0.0)
    assert float(jnp.mean(jnp.abs(dgram_sq - dgram_ref))) < 1e-3

    # --- check 3: fused-edge Pallas kernel vs numerics-matched JAX mirror ---
    phase = idx_emb
    ti, tj = _pick_edge_tiles(N)
    edge_f32 = edge_mlp_pallas(a_i, a_j, phase, self_conditioning_ca, w_rel, w_dg,
                               params["e_w2"], params["e_w3"],
                               _edge_bias_pack(params),
                               tile_i=ti, tile_j=tj, out_dtype=jnp.float32)
    edge_ref = edge_mlp_bf16_ref(a_i, a_j, phase, self_conditioning_ca, w_rel, w_dg,
                                 params["e_w2"], params["e_w3"],
                                 params["e_b2"], params["e_b3"],
                                 params["e_g"], params["e_be"])
    err = jnp.abs(edge_f32 - edge_ref)
    tol = 5e-3 + 5e-3 * jnp.abs(edge_ref)
    assert float(jnp.mean((err > tol).astype(jnp.float32))) < 5e-3
    assert float(jnp.mean(err)) < 2e-3
    # default bf16 output is just a final cast of the same kernel values
    assert jnp.allclose(edge_embed.astype(jnp.float32), edge_f32,
                        atol=2e-2, rtol=2e-2)

    # --- check 4: generic row-MLP Pallas kernel (ragged tail, bf16 MXU) ---
    x_chk = jax.random.normal(jax.random.PRNGKey(7), (1000, EDGE_IN), jnp.float32)
    got = mlp_ln_pallas(x_chk, params["e_w1"], params["e_b1"], params["e_w2"],
                        params["e_b2"], params["e_w3"], params["e_b3"],
                        params["e_g"], params["e_be"], tile_m=512)
    ref = mlp_ln_bf16_ref(x_chk, params["e_w1"], params["e_b1"], params["e_w2"],
                          params["e_b2"], params["e_w3"], params["e_b3"],
                          params["e_g"], params["e_be"])
    assert jnp.allclose(got, ref, atol=5e-3, rtol=5e-3)

    print("KERNEL_OK")
</pallas_src>

<mosaic_0001>
module attributes {stable_mosaic.version = 11 : i64} {
  func.func @_edge_mlp_kernel(%arg0: i32, %arg1: i32, %arg2: i32, %arg3: memref<1x16x128xf32, #tpu.memory_space<vmem>>, %arg4: memref<1x16x128xf32, #tpu.memory_space<vmem>>, %arg5: memref<1x16x32xf32, #tpu.memory_space<vmem>>, %arg6: memref<1x16x32xf32, #tpu.memory_space<vmem>>, %arg7: memref<1x16x3xf32, #tpu.memory_space<vmem>>, %arg8: memref<1x16x3xf32, #tpu.memory_space<vmem>>, %arg9: memref<32x128xbf16, #tpu.memory_space<vmem>>, %arg10: memref<22x128xbf16, #tpu.memory_space<vmem>>, %arg11: memref<128x128xbf16, #tpu.memory_space<vmem>>, %arg12: memref<128x128xbf16, #tpu.memory_space<vmem>>, %arg13: memref<8x128xf32, #tpu.memory_space<vmem>>, %arg14: memref<1x16x16x128xbf16, #tpu.memory_space<vmem>>) attributes {dimension_semantics = [#tpu.dimension_semantics<parallel>, #tpu.dimension_semantics<parallel>, #tpu.dimension_semantics<parallel>], iteration_bounds = array<i64: 2, 1, 1>, scalar_prefetch = 0 : i64, scratch_operands = 0 : i64, tpu.core_type = #tpu.core_type<tc>, window_params = [{transform_indices = @transform_0, window_bounds = array<i64: 1, 16, 128>}, {transform_indices = @transform_1, window_bounds = array<i64: 1, 16, 128>}, {transform_indices = @transform_2, window_bounds = array<i64: 1, 16, 32>}, {transform_indices = @transform_3, window_bounds = array<i64: 1, 16, 32>}, {transform_indices = @transform_4, window_bounds = array<i64: 1, 16, 3>}, {transform_indices = @transform_5, window_bounds = array<i64: 1, 16, 3>}, {pipeline_mode = #tpu.pipeline_mode<synchronous>, transform_indices = @transform_6, window_bounds = array<i64: 32, 128>}, {pipeline_mode = #tpu.pipeline_mode<synchronous>, transform_indices = @transform_7, window_bounds = array<i64: 22, 128>}, {pipeline_mode = #tpu.pipeline_mode<synchronous>, transform_indices = @transform_8, window_bounds = array<i64: 128, 128>}, {pipeline_mode = #tpu.pipeline_mode<synchronous>, transform_indices = @transform_9, window_bounds = array<i64: 128, 128>}, {pipeline_mode = #tpu.pipeline_mode<synchronous>, transform_indices = @transform_10, window_bounds = array<i64: 8, 128>}, {transform_indices = @transform_11, window_bounds = array<i64: 1, 16, 16, 128>}]} {
    %c0 = arith.constant 0 : index
    %c0_0 = arith.constant 0 : index
    %0 = vector.load %arg13[%c0, %c0_0] : memref<8x128xf32, #tpu.memory_space<vmem>>, vector<1x128xf32>
    %c1 = arith.constant 1 : index
    %c0_1 = arith.constant 0 : index
    %1 = vector.load %arg13[%c1, %c0_1] : memref<8x128xf32, #tpu.memory_space<vmem>>, vector<1x128xf32>
    %c2 = arith.constant 2 : index
    %c0_2 = arith.constant 0 : index
    %2 = vector.load %arg13[%c2, %c0_2] : memref<8x128xf32, #tpu.memory_space<vmem>>, vector<1x128xf32>
    %c3 = arith.constant 3 : index
    %c0_3 = arith.constant 0 : index
    %3 = vector.load %arg13[%c3, %c0_3] : memref<8x128xf32, #tpu.memory_space<vmem>>, vector<1x128xf32>
    %c4 = arith.constant 4 : index
    %c0_4 = arith.constant 0 : index
    %4 = vector.load %arg13[%c4, %c0_4] : memref<8x128xf32, #tpu.memory_space<vmem>>, vector<1x22xf32>
    %c5 = arith.constant 5 : index
    %c0_5 = arith.constant 0 : index
    %5 = vector.load %arg13[%c5, %c0_5] : memref<8x128xf32, #tpu.memory_space<vmem>>, vector<1x22xf32>
    %c0_6 = arith.constant 0 : index
    %c0_7 = arith.constant 0 : index
    %c0_8 = arith.constant 0 : index
    %6 = vector.load %arg5[%c0_6, %c0_7, %c0_8] : memref<1x16x32xf32, #tpu.memory_space<vmem>>, vector<1x16x32xf32>
    %7 = vector.shape_cast %6 : vector<1x16x32xf32> to vector<16x32xf32>
    %c0_9 = arith.constant 0 : index
    %c0_10 = arith.constant 0 : index
    %c0_11 = arith.constant 0 : index
    %8 = vector.load %arg6[%c0_9, %c0_10, %c0_11] : memref<1x16x32xf32, #tpu.memory_space<vmem>>, vector<1x16x32xf32>
    %9 = vector.shape_cast %8 : vector<1x16x32xf32> to vector<16x32xf32>
    %10 = vector.extract_strided_slice %7 {offsets = [0, 0], sizes = [16, 16], strides = [1, 1]} : vector<16x32xf32> to vector<16x16xf32>
    %11 = vector.shape_cast %10 : vector<16x16xf32> to vector<16x1x16xf32>
    %12 = vector.extract_strided_slice %7 {offsets = [0, 16], sizes = [16, 16], strides = [1, 1]} : vector<16x32xf32> to vector<16x16xf32>
    %13 = vector.shape_cast %12 : vector<16x16xf32> to vector<16x1x16xf32>
    %14 = vector.extract_strided_slice %9 {offsets = [0, 0], sizes = [16, 16], strides = [1, 1]} : vector<16x32xf32> to vector<16x16xf32>
    %15 = vector.shape_cast %14 : vector<16x16xf32> to vector<1x16x16xf32>
    %16 = vector.extract_strided_slice %9 {offsets = [0, 16], sizes = [16, 16], strides = [1, 1]} : vector<16x32xf32> to vector<16x16xf32>
    %17 = vector.shape_cast %16 : vector<16x16xf32> to vector<1x16x16xf32>
    %18 = vector.broadcast %11 : vector<16x1x16xf32> to vector<16x16x16xf32>
    %19 = vector.broadcast %17 : vector<1x16x16xf32> to vector<16x16x16xf32>
    %20 = arith.mulf %18, %19 : vector<16x16x16xf32>
    %21 = vector.broadcast %13 : vector<16x1x16xf32> to vector<16x16x16xf32>
    %22 = vector.broadcast %15 : vector<1x16x16xf32> to vector<16x16x16xf32>
    %23 = arith.mulf %21, %22 : vector<16x16x16xf32>
    %24 = arith.subf %20, %23 : vector<16x16x16xf32>
    %25 = arith.truncf %24 : vector<16x16x16xf32> to vector<16x16x16xbf16>
    %26 = vector.broadcast %13 : vector<16x1x16xf32> to vector<16x16x16xf32>
    %27 = vector.broadcast %17 : vector<1x16x16xf32> to vector<16x16x16xf32>
    %28 = arith.mulf %26, %27 : vector<16x16x16xf32>
    %29 = vector.broadcast %11 : vector<16x1x16xf32> to vector<16x16x16xf32>
    %30 = vector.broadcast %15 : vector<1x16x16xf32> to vector<16x16x16xf32>
    %31 = arith.mulf %29, %30 : vector<16x16x16xf32>
    %32 = arith.addf %28, %31 : vector<16x16x16xf32>
    %33 = arith.truncf %32 : vector<16x16x16xf32> to vector<16x16x16xbf16>
    %c0_12 = arith.constant 0 : index
    %c0_13 = arith.constant 0 : index
    %c0_14 = arith.constant 0 : index
    %34 = vector.load %arg7[%c0_12, %c0_13, %c0_14] : memref<1x16x3xf32, #tpu.memory_space<vmem>>, vector<1x16x3xf32>
    %35 = vector.shape_cast %34 : vector<1x16x3xf32> to vector<16x3xf32>
    %c0_15 = arith.constant 0 : index
    %c0_16 = arith.constant 0 : index
    %c0_17 = arith.constant 0 : index
    %36 = vector.load %arg8[%c0_15, %c0_16, %c0_17] : memref<1x16x3xf32, #tpu.memory_space<vmem>>, vector<1x16x3xf32>
    %37 = vector.shape_cast %36 : vector<1x16x3xf32> to vector<16x3xf32>
    %38 = vector.extract_strided_slice %35 {offsets = [0, 0], sizes = [16, 1], strides = [1, 1]} : vector<16x3xf32> to vector<16x1xf32>
    %39 = vector.shape_cast %38 : vector<16x1xf32> to vector<16x1x1xf32>
    %40 = vector.extract_strided_slice %37 {offsets = [0, 0], sizes = [16, 1], strides = [1, 1]} : vector<16x3xf32> to vector<16x1xf32>
    %41 = vector.shape_cast %40 : vector<16x1xf32> to vector<1x16x1xf32>
    %42 = vector.broadcast %39 : vector<16x1x1xf32> to vector<16x16x1xf32>
    %43 = vector.broadcast %41 : vector<1x16x1xf32> to vector<16x16x1xf32>
    %44 = arith.subf %42, %43 : vector<16x16x1xf32>
    %45 = arith.mulf %44, %44 : vector<16x16x1xf32>
    %46 = vector.extract_strided_slice %35 {offsets = [0, 1], sizes = [16, 1], strides = [1, 1]} : vector<16x3xf32> to vector<16x1xf32>
    %47 = vector.shape_cast %46 : vector<16x1xf32> to vector<16x1x1xf32>
    %48 = vector.extract_strided_slice %37 {offsets = [0, 1], sizes = [16, 1], strides = [1, 1]} : vector<16x3xf32> to vector<16x1xf32>
    %49 = vector.shape_cast %48 : vector<16x1xf32> to vector<1x16x1xf32>
    %50 = vector.broadcast %47 : vector<16x1x1xf32> to vector<16x16x1xf32>
    %51 = vector.broadcast %49 : vector<1x16x1xf32> to vector<16x16x1xf32>
    %52 = arith.subf %50, %51 : vector<16x16x1xf32>
    %53 = arith.mulf %52, %52 : vector<16x16x1xf32>
    %54 = arith.addf %45, %53 : vector<16x16x1xf32>
    %55 = vector.extract_strided_slice %35 {offsets = [0, 2], sizes = [16, 1], strides = [1, 1]} : vector<16x3xf32> to vector<16x1xf32>
    %56 = vector.shape_cast %55 : vector<16x1xf32> to vector<16x1x1xf32>
    %57 = vector.extract_strided_slice %37 {offsets = [0, 2], sizes = [16, 1], strides = [1, 1]} : vector<16x3xf32> to vector<16x1xf32>
    %58 = vector.shape_cast %57 : vector<16x1xf32> to vector<1x16x1xf32>
    %59 = vector.broadcast %56 : vector<16x1x1xf32> to vector<16x16x1xf32>
    %60 = vector.broadcast %58 : vector<1x16x1xf32> to vector<16x16x1xf32>
    %61 = arith.subf %59, %60 : vector<16x16x1xf32>
    %62 = arith.mulf %61, %61 : vector<16x16x1xf32>
    %63 = arith.addf %54, %62 : vector<16x16x1xf32>
    %64 = vector.shape_cast %4 : vector<1x22xf32> to vector<1x1x22xf32>
    %65 = vector.broadcast %63 : vector<16x16x1xf32> to vector<16x16x22xf32>
    %66 = vector.broadcast %64 : vector<1x1x22xf32> to vector<16x16x22xf32>
    %67 = arith.cmpf ogt, %65, %66 : vector<16x16x22xf32>
    %68 = vector.shape_cast %5 : vector<1x22xf32> to vector<1x1x22xf32>
    %69 = vector.broadcast %63 : vector<16x16x1xf32> to vector<16x16x22xf32>
    %70 = vector.broadcast %68 : vector<1x1x22xf32> to vector<16x16x22xf32>
    %71 = arith.cmpf olt, %69, %70 : vector<16x16x22xf32>
    %72 = arith.andi %67, %71 : vector<16x16x22xi1>
    %cst = arith.constant 1.000000e+00 : f32
    %cst_18 = arith.constant 0.000000e+00 : f32
    %73 = vector.broadcast %cst : f32 to vector<16x16x22xf32>
    %74 = vector.broadcast %cst_18 : f32 to vector<16x16x22xf32>
    %75 = arith.select %72, %73, %74 : vector<16x16x22xi1>, vector<16x16x22xf32>
    %76 = arith.truncf %75 : vector<16x16x22xf32> to vector<16x16x22xbf16>
    %77 = vector.shape_cast %25 : vector<16x16x16xbf16> to vector<256x16xbf16>
    %c0_19 = arith.constant 0 : index
    %c0_20 = arith.constant 0 : index
    %78 = vector.load %arg9[%c0_19, %c0_20] : memref<32x128xbf16, #tpu.memory_space<vmem>>, vector<16x128xbf16>
    %cst_21 = arith.constant dense<0.000000e+00> : vector<256x128xf32>
    %79 = tpu.matmul %77, %78, %cst_21 {dimension_numbers = #tpu.dot_dimension_numbers<[1], [0], [0], [1], [0, 0, 1, 1], [], []>} : vector<256x16xbf16>, vector<16x128xbf16>, vector<256x128xf32> -> vector<256x128xf32>
    %80 = vector.shape_cast %33 : vector<16x16x16xbf16> to vector<256x16xbf16>
    %c16 = arith.constant 16 : index
    %c0_22 = arith.constant 0 : index
    %81 = vector.load %arg9[%c16, %c0_22] : memref<32x128xbf16, #tpu.memory_space<vmem>>, vector<16x128xbf16>
    %cst_23 = arith.constant dense<0.000000e+00> : vector<256x128xf32>
    %82 = tpu.matmul %80, %81, %cst_23 {dimension_numbers = #tpu.dot_dimension_numbers<[1], [0], [0], [1], [0, 0, 1, 1], [], []>} : vector<256x16xbf16>, vector<16x128xbf16>, vector<256x128xf32> -> vector<256x128xf32>
    %83 = arith.addf %79, %82 : vector<256x128xf32>
    %84 = vector.shape_cast %76 : vector<16x16x22xbf16> to vector<256x22xbf16>
    %c0_24 = arith.constant 0 : index
    %c0_25 = arith.constant 0 : index
    %85 = vector.load %arg10[%c0_24, %c0_25] : memref<22x128xbf16, #tpu.memory_space<vmem>>, vector<22x128xbf16>
    %cst_26 = arith.constant dense<0.000000e+00> : vector<256x128xf32>
    %86 = tpu.matmul %84, %85, %cst_26 {dimension_numbers = #tpu.dot_dimension_numbers<[1], [0], [0], [1], [0, 0, 1, 1], [], []>} : vector<256x22xbf16>, vector<22x128xbf16>, vector<256x128xf32> -> vector<256x128xf32>
    %87 = arith.addf %83, %86 : vector<256x128xf32>
    %88 = vector.shape_cast %87 : vector<256x128xf32> to vector<16x16x128xf32>
    %c0_27 = arith.constant 0 : index
    %c0_28 = arith.constant 0 : index
    %c0_29 = arith.constant 0 : index
    %89 = vector.load %arg3[%c0_27, %c0_28, %c0_29] : memref<1x16x128xf32, #tpu.memory_space<vmem>>, vector<1x16x128xf32>
    %90 = vector.shape_cast %89 : vector<1x16x128xf32> to vector<16x128xf32>
    %91 = vector.shape_cast %90 : vector<16x128xf32> to vector<16x1x128xf32>
    %92 = vector.broadcast %91 : vector<16x1x128xf32> to vector<16x16x128xf32>
    %93 = arith.addf %88, %92 : vector<16x16x128xf32>
    %c0_30 = arith.constant 0 : index
    %c0_31 = arith.constant 0 : index
    %c0_32 = arith.constant 0 : index
    %94 = vector.load %arg4[%c0_30, %c0_31, %c0_32] : memref<1x16x128xf32, #tpu.memory_space<vmem>>, vector<1x16x128xf32>
    %95 = vector.shape_cast %94 : vector<1x16x128xf32> to vector<16x128xf32>
    %96 = vector.shape_cast %95 : vector<16x128xf32> to vector<1x16x128xf32>
    %97 = vector.broadcast %96 : vector<1x16x128xf32> to vector<16x16x128xf32>
    %98 = arith.addf %93, %97 : vector<16x16x128xf32>
    %cst_33 = arith.constant 0.000000e+00 : f32
    %99 = vector.broadcast %cst_33 : f32 to vector<16x16x128xf32>
    %100 = arith.maximumf %98, %99 : vector<16x16x128xf32>
    %101 = arith.truncf %100 : vector<16x16x128xf32> to vector<16x16x128xbf16>
    %102 = vector.shape_cast %101 : vector<16x16x128xbf16> to vector<256x128xbf16>
    %c0_34 = arith.constant 0 : index
    %c0_35 = arith.constant 0 : index
    %103 = vector.load %arg11[%c0_34, %c0_35] : memref<128x128xbf16, #tpu.memory_space<vmem>>, vector<128x128xbf16>
    %cst_36 = arith.constant dense<0.000000e+00> : vector<256x128xf32>
    %104 = tpu.matmul %102, %103, %cst_36 {dimension_numbers = #tpu.dot_dimension_numbers<[1], [0], [0], [1], [0, 0, 1, 1], [], []>} : vector<256x128xbf16>, vector<128x128xbf16>, vector<256x128xf32> -> vector<256x128xf32>
    %105 = vector.broadcast %0 : vector<1x128xf32> to vector<256x128xf32>
    %106 = arith.addf %104, %105 : vector<256x128xf32>
    %cst_37 = arith.constant 0.000000e+00 : f32
    %107 = vector.broadcast %cst_37 : f32 to vector<256x128xf32>
    %108 = arith.maximumf %106, %107 : vector<256x128xf32>
    %109 = arith.truncf %108 : vector<256x128xf32> to vector<256x128xbf16>
    %c0_38 = arith.constant 0 : index
    %c0_39 = arith.constant 0 : index
    %110 = vector.load %arg12[%c0_38, %c0_39] : memref<128x128xbf16, #tpu.memory_space<vmem>>, vector<128x128xbf16>
    %cst_40 = arith.constant dense<0.000000e+00> : vector<256x128xf32>
    %111 = tpu.matmul %109, %110, %cst_40 {dimension_numbers = #tpu.dot_dimension_numbers<[1], [0], [0], [1], [0, 0, 1, 1], [], []>} : vector<256x128xbf16>, vector<128x128xbf16>, vector<256x128xf32> -> vector<256x128xf32>
    %112 = vector.broadcast %1 : vector<1x128xf32> to vector<256x128xf32>
    %113 = arith.addf %111, %112 : vector<256x128xf32>
    %cst_41 = arith.constant dense<0.000000e+00> : vector<256xf32>
    %114 = vector.multi_reduction <add>, %113, %cst_41 [1] : vector<256x128xf32> to vector<256xf32>
    %115 = vector.shape_cast %114 : vector<256xf32> to vector<256x1xf32>
    %cst_42 = arith.constant 7.812500e-03 : f32
    %116 = vector.broadcast %cst_42 : f32 to vector<256x1xf32>
    %117 = arith.mulf %115, %116 : vector<256x1xf32>
    %118 = arith.mulf %113, %113 : vector<256x128xf32>
    %cst_43 = arith.constant dense<0.000000e+00> : vector<256xf32>
    %119 = vector.multi_reduction <add>, %118, %cst_43 [1] : vector<256x128xf32> to vector<256xf32>
    %120 = vector.shape_cast %119 : vector<256xf32> to vector<256x1xf32>
    %cst_44 = arith.constant 7.812500e-03 : f32
    %121 = vector.broadcast %cst_44 : f32 to vector<256x1xf32>
    %122 = arith.mulf %120, %121 : vector<256x1xf32>
    %123 = arith.mulf %117, %117 : vector<256x1xf32>
    %124 = arith.subf %122, %123 : vector<256x1xf32>
    %cst_45 = arith.constant 0.000000e+00 : f32
    %125 = vector.broadcast %cst_45 : f32 to vector<256x1xf32>
    %126 = arith.maximumf %124, %125 : vector<256x1xf32>
    %127 = vector.broadcast %117 : vector<256x1xf32> to vector<256x128xf32>
    %128 = arith.subf %113, %127 : vector<256x128xf32>
    %cst_46 = arith.constant 9.99999974E-6 : f32
    %129 = vector.broadcast %cst_46 : f32 to vector<256x1xf32>
    %130 = arith.addf %126, %129 : vector<256x1xf32>
    %131 = math.rsqrt %130 : vector<256x1xf32>
    %132 = vector.broadcast %131 : vector<256x1xf32> to vector<256x128xf32>
    %133 = arith.mulf %128, %132 : vector<256x128xf32>
    %134 = vector.broadcast %2 : vector<1x128xf32> to vector<256x128xf32>
    %135 = arith.mulf %133, %134 : vector<256x128xf32>
    %136 = vector.broadcast %3 : vector<1x128xf32> to vector<256x128xf32>
    %137 = arith.addf %135, %136 : vector<256x128xf32>
    %138 = vector.shape_cast %137 : vector<256x128xf32> to vector<16x16x128xf32>
    %139 = arith.truncf %138 : vector<16x16x128xf32> to vector<16x16x128xbf16>
    %c0_47 = arith.constant 0 : index
    %c0_48 = arith.constant 0 : index
    %c0_49 = arith.constant 0 : index
    %c0_50 = arith.constant 0 : index
    %140 = vector.load %arg14[%c0_47, %c0_48, %c0_49, %c0_50] : memref<1x16x16x128xbf16, #tpu.memory_space<vmem>>, vector<1x16x16x128xbf16>
    %141 = vector.shape_cast %140 : vector<1x16x16x128xbf16> to vector<16x16x128xbf16>
    %142 = vector.shape_cast %139 : vector<16x16x128xbf16> to vector<1x16x16x128xbf16>
    tpu.vector_store %arg14[%c0_47, %c0_48, %c0_49, %c0_50], %142 {strides = array<i32>} : memref<1x16x16x128xbf16, #tpu.memory_space<vmem>>, vector<1x16x16x128xbf16>,
    return
  }
  func.func @transform_0(%arg0: i32, %arg1: i32, %arg2: i32) -> (i32, i32, i32) {
    %c0_i32 = arith.constant 0 : i32
    %c0_i32_0 = arith.constant 0 : i32
    return %arg0, %arg1, %c0_i32 : i32, i32, i32
  }
  func.func @transform_1(%arg0: i32, %arg1: i32, %arg2: i32) -> (i32, i32, i32) {
    %c0_i32 = arith.constant 0 : i32
    %c0_i32_0 = arith.constant 0 : i32
    return %arg0, %arg2, %c0_i32 : i32, i32, i32
  }
  func.func @transform_2(%arg0: i32, %arg1: i32, %arg2: i32) -> (i32, i32, i32) {
    %c0_i32 = arith.constant 0 : i32
    %c0_i32_0 = arith.constant 0 : i32
    return %arg0, %arg1, %c0_i32 : i32, i32, i32
  }
  func.func @transform_3(%arg0: i32, %arg1: i32, %arg2: i32) -> (i32, i32, i32) {
    %c0_i32 = arith.constant 0 : i32
    %c0_i32_0 = arith.constant 0 : i32
    return %arg0, %arg2, %c0_i32 : i32, i32, i32
  }
  func.func @transform_4(%arg0: i32, %arg1: i32, %arg2: i32) -> (i32, i32, i32) {
    %c0_i32 = arith.constant 0 : i32
    %c0_i32_0 = arith.constant 0 : i32
    return %arg0, %arg1, %c0_i32 : i32, i32, i32
  }
  func.func @transform_5(%arg0: i32, %arg1: i32, %arg2: i32) -> (i32, i32, i32) {
    %c0_i32 = arith.constant 0 : i32
    %c0_i32_0 = arith.constant 0 : i32
    return %arg0, %arg2, %c0_i32 : i32, i32, i32
  }
  func.func @transform_6(%arg0: i32, %arg1: i32, %arg2: i32) -> (i32, i32) {
    %c0_i32 = arith.constant 0 : i32
    %c0_i32_0 = arith.constant 0 : i32
    %c0_i32_1 = arith.constant 0 : i32
    return %c0_i32, %c0_i32_0 : i32, i32
  }
  func.func @transform_7(%arg0: i32, %arg1: i32, %arg2: i32) -> (i32, i32) {
    %c0_i32 = arith.constant 0 : i32
    %c0_i32_0 = arith.constant 0 : i32
    %c0_i32_1 = arith.constant 0 : i32
    return %c0_i32, %c0_i32_0 : i32, i32
  }
  func.func @transform_8(%arg0: i32, %arg1: i32, %arg2: i32) -> (i32, i32) {
    %c0_i32 = arith.constant 0 : i32
    %c0_i32_0 = arith.constant 0 : i32
    %c0_i32_1 = arith.constant 0 : i32
    return %c0_i32, %c0_i32_0 : i32, i32
  }
  func.func @transform_9(%arg0: i32, %arg1: i32, %arg2: i32) -> (i32, i32) {
    %c0_i32 = arith.constant 0 : i32
    %c0_i32_0 = arith.constant 0 : i32
    %c0_i32_1 = arith.constant 0 : i32
    return %c0_i32, %c0_i32_0 : i32, i32
  }
  func.func @transform_10(%arg0: i32, %arg1: i32, %arg2: i32) -> (i32, i32) {
    %c0_i32 = arith.constant 0 : i32
    %c0_i32_0 = arith.constant 0 : i32
    %c0_i32_1 = arith.constant 0 : i32
    return %c0_i32, %c0_i32_0 : i32, i32
  }
  func.func @transform_11(%arg0: i32, %arg1: i32, %arg2: i32) -> (i32, i32, i32, i32) {
    %c0_i32 = arith.constant 0 : i32
    %c0_i32_0 = arith.constant 0 : i32
    return %arg0, %arg1, %arg2, %c0_i32 : i32, i32, i32, i32
  }
}

</mosaic_0001>

<llo_original>
// kernel: embedder_forward.1
$region0: #{embedder_forward.1}
  #allocation0 [shape = 'u32[]', space=smem, size = 0x4, offset = 0x4, fixed_abs, tag = 'smem constant byte address 0x4 - core index']
  #allocation1 [shape = 'u32[72,128]{1,0:T(1,128)}', space=vmem, size = 0x9000, scoped, tag = 'internal scratch']
  %s0 = inlined_call_operand.vmem [shape: f32[2,16,128], index: 0, kind: input, shape index: {}]
  %s1 = inlined_call_operand.vmem [shape: f32[2,16,128], index: 1, kind: input, shape index: {}]
  %s2 = inlined_call_operand.vmem [shape: f32[2,16,32], index: 2, kind: input, shape index: {}, may-alias: {2,3}]
  %s3 = inlined_call_operand.vmem [shape: f32[2,16,32], index: 3, kind: input, shape index: {}, may-alias: {2,3}]
  %s4 = inlined_call_operand.vmem [shape: f32[2,16,3], index: 4, kind: input, shape index: {}, may-alias: {4,5}]
  %s5 = inlined_call_operand.vmem [shape: f32[2,16,3], index: 5, kind: input, shape index: {}, may-alias: {4,5}]
  %s6 = inlined_call_operand.vmem [shape: bf16[32,128], index: 6, kind: input, shape index: {}]
  %s7 = inlined_call_operand.vmem [shape: bf16[22,128], index: 7, kind: input, shape index: {}]
  %s8 = inlined_call_operand.vmem [shape: bf16[128,128], index: 8, kind: input, shape index: {}]
  %s9 = inlined_call_operand.vmem [shape: bf16[128,128], index: 9, kind: input, shape index: {}]
  %s10 = inlined_call_operand.vmem [shape: f32[8,128], index: 10, kind: input, shape index: {}]
  %s11 = inlined_call_operand.hbm [shape: bf16[2,16,16,128], index: 11, kind: output, shape index: {}]
  %s12 = sld [smem:[#allocation0]]
  $region77: #{embedder_forward.1} parent=0
    _
  %s14 = ssub.s32 1, %s12
  %s15 = scalar_select 0, %s14, %s12
  $region1: #{embedder_forward.1} parent=0
    #allocation2 [shape = 'u8[131072]{0}', space=vmem, size = 0x20000, scoped, tag = 'output window, operand 0']
    #allocation3 [shape = 's32[2]{0}', space=sflag, size = 0x8, scoped, tag = 'scoped memory for embedder_forward.1']
    %16 = vsyncpa [#allocation3], 0
    %s17 = scalar_lea.sflag [#allocation3], 1
    %18 = vsyncpa %s17, 0
    loop: start=0, step=1, limit=4
    $region2: #{embedder_forward.1} parent=1 // loop_pre_header
      _
    $region3: #{embedder_forward.1} parent=1 // loop_header
      %s20 = sphi 0, %s24
      %p21 = scmp.ge.s32.totalorder %s20, 4
      %s27 = sphi 0, %s46
      %s28 = sphi 0, %s42
      %s29 = sphi 0, %s38
      %s30 = sphi 0, %s27
      %s31 = sphi 0, %s28
      %s32 = sphi 0, %s29
      %s33 = sphi 0, %s30
      %s34 = sphi 0, %s31
      %s35 = sphi 0, %s32
      %s51 = sphi 0, %s53
      %s54 = sphi 0, %s51
      %s55 = sphi 0, %s54
      %s71 = sphi 0, %s55
      %s79 = sphi 0, %s81
      %s82 = sphi 0, %s79
      %s83 = sphi 0, %s82
      %s99 = sphi 0, %s83
      %s107 = sphi 0, %s109
      %s110 = sphi 0, %s107
      %s111 = sphi 0, %s110
      %s127 = sphi 0, %s111
      %s135 = sphi 0, %s137
      %s138 = sphi 0, %s135
      %s139 = sphi 0, %s138
      %s155 = sphi 0, %s139
      %s163 = sphi 0, %s165
      %s166 = sphi 0, %s163
      %s167 = sphi 0, %s166
      %s183 = sphi 0, %s167
      %s191 = sphi 0, %s193
      %s194 = sphi 0, %s191
      %s195 = sphi 0, %s194
      %s211 = sphi 0, %s195
      %s215 = sphi 0, %s215
      %s217 = sphi 0, %s215
      %s218 = sphi 0, %s217
      %s232 = sphi 0, %s218
      %s236 = sphi 0, %s236
      %s238 = sphi 0, %s236
      %s239 = sphi 0, %s238
      %s253 = sphi 0, %s239
      %s257 = sphi 0, %s257
      %s259 = sphi 0, %s257
      %s260 = sphi 0, %s259
      %s274 = sphi 0, %s260
      %s278 = sphi 0, %s278
      %s280 = sphi 0, %s278
      %s281 = sphi 0, %s280
      %s295 = sphi 0, %s281
      %s299 = sphi 0, %s299
      %s301 = sphi 0, %s299
      %s302 = sphi 0, %s301
      %s316 = sphi 0, %s302
      %s326 = sphi 0, %s328
      %s329 = sphi 0, %s326
      %s330 = sphi 0, %s329
      %s346 = sphi 0, %s330
    $region4: #{embedder_forward.1} parent=1 // loop_header_branch
      %23 = sbr.rel (%p21) target = $region8
    $region5: #{embedder_forward.1} parent=1 // loop_body
      %s25 = ssub.s32 %s20, 1
      %s26 = ssub.s32 %s20, 2
      %s36 = sadd.s32 1, %s29
      %p37 = scmp.ge.s32.totalorder %s36, 1
      %s38 = scalar_select %p37, 0, %s36
      %s39 = sadd.s32 1, %s28
      %s40 = scalar_select %p37, %s39, %s28
      %p41 = scmp.ge.s32.totalorder %s40, 1
      %s42 = scalar_select %p41, 0, %s40
      %s43 = sadd.s32 1, %s27
      %s44 = scalar_select %p41, %s43, %s27
      %p45 = scmp.ge.s32.totalorder %s44, 2
      %s46 = scalar_select %p45, 0, %s44
      %s47 = ssub.s32 %s27, %s46
      %s48 = ssub.s32 %s28, %s42
      %s49 = sor.u32 %s47, %s48
      %p50 = scmp.eq.s32.totalorder %s49, 0
      %s52 = sadd.s32 %s51, 1
      %s53 = scalar_select %p50, %s51, %s52
      %p56 = pneg %p50
      %p57 = scmp.eq.s32.totalorder %s20, 1
      %p58 = por %p56, %p57
      %p59 = scmp.ne.s32.totalorder %s51, %s54
      %p60 = scmp.eq.s32.totalorder %s20, 0
      %p61 = por %p59, %p60
      %p62 = scmp.ne.s32.totalorder %s51, %s54
      %p63 = scmp.eq.s32.totalorder %s25, 1
      %p64 = por %p62, %p63
      %p65 = scmp.ne.s32.totalorder %s54, %s55
      %p66 = scmp.eq.s32.totalorder %s25, 0
      %p67 = por %p65, %p66
      %p68 = scmp.ne.s32.totalorder %s54, %s55
      %p69 = scmp.eq.s32.totalorder %s26, 1
      %p70 = por %p68, %p69
      %p72 = scmp.ne.s32.totalorder %s55, %s71
      %p73 = scmp.eq.s32.totalorder %s26, 0
      %p74 = por %p72, %p73
      %s75 = ssub.s32 %s27, %s46
      %s76 = ssub.s32 %s29, %s38
      %s77 = sor.u32 %s75, %s76
      %p78 = scmp.eq.s32.totalorder %s77, 0
      %s80 = sadd.s32 %s79, 1
      %s81 = scalar_select %p78, %s79, %s80
      %p84 = pneg %p78
      %p85 = scmp.eq.s32.totalorder %s20, 1
      %p86 = por %p84, %p85
      %p87 = scmp.ne.s32.totalorder %s79, %s82
      %p88 = scmp.eq.s32.totalorder %s20, 0
      %p89 = por %p87, %p88
      %p90 = scmp.ne.s32.totalorder %s79, %s82
      %p91 = scmp.eq.s32.totalorder %s25, 1
      %p92 = por %p90, %p91
      %p93 = scmp.ne.s32.totalorder %s82, %s83
      %p94 = scmp.eq.s32.totalorder %s25, 0
      %p95 = por %p93, %p94
      %p96 = scmp.ne.s32.totalorder %s82, %s83
      %p97 = scmp.eq.s32.totalorder %s26, 1
      %p98 = por %p96, %p97
      %p100 = scmp.ne.s32.totalorder %s83, %s99
      %p101 = scmp.eq.s32.totalorder %s26, 0
      %p102 = por %p100, %p101
      %s103 = ssub.s32 %s27, %s46
      %s104 = ssub.s32 %s28, %s42
      %s105 = sor.u32 %s103, %s104
      %p106 = scmp.eq.s32.totalorder %s105, 0
      %s108 = sadd.s32 %s107, 1
      %s109 = scalar_select %p106, %s107, %s108
      %p112 = pneg %p106
      %p113 = scmp.eq.s32.totalorder %s20, 1
      %p114 = por %p112, %p113
      %p115 = scmp.ne.s32.totalorder %s107, %s110
      %p116 = scmp.eq.s32.totalorder %s20, 0
      %p117 = por %p115, %p116
      %p118 = scmp.ne.s32.totalorder %s107, %s110
      %p119 = scmp.eq.s32.totalorder %s25, 1
      %p120 = por %p118, %p119
      %p121 = scmp.ne.s32.totalorder %s110, %s111
      %p122 = scmp.eq.s32.totalorder %s25, 0
      %p123 = por %p121, %p122
      %p124 = scmp.ne.s32.totalorder %s110, %s111
      %p125 = scmp.eq.s32.totalorder %s26, 1
      %p126 = por %p124, %p125
      %p128 = scmp.ne.s32.totalorder %s111, %s127
      %p129 = scmp.eq.s32.totalorder %s26, 0
      %p130 = por %p128, %p129
      %s131 = ssub.s32 %s27, %s46
      %s132 = ssub.s32 %s29, %s38
      %s133 = sor.u32 %s131, %s132
      %p134 = scmp.eq.s32.totalorder %s133, 0
      %s136 = sadd.s32 %s135, 1
      %s137 = scalar_select %p134, %s135, %s136
      %p140 = pneg %p134
      %p141 = scmp.eq.s32.totalorder %s20, 1
      %p142 = por %p140, %p141
      %p143 = scmp.ne.s32.totalorder %s135, %s138
      %p144 = scmp.eq.s32.totalorder %s20, 0
      %p145 = por %p143, %p144
      %p146 = scmp.ne.s32.totalorder %s135, %s138
      %p147 = scmp.eq.s32.totalorder %s25, 1
      %p148 = por %p146, %p147
      %p149 = scmp.ne.s32.totalorder %s138, %s139
      %p150 = scmp.eq.s32.totalorder %s25, 0
      %p151 = por %p149, %p150
      %p152 = scmp.ne.s32.totalorder %s138, %s139
      %p153 = scmp.eq.s32.totalorder %s26, 1
      %p154 = por %p152, %p153
      %p156 = scmp.ne.s32.totalorder %s139, %s155
      %p157 = scmp.eq.s32.totalorder %s26, 0
      %p158 = por %p156, %p157
      %s159 = ssub.s32 %s27, %s46
      %s160 = ssub.s32 %s28, %s42
      %s161 = sor.u32 %s159, %s160
      %p162 = scmp.eq.s32.totalorder %s161, 0
      %s164 = sadd.s32 %s163, 1
      %s165 = scalar_select %p162, %s163, %s164
      %p168 = pneg %p162
      %p169 = scmp.eq.s32.totalorder %s20, 1
      %p170 = por %p168, %p169
      %p171 = scmp.ne.s32.totalorder %s163, %s166
      %p172 = scmp.eq.s32.totalorder %s20, 0
      %p173 = por %p171, %p172
      %p174 = scmp.ne.s32.totalorder %s163, %s166
      %p175 = scmp.eq.s32.totalorder %s25, 1
      %p176 = por %p174, %p175
      %p177 = scmp.ne.s32.totalorder %s166, %s167
      %p178 = scmp.eq.s32.totalorder %s25, 0
      %p179 = por %p177, %p178
      %p180 = scmp.ne.s32.totalorder %s166, %s167
      %p181 = scmp.eq.s32.totalorder %s26, 1
      %p182 = por %p180, %p181
      %p184 = scmp.ne.s32.totalorder %s167, %s183
      %p185 = scmp.eq.s32.totalorder %s26, 0
      %p186 = por %p184, %p185
      %s187 = ssub.s32 %s27, %s46
      %s188 = ssub.s32 %s29, %s38
      %s189 = sor.u32 %s187, %s188
      %p190 = scmp.eq.s32.totalorder %s189, 0
      %s192 = sadd.s32 %s191, 1
      %s193 = scalar_select %p190, %s191, %s192
      %p196 = pneg %p190
      %p197 = scmp.eq.s32.totalorder %s20, 1
      %p198 = por %p196, %p197
      %p199 = scmp.ne.s32.totalorder %s191, %s194
      %p200 = scmp.eq.s32.totalorder %s20, 0
      %p201 = por %p199, %p200
      %p202 = scmp.ne.s32.totalorder %s191, %s194
      %p203 = scmp.eq.s32.totalorder %s25, 1
      %p204 = por %p202, %p203
      %p205 = scmp.ne.s32.totalorder %s194, %s195
      %p206 = scmp.eq.s32.totalorder %s25, 0
      %p207 = por %p205, %p206
      %p208 = scmp.ne.s32.totalorder %s194, %s195
      %p209 = scmp.eq.s32.totalorder %s26, 1
      %p210 = por %p208, %p209
      %p212 = scmp.ne.s32.totalorder %s195, %s211
      %p213 = scmp.eq.s32.totalorder %s26, 0
      %p214 = por %p212, %p213
      %s216 = sadd.s32 %s215, 1
      %p219 = scmp.eq.s32.totalorder %s20, 1
      %p220 = scmp.ne.s32.totalorder %s215, %s217
      %p221 = scmp.eq.s32.totalorder %s20, 0
      %p222 = por %p220, %p221
      %p223 = scmp.ne.s32.totalorder %s215, %s217
      %p224 = scmp.eq.s32.totalorder %s25, 1
      %p225 = por %p223, %p224
      %p226 = scmp.ne.s32.totalorder %s217, %s218
      %p227 = scmp.eq.s32.totalorder %s25, 0
      %p228 = por %p226, %p227
      %p229 = scmp.ne.s32.totalorder %s217, %s218
      %p230 = scmp.eq.s32.totalorder %s26, 1
      %p231 = por %p229, %p230
      %p233 = scmp.ne.s32.totalorder %s218, %s232
      %p234 = scmp.eq.s32.totalorder %s26, 0
      %p235 = por %p233, %p234
      %s237 = sadd.s32 %s236, 1
      %p240 = scmp.eq.s32.totalorder %s20, 1
      %p241 = scmp.ne.s32.totalorder %s236, %s238
      %p242 = scmp.eq.s32.totalorder %s20, 0
      %p243 = por %p241, %p242
      %p244 = scmp.ne.s32.totalorder %s236, %s238
      %p245 = scmp.eq.s32.totalorder %s25, 1
      %p246 = por %p244, %p245
      %p247 = scmp.ne.s32.totalorder %s238, %s239
      %p248 = scmp.eq.s32.totalorder %s25, 0
      %p249 = por %p247, %p248
      %p250 = scmp.ne.s32.totalorder %s238, %s239
      %p251 = scmp.eq.s32.totalorder %s26, 1
      %p252 = por %p250, %p251
      %p254 = scmp.ne.s32.totalorder %s239, %s253
      %p255 = scmp.eq.s32.totalorder %s26, 0
      %p256 = por %p254, %p255
      %s258 = sadd.s32 %s257, 1
      %p261 = scmp.eq.s32.totalorder %s20, 1
      %p262 = scmp.ne.s32.totalorder %s257, %s259
      %p263 = scmp.eq.s32.totalorder %s20, 0
      %p264 = por %p262, %p263
      %p265 = scmp.ne.s32.totalorder %s257, %s259
      %p266 = scmp.eq.s32.totalorder %s25, 1
      %p267 = por %p265, %p266
      %p268 = scmp.ne.s32.totalorder %s259, %s260
      %p269 = scmp.eq.s32.totalorder %s25, 0
      %p270 = por %p268, %p269
      %p271 = scmp.ne.s32.totalorder %s259, %s260
      %p272 = scmp.eq.s32.totalorder %s26, 1
      %p273 = por %p271, %p272
      %p275 = scmp.ne.s32.totalorder %s260, %s274
      %p276 = scmp.eq.s32.totalorder %s26, 0
      %p277 = por %p275, %p276
      %s279 = sadd.s32 %s278, 1
      %p282 = scmp.eq.s32.totalorder %s20, 1
      %p283 = scmp.ne.s32.totalorder %s278, %s280
      %p284 = scmp.eq.s32.totalorder %s20, 0
      %p285 = por %p283, %p284
      %p286 = scmp.ne.s32.totalorder %s278, %s280
      %p287 = scmp.eq.s32.totalorder %s25, 1
      %p288 = por %p286, %p287
      %p289 = scmp.ne.s32.totalorder %s280, %s281
      %p290 = scmp.eq.s32.totalorder %s25, 0
      %p291 = por %p289, %p290
      %p292 = scmp.ne.s32.totalorder %s280, %s281
      %p293 = scmp.eq.s32.totalorder %s26, 1
      %p294 = por %p292, %p293
      %p296 = scmp.ne.s32.totalorder %s281, %s295
      %p297 = scmp.eq.s32.totalorder %s26, 0
      %p298 = por %p296, %p297
      %s300 = sadd.s32 %s299, 1
      %p303 = scmp.eq.s32.totalorder %s20, 1
      %p304 = scmp.ne.s32.totalorder %s299, %s301
      %p305 = scmp.eq.s32.totalorder %s20, 0
      %p306 = por %p304, %p305
      %p307 = scmp.ne.s32.totalorder %s299, %s301
      %p308 = scmp.eq.s32.totalorder %s25, 1
      %p309 = por %p307, %p308
      %p310 = scmp.ne.s32.totalorder %s301, %s302
      %p311 = scmp.eq.s32.totalorder %s25, 0
      %p312 = por %p310, %p311
      %p313 = scmp.ne.s32.totalorder %s301, %s302
      %p314 = scmp.eq.s32.totalorder %s26, 1
      %p315 = por %p313, %p314
      %p317 = scmp.ne.s32.totalorder %s302, %s316
      %p318 = scmp.eq.s32.totalorder %s26, 0
      %p319 = por %p317, %p318
      %s320 = ssub.s32 %s27, %s46
      %s321 = ssub.s32 %s28, %s42
      %s322 = sor.u32 %s320, %s321
      %s323 = ssub.s32 %s29, %s38
      %s324 = sor.u32 %s322, %s323
      %p325 = scmp.eq.s32.totalorder %s324, 0
      %s327 = sadd.s32 %s326, 1
      %s328 = scalar_select %p325, %s326, %s327
      %p331 = pneg %p325
      %p332 = scmp.eq.s32.totalorder %s20, 1
      %p333 = por %p331, %p332
      %p334 = scmp.ne.s32.totalorder %s326, %s329
      %p335 = scmp.eq.s32.totalorder %s20, 0
      %p336 = por %p334, %p335
      %p337 = scmp.ne.s32.totalorder %s326, %s329
      %p338 = scmp.eq.s32.totalorder %s25, 1
      %p339 = por %p337, %p338
      %p340 = scmp.ne.s32.totalorder %s329, %s330
      %p341 = scmp.eq.s32.totalorder %s25, 0
      %p342 = por %p340, %p341
      %p343 = scmp.ne.s32.totalorder %s329, %s330
      %p344 = scmp.eq.s32.totalorder %s26, 1
      %p345 = por %p343, %p344
      %p347 = scmp.ne.s32.totalorder %s330, %s346
      %p348 = scmp.eq.s32.totalorder %s26, 0
      %p349 = por %p347, %p348
      %p350 = scmp.le.s32.totalorder 1, %s20
      %p351 = scmp.lt.s32.totalorder %s20, 3
      %p352 = pnand %p350, %p351
      %p353 = pneg %p352
      // Predicated region
      $region9: #{embedder_forward.1} parent=5 // pred_check
        _
      $region10: #{embedder_forward.1} parent=5 // pred_check_branch
        %355 = sbr.rel (%p352) target = $region12
      $region11: #{embedder_forward.1} parent=5 // pred_region
        %s356 = ssub.s32 %s20, 1
        // Predicated region
        $region13: #{embedder_forward.1} parent=11 // pred_check
          %p357 = pneg %p228
        $region14: #{embedder_forward.1} parent=11 // pred_check_branch
          %359 = sbr.rel (%p357) target = $region16
        $region15: #{embedder_forward.1} parent=11 // pred_region
          _
        $region16: #{embedder_forward.1} parent=11 // pred_fallthru
          _
        // Predicated region
        $region17: #{embedder_forward.1} parent=11 // pred_check
          %p360 = pneg %p249
        $region18: #{embedder_forward.1} parent=11 // pred_check_branch
          %362 = sbr.rel (%p360) target = $region20
        $region19: #{embedder_forward.1} parent=11 // pred_region
          _
        $region20: #{embedder_forward.1} parent=11 // pred_fallthru
          _
        // Predicated region
        $region21: #{embedder_forward.1} parent=11 // pred_check
          %p363 = pneg %p270
        $region22: #{embedder_forward.1} parent=11 // pred_check_branch
          %365 = sbr.rel (%p363) target = $region24
        $region23: #{embedder_forward.1} parent=11 // pred_region
          _
        $region24: #{embedder_forward.1} parent=11 // pred_fallthru
          _
        // Predicated region
        $region25: #{embedder_forward.1} parent=11 // pred_check
          %p366 = pneg %p291
        $region26: #{embedder_forward.1} parent=11 // pred_check_branch
          %368 = sbr.rel (%p366) target = $region28
        $region27: #{embedder_forward.1} parent=11 // pred_region
          _
        $region28: #{embedder_forward.1} parent=11 // pred_fallthru
          _
        // Predicated region
        $region29: #{embedder_forward.1} parent=11 // pred_check
          %p369 = pneg %p312
        $region30: #{embedder_forward.1} parent=11 // pred_check_branch
          %371 = sbr.rel (%p369) target = $region32
        $region31: #{embedder_forward.1} parent=11 // pred_region
          _
        $region32: #{embedder_forward.1} parent=11 // pred_fallthru
          _
      $region12: #{embedder_forward.1} parent=5 // pred_fallthru
        _
      %p372 = scmp.lt.s32.totalorder %s20, 2
      // Predicated region
      $region33: #{embedder_forward.1} parent=5 // pred_check
        %p373 = pneg %p372
      $region34: #{embedder_forward.1} parent=5 // pred_check_branch
        %375 = sbr.rel (%p373) target = $region36
      $region35: #{embedder_forward.1} parent=5 // pred_region
        // Predicated region
        $region37: #{embedder_forward.1} parent=35 // pred_check
          %p376 = pneg %p61
        $region38: #{embedder_forward.1} parent=35 // pred_check_branch
          %378 = sbr.rel (%p376) target = $region40
        $region39: #{embedder_forward.1} parent=35 // pred_region
          %s379 = smul.u32 2, %s28
          %p380 = scmp.lt.s32.totalorder %s27, 1
          %s381 = scalar_select %p380, %s27, 1
          %p382 = scmp.lt.s32.totalorder %s379, 1
          %s383 = scalar_select %p382, %s379, 1
          %s384 = smul.addr %s381, 2
          %s385 = sadd.s32 %s383, %s384
          %s386 = smul.addr %s385, 8
          %s387 = scalar_lea.vmem %s0, %s386
          %s388 = smul.u32 2, %s28
        $region40: #{embedder_forward.1} parent=35 // pred_fallthru
          _
        // Predicated region
        $region41: #{embedder_forward.1} parent=35 // pred_check
          %p389 = pneg %p89
        $region42: #{embedder_forward.1} parent=35 // pred_check_branch
          %391 = sbr.rel (%p389) target = $region44
        $region43: #{embedder_forward.1} parent=35 // pred_region
          %s392 = smul.u32 2, %s29
          %p393 = scmp.lt.s32.totalorder %s27, 1
          %s394 = scalar_select %p393, %s27, 1
          %p395 = scmp.lt.s32.totalorder %s392, 1
          %s396 = scalar_select %p395, %s392, 1
          %s397 = smul.addr %s394, 2
          %s398 = sadd.s32 %s396, %s397
          %s399 = smul.addr %s398, 8
          %s400 = scalar_lea.vmem %s1, %s399
          %s401 = smul.u32 2, %s29
        $region44: #{embedder_forward.1} parent=35 // pred_fallthru
          _
        // Predicated region
        $region45: #{embedder_forward.1} parent=35 // pred_check
          %p402 = pneg %p117
        $region46: #{embedder_forward.1} parent=35 // pred_check_branch
          %404 = sbr.rel (%p402) target = $region48
        $region47: #{embedder_forward.1} parent=35 // pred_region
          %s405 = smul.u32 2, %s28
          %p406 = scmp.lt.s32.totalorder %s27, 1
          %s407 = scalar_select %p406, %s27, 1
          %p408 = scmp.lt.s32.totalorder %s405, 1
          %s409 = scalar_select %p408, %s405, 1
          %s410 = smul.addr %s407, 2
          %s411 = sadd.s32 %s409, %s410
          %s412 = smul.addr %s411, 8
          %s413 = scalar_lea.vmem %s2, %s412
          %s414 = smul.u32 2, %s28
        $region48: #{embedder_forward.1} parent=35 // pred_fallthru
          _
        // Predicated region
        $region49: #{embedder_forward.1} parent=35 // pred_check
          %p415 = pneg %p145
        $region50: #{embedder_forward.1} parent=35 // pred_check_branch
          %417 = sbr.rel (%p415) target = $region52
        $region51: #{embedder_forward.1} parent=35 // pred_region
          %s418 = smul.u32 2, %s29
          %p419 = scmp.lt.s32.totalorder %s27, 1
          %s420 = scalar_select %p419, %s27, 1
          %p421 = scmp.lt.s32.totalorder %s418, 1
          %s422 = scalar_select %p421, %s418, 1
          %s423 = smul.addr %s420, 2
          %s424 = sadd.s32 %s422, %s423
          %s425 = smul.addr %s424, 8
          %s426 = scalar_lea.vmem %s3, %s425
          %s427 = smul.u32 2, %s29
        $region52: #{embedder_forward.1} parent=35 // pred_fallthru
          _
        // Predicated region
        $region53: #{embedder_forward.1} parent=35 // pred_check
          %p428 = pneg %p173
        $region54: #{embedder_forward.1} parent=35 // pred_check_branch
          %430 = sbr.rel (%p428) target = $region56
        $region55: #{embedder_forward.1} parent=35 // pred_region
          %s431 = smul.u32 2, %s28
          %p432 = scmp.lt.s32.totalorder %s27, 1
          %s433 = scalar_select %p432, %s27, 1
          %p434 = scmp.lt.s32.totalorder %s431, 1
          %s435 = scalar_select %p434, %s431, 1
          %s436 = smul.addr %s433, 2
          %s437 = sadd.s32 %s435, %s436
          %s438 = smul.addr %s437, 8
          %s439 = scalar_lea.vmem %s4, %s438
          %s440 = smul.u32 2, %s28
        $region56: #{embedder_forward.1} parent=35 // pred_fallthru
          _
        // Predicated region
        $region57: #{embedder_forward.1} parent=35 // pred_check
          %p441 = pneg %p201
        $region58: #{embedder_forward.1} parent=35 // pred_check_branch
          %443 = sbr.rel (%p441) target = $region60
        $region59: #{embedder_forward.1} parent=35 // pred_region
          %s444 = smul.u32 2, %s29
          %p445 = scmp.lt.s32.totalorder %s27, 1
          %s446 = scalar_select %p445, %s27, 1
          %p447 = scmp.lt.s32.totalorder %s444, 1
          %s448 = scalar_select %p447, %s444, 1
          %s449 = smul.addr %s446, 2
          %s450 = sadd.s32 %s448, %s449
          %s451 = smul.addr %s450, 8
          %s452 = scalar_lea.vmem %s5, %s451
          %s453 = smul.u32 2, %s29
        $region60: #{embedder_forward.1} parent=35 // pred_fallthru
          _
      $region36: #{embedder_forward.1} parent=5 // pred_fallthru
        _
      %p454 = scmp.le.s32.totalorder 1, %s20
      %p455 = scmp.lt.s32.totalorder %s20, 3
      %p456 = pnand %p454, %p455
      %p457 = pneg %p456
      // Predicated region
      $region61: #{embedder_forward.1} parent=5 // pred_check
        _
      $region62: #{embedder_forward.1} parent=5 // pred_check_branch
        %459 = sbr.rel (%p456) target = $region64
      $region63: #{embedder_forward.1} parent=5 // pred_region
        %s460 = ssub.s32 %s20, 1
        %s461 = smul.u32 2, %s31
        %p462 = scmp.lt.s32.totalorder %s30, 1
        %s463 = scalar_select %p462, %s30, 1
        %p464 = scmp.lt.s32.totalorder %s461, 1
        %s465 = scalar_select %p464, %s461, 1
        %s466 = smul.addr %s463, 2
        %s467 = sadd.s32 %s465, %s466
        %s468 = smul.addr %s467, 8
        %s469 = scalar_lea.vmem %s0, %s468
        %p470 = pneg %p67
        %p471 = pneg %p64
        %s472 = smul.u32 2, %s32
        %p473 = scmp.lt.s32.totalorder %s30, 1
        %s474 = scalar_select %p473, %s30, 1
        %p475 = scmp.lt.s32.totalorder %s472, 1
        %s476 = scalar_select %p475, %s472, 1
        %s477 = smul.addr %s474, 2
        %s478 = sadd.s32 %s476, %s477
        %s479 = smul.addr %s478, 8
        %s480 = scalar_lea.vmem %s1, %s479
        %p481 = pneg %p95
        %p482 = pneg %p92
        %s483 = smul.u32 2, %s31
        %p484 = scmp.lt.s32.totalorder %s30, 1
        %s485 = scalar_select %p484, %s30, 1
        %p486 = scmp.lt.s32.totalorder %s483, 1
        %s487 = scalar_select %p486, %s483, 1
        %s488 = smul.addr %s485, 2
        %s489 = sadd.s32 %s487, %s488
        %s490 = smul.addr %s489, 8
        %s491 = scalar_lea.vmem %s2, %s490
        %p492 = pneg %p123
        %p493 = pneg %p120
        %s494 = smul.u32 2, %s32
        %p495 = scmp.lt.s32.totalorder %s30, 1
        %s496 = scalar_select %p495, %s30, 1
        %p497 = scmp.lt.s32.totalorder %s494, 1
        %s498 = scalar_select %p497, %s494, 1
        %s499 = smul.addr %s496, 2
        %s500 = sadd.s32 %s498, %s499
        %s501 = smul.addr %s500, 8
        %s502 = scalar_lea.vmem %s3, %s501
        %p503 = pneg %p151
        %p504 = pneg %p148
        %s505 = smul.u32 2, %s31
        %p506 = scmp.lt.s32.totalorder %s30, 1
        %s507 = scalar_select %p506, %s30, 1
        %p508 = scmp.lt.s32.totalorder %s505, 1
        %s509 = scalar_select %p508, %s505, 1
        %s510 = smul.addr %s507, 2
        %s511 = sadd.s32 %s509, %s510
        %s512 = smul.addr %s511, 8
        %s513 = scalar_lea.vmem %s4, %s512
        %p514 = pneg %p179
        %p515 = pneg %p176
        %s516 = smul.u32 2, %s32
        %p517 = scmp.lt.s32.totalorder %s30, 1
        %s518 = scalar_select %p517, %s30, 1
        %p519 = scmp.lt.s32.totalorder %s516, 1
        %s520 = scalar_select %p519, %s516, 1
        %s521 = smul.addr %s518, 2
        %s522 = sadd.s32 %s520, %s521
        %s523 = smul.addr %s522, 8
        %s524 = scalar_lea.vmem %s5, %s523
        %p525 = pneg %p207
        %p526 = pneg %p204
        %p527 = pneg %p228
        %p528 = pneg %p225
        %p529 = pneg %p249
        %p530 = pneg %p246
        %p531 = pneg %p270
        %p532 = pneg %p267
        %p533 = pneg %p291
        %p534 = pneg %p288
        %p535 = pneg %p312
        %p536 = pneg %p309
        %p537 = pneg %p342
        %p538 = pneg %p339
        %s539 = sand.u32 %s329, 1
        %s540 = scalar_lea.sflag [#allocation3], %s539
        %s541 = sand.u32 %s329, 1
        %s542 = smul.addr %s541, 128
        %s543 = scalar_lea.vmem [#allocation2], %s542
        %s544 = smul.u32 2, %s31
        %p545 = scmp.lt.s32.totalorder %s30, 1
        %s546 = scalar_select %p545, %s30, 1
        %p547 = scmp.lt.s32.totalorder %s544, 1
        %s548 = scalar_select %p547, %s544, 1
        %s549 = smul.addr %s546, 2
        %s550 = sadd.s32 %s548, %s549
        %s551 = smul.addr %s550, 8
        %s552 = scalar_lea.vmem %s0, %s551
        %s553 = smul.u32 2, %s31
        %s554 = smul.u32 2, %s32
        %p555 = scmp.lt.s32.totalorder %s30, 1
        %s556 = scalar_select %p555, %s30, 1
        %p557 = scmp.lt.s32.totalorder %s554, 1
        %s558 = scalar_select %p557, %s554, 1
        %s559 = smul.addr %s556, 2
        %s560 = sadd.s32 %s558, %s559
        %s561 = smul.addr %s560, 8
        %s562 = scalar_lea.vmem %s1, %s561
        %s563 = smul.u32 2, %s32
        %s564 = smul.u32 2, %s31
        %p565 = scmp.lt.s32.totalorder %s30, 1
        %s566 = scalar_select %p565, %s30, 1
        %p567 = scmp.lt.s32.totalorder %s564, 1
        %s568 = scalar_select %p567, %s564, 1
        %s569 = smul.addr %s566, 2
        %s570 = sadd.s32 %s568, %s569
        %s571 = smul.addr %s570, 8
        %s572 = scalar_lea.vmem %s2, %s571
        %s573 = smul.u32 2, %s31
        %s574 = smul.u32 2, %s32
        %p575 = scmp.lt.s32.totalorder %s30, 1
        %s576 = scalar_select %p575, %s30, 1
        %p577 = scmp.lt.s32.totalorder %s574, 1
        %s578 = scalar_select %p577, %s574, 1
        %s579 = smul.addr %s576, 2
        %s580 = sadd.s32 %s578, %s579
        %s581 = smul.addr %s580, 8
        %s582 = scalar_lea.vmem %s3, %s581
        %s583 = smul.u32 2, %s32
        %s584 = smul.u32 2, %s31
        %p585 = scmp.lt.s32.totalorder %s30, 1
        %s586 = scalar_select %p585, %s30, 1
        %p587 = scmp.lt.s32.totalorder %s584, 1
        %s588 = scalar_select %p587, %s584, 1
        %s589 = smul.addr %s586, 2
        %s590 = sadd.s32 %s588, %s589
        %s591 = smul.addr %s590, 8
        %s592 = scalar_lea.vmem %s4, %s591
        %s593 = smul.u32 2, %s31
        %s594 = smul.u32 2, %s32
        %p595 = scmp.lt.s32.totalorder %s30, 1
        %s596 = scalar_select %p595, %s30, 1
        %p597 = scmp.lt.s32.totalorder %s594, 1
        %s598 = scalar_select %p597, %s594, 1
        %s599 = smul.addr %s596, 2
        %s600 = sadd.s32 %s598, %s599
        %s601 = smul.addr %s600, 8
        %s602 = scalar_lea.vmem %s5, %s601
        %s603 = smul.u32 2, %s32
        %s604 = smul.u32 16, %s31
        %s605 = smul.u32 2, %s32
        %v607 = vld [vmem:[%s10] sm:$0x1]
        %v608 = vld [vmem:[%s10 + $0x1] sm:$0x1]
        %v609 = vld [vmem:[%s10 + $0x2] sm:$0x1]
        %v610 = vld [vmem:[%s10 + $0x3] sm:$0x1]
        %v611 = vld [vmem:[%s10 + $0x4] sm:$0x1]
        %v612 = vld [vmem:[%s10 + $0x5] sm:$0x1]
        %v613 = vld [vmem:[%s572] sm:$0xff]
        %v614 = vld [vmem:[%s572 + $0x8] sm:$0xff]
        %v615 = vld [vmem:[%s582] sm:$0xff]
        %v616 = vld [vmem:[%s582 + $0x8] sm:$0xff]
        %v619 = vrot.slane %v613, 1
        %v620 = vrot.slane %v613, 2
        %v621 = vrot.slane %v613, 3
        %v622 = vrot.slane %v613, 4
        %v623 = vrot.slane %v613, 5
        %v624 = vrot.slane %v613, 6
        %v625 = vrot.slane %v613, 7
        %v626 = vrot.slane %v614, 1
        %v627 = vrot.slane %v614, 2
        %v628 = vrot.slane %v614, 3
        %v629 = vrot.slane %v614, 4
        %v630 = vrot.slane %v614, 5
        %v631 = vrot.slane %v614, 6
        %v632 = vrot.slane %v614, 7
        %v633 = vperm.slane %v613, 0
        %v634 = vperm.slane %v619, 0
        %v635 = vperm.slane %v620, 0
        %v636 = vperm.slane %v621, 0
        %v637 = vperm.slane %v622, 0
        %v638 = vperm.slane %v623, 0
        %v639 = vperm.slane %v624, 0
        %v640 = vperm.slane %v625, 0
        %v641 = vperm.slane %v614, 0
        %v642 = vperm.slane %v626, 0
        %v643 = vperm.slane %v627, 0
        %v644 = vperm.slane %v628, 0
        %v645 = vperm.slane %v629, 0
        %v646 = vperm.slane %v630, 0
        %v647 = vperm.slane %v631, 0
        %v648 = vperm.slane %v632, 0
        %667 = vrot.lane.b32.xlu0 %v615, 112
        %v668 = vpop.permute.xlu0 %667
        %669 = vrot.lane.b32.xlu0 %v616, 112
        %v670 = vpop.permute.xlu0 %669
        %v673 = vmul.f32 %v633, %v668
        %v674 = vmul.f32 %v633, %v670
        %v675 = vmul.f32 %v634, %v668
        %v676 = vmul.f32 %v634, %v670
        %v677 = vmul.f32 %v635, %v668
        %v678 = vmul.f32 %v635, %v670
        %v679 = vmul.f32 %v636, %v668
        %v680 = vmul.f32 %v636, %v670
        %v681 = vmul.f32 %v637, %v668
        %v682 = vmul.f32 %v637, %v670
        %v683 = vmul.f32 %v638, %v668
        %v684 = vmul.f32 %v638, %v670
        %v685 = vmul.f32 %v639, %v668
        %v686 = vmul.f32 %v639, %v670
        %v687 = vmul.f32 %v640, %v668
        %v688 = vmul.f32 %v640, %v670
        %v689 = vmul.f32 %v641, %v668
        %v690 = vmul.f32 %v641, %v670
        %v691 = vmul.f32 %v642, %v668
        %v692 = vmul.f32 %v642, %v670
        %v693 = vmul.f32 %v643, %v668
        %v694 = vmul.f32 %v643, %v670
        %v695 = vmul.f32 %v644, %v668
        %v696 = vmul.f32 %v644, %v670
        %v697 = vmul.f32 %v645, %v668
        %v698 = vmul.f32 %v645, %v670
        %v699 = vmul.f32 %v646, %v668
        %v700 = vmul.f32 %v646, %v670
        %v701 = vmul.f32 %v647, %v668
        %v702 = vmul.f32 %v647, %v670
        %v703 = vmul.f32 %v648, %v668
        %v704 = vmul.f32 %v648, %v670
        %705 = vrot.lane.b32.xlu0 %v615, 16
        %v706 = vpop.permute.xlu0 %705
        %707 = vrot.lane.b32.xlu0 %v616, 16
        %v708 = vpop.permute.xlu0 %707
        %v711 = vmul.f32 %v633, %v706
        %v712 = vmul.f32 %v633, %v708
        %v713 = vmul.f32 %v634, %v706
        %v714 = vmul.f32 %v634, %v708
        %v715 = vmul.f32 %v635, %v706
        %v716 = vmul.f32 %v635, %v708
        %v717 = vmul.f32 %v636, %v706
        %v718 = vmul.f32 %v636, %v708
        %v719 = vmul.f32 %v637, %v706
        %v720 = vmul.f32 %v637, %v708
        %v721 = vmul.f32 %v638, %v706
        %v722 = vmul.f32 %v638, %v708
        %v723 = vmul.f32 %v639, %v706
        %v724 = vmul.f32 %v639, %v708
        %v725 = vmul.f32 %v640, %v706
        %v726 = vmul.f32 %v640, %v708
        %v727 = vmul.f32 %v641, %v706
        %v728 = vmul.f32 %v641, %v708
        %v729 = vmul.f32 %v642, %v706
        %v730 = vmul.f32 %v642, %v708
        %v731 = vmul.f32 %v643, %v706
        %v732 = vmul.f32 %v643, %v708
        %v733 = vmul.f32 %v644, %v706
        %v734 = vmul.f32 %v644, %v708
        %v735 = vmul.f32 %v645, %v706
        %v736 = vmul.f32 %v645, %v708
        %v737 = vmul.f32 %v646, %v706
        %v738 = vmul.f32 %v646, %v708
        %v739 = vmul.f32 %v647, %v706
        %v740 = vmul.f32 %v647, %v708
        %v741 = vmul.f32 %v648, %v706
        %v742 = vmul.f32 %v648, %v708
        %775 = vrot.lane.b32.xlu0 %v711, 112
        %v776 = vpop.permute.xlu0 %775
        %777 = vrot.lane.b32.xlu0 %v712, 112
        %v778 = vpop.permute.xlu0 %777
        %779 = vrot.lane.b32.xlu0 %v713, 112
        %v780 = vpop.permute.xlu0 %779
        %781 = vrot.lane.b32.xlu0 %v714, 112
        %v782 = vpop.permute.xlu0 %781
        %783 = vrot.lane.b32.xlu0 %v715, 112
        %v784 = vpop.permute.xlu0 %783
        %785 = vrot.lane.b32.xlu0 %v716, 112
        %v786 = vpop.permute.xlu0 %785
        %787 = vrot.lane.b32.xlu0 %v717, 112
        %v788 = vpop.permute.xlu0 %787
        %789 = vrot.lane.b32.xlu0 %v718, 112
        %v790 = vpop.permute.xlu0 %789
        %791 = vrot.lane.b32.xlu0 %v719, 112
        %v792 = vpop.permute.xlu0 %791
        %793 = vrot.lane.b32.xlu0 %v720, 112
        %v794 = vpop.permute.xlu0 %793
        %795 = vrot.lane.b32.xlu0 %v721, 112
        %v796 = vpop.permute.xlu0 %795
        %797 = vrot.lane.b32.xlu0 %v722, 112
        %v798 = vpop.permute.xlu0 %797
        %799 = vrot.lane.b32.xlu0 %v723, 112
        %v800 = vpop.permute.xlu0 %799
        %801 = vrot.lane.b32.xlu0 %v724, 112
        %v802 = vpop.permute.xlu0 %801
        %803 = vrot.lane.b32.xlu0 %v725, 112
        %v804 = vpop.permute.xlu0 %803
        %805 = vrot.lane.b32.xlu0 %v726, 112
        %v806 = vpop.permute.xlu0 %805
        %807 = vrot.lane.b32.xlu0 %v727, 112
        %v808 = vpop.permute.xlu0 %807
        %809 = vrot.lane.b32.xlu0 %v728, 112
        %v810 = vpop.permute.xlu0 %809
        %811 = vrot.lane.b32.xlu0 %v729, 112
        %v812 = vpop.permute.xlu0 %811
        %813 = vrot.lane.b32.xlu0 %v730, 112
        %v814 = vpop.permute.xlu0 %813
        %815 = vrot.lane.b32.xlu0 %v731, 112
        %v816 = vpop.permute.xlu0 %815
        %817 = vrot.lane.b32.xlu0 %v732, 112
        %v818 = vpop.permute.xlu0 %817
        %819 = vrot.lane.b32.xlu0 %v733, 112
        %v820 = vpop.permute.xlu0 %819
        %821 = vrot.lane.b32.xlu0 %v734, 112
        %v822 = vpop.permute.xlu0 %821
        %823 = vrot.lane.b32.xlu0 %v735, 112
        %v824 = vpop.permute.xlu0 %823
        %825 = vrot.lane.b32.xlu0 %v736, 112
        %v826 = vpop.permute.xlu0 %825
        %827 = vrot.lane.b32.xlu0 %v737, 112
        %v828 = vpop.permute.xlu0 %827
        %829 = vrot.lane.b32.xlu0 %v738, 112
        %v830 = vpop.permute.xlu0 %829
        %831 = vrot.lane.b32.xlu0 %v739, 112
        %v832 = vpop.permute.xlu0 %831
        %833 = vrot.lane.b32.xlu0 %v740, 112
        %v834 = vpop.permute.xlu0 %833
        %835 = vrot.lane.b32.xlu0 %v741, 112
        %v836 = vpop.permute.xlu0 %835
        %837 = vrot.lane.b32.xlu0 %v742, 112
        %v838 = vpop.permute.xlu0 %837
        %v871 = vsub.f32 %v673, %v776
        %v872 = vsub.f32 %v674, %v778
        %v873 = vsub.f32 %v675, %v780
        %v874 = vsub.f32 %v676, %v782
        %v875 = vsub.f32 %v677, %v784
        %v876 = vsub.f32 %v678, %v786
        %v877 = vsub.f32 %v679, %v788
        %v878 = vsub.f32 %v680, %v790
        %v879 = vsub.f32 %v681, %v792
        %v880 = vsub.f32 %v682, %v794
        %v881 = vsub.f32 %v683, %v796
        %v882 = vsub.f32 %v684, %v798
        %v883 = vsub.f32 %v685, %v800
        %v884 = vsub.f32 %v686, %v802
        %v885 = vsub.f32 %v687, %v804
        %v886 = vsub.f32 %v688, %v806
        %v887 = vsub.f32 %v689, %v808
        %v888 = vsub.f32 %v690, %v810
        %v889 = vsub.f32 %v691, %v812
        %v890 = vsub.f32 %v692, %v814
        %v891 = vsub.f32 %v693, %v816
        %v892 = vsub.f32 %v694, %v818
        %v893 = vsub.f32 %v695, %v820
        %v894 = vsub.f32 %v696, %v822
        %v895 = vsub.f32 %v697, %v824
        %v896 = vsub.f32 %v698, %v826
        %v897 = vsub.f32 %v699, %v828
        %v898 = vsub.f32 %v700, %v830
        %v899 = vsub.f32 %v701, %v832
        %v900 = vsub.f32 %v702, %v834
        %v901 = vsub.f32 %v703, %v836
        %v902 = vsub.f32 %v704, %v838
        %v903 = vpack.c.bf16 %v871, %v871
        %v904 = vpack.c.bf16 %v872, %v872
        %v905 = vpack.c.bf16 %v873, %v873
        %v906 = vpack.c.bf16 %v874, %v874
        %v907 = vpack.c.bf16 %v875, %v875
        %v908 = vpack.c.bf16 %v876, %v876
        %v909 = vpack.c.bf16 %v877, %v877
        %v910 = vpack.c.bf16 %v878, %v878
        %v911 = vpack.c.bf16 %v879, %v879
        %v912 = vpack.c.bf16 %v880, %v880
        %v913 = vpack.c.bf16 %v881, %v881
        %v914 = vpack.c.bf16 %v882, %v882
        %v915 = vpack.c.bf16 %v883, %v883
        %v916 = vpack.c.bf16 %v884, %v884
        %v917 = vpack.c.bf16 %v885, %v885
        %v918 = vpack.c.bf16 %v886, %v886
        %v919 = vpack.c.bf16 %v887, %v887
        %v920 = vpack.c.bf16 %v888, %v888
        %v921 = vpack.c.bf16 %v889, %v889
        %v922 = vpack.c.bf16 %v890, %v890
        %v923 = vpack.c.bf16 %v891, %v891
        %v924 = vpack.c.bf16 %v892, %v892
        %v925 = vpack.c.bf16 %v893, %v893
        %v926 = vpack.c.bf16 %v894, %v894
        %v927 = vpack.c.bf16 %v895, %v895
        %v928 = vpack.c.bf16 %v896, %v896
        %v929 = vpack.c.bf16 %v897, %v897
        %v930 = vpack.c.bf16 %v898, %v898
        %v931 = vpack.c.bf16 %v899, %v899
        %v932 = vpack.c.bf16 %v900, %v900
        %v933 = vpack.c.bf16 %v901, %v901
        %v934 = vpack.c.bf16 %v902, %v902
        %v935 = vmul.f32 %v633, %v615
        %v936 = vmul.f32 %v633, %v616
        %v937 = vmul.f32 %v634, %v615
        %v938 = vmul.f32 %v634, %v616
        %v939 = vmul.f32 %v635, %v615
        %v940 = vmul.f32 %v635, %v616
        %v941 = vmul.f32 %v636, %v615
        %v942 = vmul.f32 %v636, %v616
        %v943 = vmul.f32 %v637, %v615
        %v944 = vmul.f32 %v637, %v616
        %v945 = vmul.f32 %v638, %v615
        %v946 = vmul.f32 %v638, %v616
        %v947 = vmul.f32 %v639, %v615
        %v948 = vmul.f32 %v639, %v616
        %v949 = vmul.f32 %v640, %v615
        %v950 = vmul.f32 %v640, %v616
        %v951 = vmul.f32 %v641, %v615
        %v952 = vmul.f32 %v641, %v616
        %v953 = vmul.f32 %v642, %v615
        %v954 = vmul.f32 %v642, %v616
        %v955 = vmul.f32 %v643, %v615
        %v956 = vmul.f32 %v643, %v616
        %v957 = vmul.f32 %v644, %v615
        %v958 = vmul.f32 %v644, %v616
        %v959 = vmul.f32 %v645, %v615
        %v960 = vmul.f32 %v645, %v616
        %v961 = vmul.f32 %v646, %v615
        %v962 = vmul.f32 %v646, %v616
        %v963 = vmul.f32 %v647, %v615
        %v964 = vmul.f32 %v647, %v616
        %v965 = vmul.f32 %v648, %v615
        %v966 = vmul.f32 %v648, %v616
        %999 = vrot.lane.b32.xlu0 %v935, 16
        %v1000 = vpop.permute.xlu0 %999
        %1001 = vrot.lane.b32.xlu0 %v936, 16
        %v1002 = vpop.permute.xlu0 %1001
        %1003 = vrot.lane.b32.xlu0 %v937, 16
        %v1004 = vpop.permute.xlu0 %1003
        %1005 = vrot.lane.b32.xlu0 %v938, 16
        %v1006 = vpop.permute.xlu0 %1005
        %1007 = vrot.lane.b32.xlu0 %v939, 16
        %v1008 = vpop.permute.xlu0 %1007
        %1009 = vrot.lane.b32.xlu0 %v940, 16
        %v1010 = vpop.permute.xlu0 %1009
        %1011 = vrot.lane.b32.xlu0 %v941, 16
        %v1012 = vpop.permute.xlu0 %1011
        %1013 = vrot.lane.b32.xlu0 %v942, 16
        %v1014 = vpop.permute.xlu0 %1013
        %1015 = vrot.lane.b32.xlu0 %v943, 16
        %v1016 = vpop.permute.xlu0 %1015
        %1017 = vrot.lane.b32.xlu0 %v944, 16
        %v1018 = vpop.permute.xlu0 %1017
        %1019 = vrot.lane.b32.xlu0 %v945, 16
        %v1020 = vpop.permute.xlu0 %1019
        %1021 = vrot.lane.b32.xlu0 %v946, 16
        %v1022 = vpop.permute.xlu0 %1021
        %1023 = vrot.lane.b32.xlu0 %v947, 16
        %v1024 = vpop.permute.xlu0 %1023
        %1025 = vrot.lane.b32.xlu0 %v948, 16
        %v1026 = vpop.permute.xlu0 %1025
        %1027 = vrot.lane.b32.xlu0 %v949, 16
        %v1028 = vpop.permute.xlu0 %1027
        %1029 = vrot.lane.b32.xlu0 %v950, 16
        %v1030 = vpop.permute.xlu0 %1029
        %1031 = vrot.lane.b32.xlu0 %v951, 16
        %v1032 = vpop.permute.xlu0 %1031
        %1033 = vrot.lane.b32.xlu0 %v952, 16
        %v1034 = vpop.permute.xlu0 %1033
        %1035 = vrot.lane.b32.xlu0 %v953, 16
        %v1036 = vpop.permute.xlu0 %1035
        %1037 = vrot.lane.b32.xlu0 %v954, 16
        %v1038 = vpop.permute.xlu0 %1037
        %1039 = vrot.lane.b32.xlu0 %v955, 16
        %v1040 = vpop.permute.xlu0 %1039
        %1041 = vrot.lane.b32.xlu0 %v956, 16
        %v1042 = vpop.permute.xlu0 %1041
        %1043 = vrot.lane.b32.xlu0 %v957, 16
        %v1044 = vpop.permute.xlu0 %1043
        %1045 = vrot.lane.b32.xlu0 %v958, 16
        %v1046 = vpop.permute.xlu0 %1045
        %1047 = vrot.lane.b32.xlu0 %v959, 16
        %v1048 = vpop.permute.xlu0 %1047
        %1049 = vrot.lane.b32.xlu0 %v960, 16
        %v1050 = vpop.permute.xlu0 %1049
        %1051 = vrot.lane.b32.xlu0 %v961, 16
        %v1052 = vpop.permute.xlu0 %1051
        %1053 = vrot.lane.b32.xlu0 %v962, 16
        %v1054 = vpop.permute.xlu0 %1053
        %1055 = vrot.lane.b32.xlu0 %v963, 16
        %v1056 = vpop.permute.xlu0 %1055
        %1057 = vrot.lane.b32.xlu0 %v964, 16
        %v1058 = vpop.permute.xlu0 %1057
        %1059 = vrot.lane.b32.xlu0 %v965, 16
        %v1060 = vpop.permute.xlu0 %1059
        %1061 = vrot.lane.b32.xlu0 %v966, 16
        %v1062 = vpop.permute.xlu0 %1061
        %v1095 = vadd.f32 %v935, %v1000
        %v1096 = vadd.f32 %v936, %v1002
        %v1097 = vadd.f32 %v937, %v1004
        %v1098 = vadd.f32 %v938, %v1006
        %v1099 = vadd.f32 %v939, %v1008
        %v1100 = vadd.f32 %v940, %v1010
        %v1101 = vadd.f32 %v941, %v1012
        %v1102 = vadd.f32 %v942, %v1014
        %v1103 = vadd.f32 %v943, %v1016
        %v1104 = vadd.f32 %v944, %v1018
        %v1105 = vadd.f32 %v945, %v1020
        %v1106 = vadd.f32 %v946, %v1022
        %v1107 = vadd.f32 %v947, %v1024
        %v1108 = vadd.f32 %v948, %v1026
        %v1109 = vadd.f32 %v949, %v1028
        %v1110 = vadd.f32 %v950, %v1030
        %v1111 = vadd.f32 %v951, %v1032
        %v1112 = vadd.f32 %v952, %v1034
        %v1113 = vadd.f32 %v953, %v1036
        %v1114 = vadd.f32 %v954, %v1038
        %v1115 = vadd.f32 %v955, %v1040
        %v1116 = vadd.f32 %v956, %v1042
        %v1117 = vadd.f32 %v957, %v1044
        %v1118 = vadd.f32 %v958, %v1046
        %v1119 = vadd.f32 %v959, %v1048
        %v1120 = vadd.f32 %v960, %v1050
        %v1121 = vadd.f32 %v961, %v1052
        %v1122 = vadd.f32 %v962, %v1054
        %v1123 = vadd.f32 %v963, %v1056
        %v1124 = vadd.f32 %v964, %v1058
        %v1125 = vadd.f32 %v965, %v1060
        %v1126 = vadd.f32 %v966, %v1062
        %v1127 = vpack.c.bf16 %v1095, %v1095
        %v1128 = vpack.c.bf16 %v1096, %v1096
        %v1129 = vpack.c.bf16 %v1097, %v1097
        %v1130 = vpack.c.bf16 %v1098, %v1098
        %v1131 = vpack.c.bf16 %v1099, %v1099
        %v1132 = vpack.c.bf16 %v1100, %v1100
        %v1133 = vpack.c.bf16 %v1101, %v1101
        %v1134 = vpack.c.bf16 %v1102, %v1102
        %v1135 = vpack.c.bf16 %v1103, %v1103
        %v1136 = vpack.c.bf16 %v1104, %v1104
        %v1137 = vpack.c.bf16 %v1105, %v1105
        %v1138 = vpack.c.bf16 %v1106, %v1106
        %v1139 = vpack.c.bf16 %v1107, %v1107
        %v1140 = vpack.c.bf16 %v1108, %v1108
        %v1141 = vpack.c.bf16 %v1109, %v1109
        %v1142 = vpack.c.bf16 %v1110, %v1110
        %v1143 = vpack.c.bf16 %v1111, %v1111
        %v1144 = vpack.c.bf16 %v1112, %v1112
        %v1145 = vpack.c.bf16 %v1113, %v1113
        %v1146 = vpack.c.bf16 %v1114, %v1114
        %v1147 = vpack.c.bf16 %v1115, %v1115
        %v1148 = vpack.c.bf16 %v1116, %v1116
        %v1149 = vpack.c.bf16 %v1117, %v1117
        %v1150 = vpack.c.bf16 %v1118, %v1118
        %v1151 = vpack.c.bf16 %v1119, %v1119
        %v1152 = vpack.c.bf16 %v1120, %v1120
        %v1153 = vpack.c.bf16 %v1121, %v1121
        %v1154 = vpack.c.bf16 %v1122, %v1122
        %v1155 = vpack.c.bf16 %v1123, %v1123
        %v1156 = vpack.c.bf16 %v1124, %v1124
        %v1157 = vpack.c.bf16 %v1125, %v1125
        %v1158 = vpack.c.bf16 %v1126, %v1126
        %v1159 = vld [vmem:[%s592] sm:$0xff]
        %v1160 = vld [vmem:[%s592 + $0x8] sm:$0xff]
        %v1161 = vld [vmem:[%s602] sm:$0xff]
        %v1162 = vld [vmem:[%s602 + $0x8] sm:$0xff]
        %v1165 = vrot.slane %v1159, 1
        %v1166 = vrot.slane %v1159, 2
        %v1167 = vrot.slane %v1159, 3
        %v1168 = vrot.slane %v1159, 4
        %v1169 = vrot.slane %v1159, 5
        %v1170 = vrot.slane %v1159, 6
        %v1171 = vrot.slane %v1159, 7
        %v1172 = vrot.slane %v1160, 1
        %v1173 = vrot.slane %v1160, 2
        %v1174 = vrot.slane %v1160, 3
        %v1175 = vrot.slane %v1160, 4
        %v1176 = vrot.slane %v1160, 5
        %v1177 = vrot.slane %v1160, 6
        %v1178 = vrot.slane %v1160, 7
        %v1179 = vperm.slane %v1159, 0
        %v1180 = vperm.slane %v1165, 0
        %v1181 = vperm.slane %v1166, 0
        %v1182 = vperm.slane %v1167, 0
        %v1183 = vperm.slane %v1168, 0
        %v1184 = vperm.slane %v1169, 0
        %v1185 = vperm.slane %v1170, 0
        %v1186 = vperm.slane %v1171, 0
        %v1187 = vperm.slane %v1160, 0
        %v1188 = vperm.slane %v1172, 0
        %v1189 = vperm.slane %v1173, 0
        %v1190 = vperm.slane %v1174, 0
        %v1191 = vperm.slane %v1175, 0
        %v1192 = vperm.slane %v1176, 0
        %v1193 = vperm.slane %v1177, 0
        %v1194 = vperm.slane %v1178, 0
        %v1211 = vsub.f32 %v1179, %v1161
        %v1212 = vsub.f32 %v1179, %v1162
        %v1213 = vsub.f32 %v1180, %v1161
        %v1214 = vsub.f32 %v1180, %v1162
        %v1215 = vsub.f32 %v1181, %v1161
        %v1216 = vsub.f32 %v1181, %v1162
        %v1217 = vsub.f32 %v1182, %v1161
        %v1218 = vsub.f32 %v1182, %v1162
        %v1219 = vsub.f32 %v1183, %v1161
        %v1220 = vsub.f32 %v1183, %v1162
        %v1221 = vsub.f32 %v1184, %v1161
        %v1222 = vsub.f32 %v1184, %v1162
        %v1223 = vsub.f32 %v1185, %v1161
        %v1224 = vsub.f32 %v1185, %v1162
        %v1225 = vsub.f32 %v1186, %v1161
        %v1226 = vsub.f32 %v1186, %v1162
        %v1227 = vsub.f32 %v1187, %v1161
        %v1228 = vsub.f32 %v1187, %v1162
        %v1229 = vsub.f32 %v1188, %v1161
        %v1230 = vsub.f32 %v1188, %v1162
        %v1231 = vsub.f32 %v1189, %v1161
        %v1232 = vsub.f32 %v1189, %v1162
        %v1233 = vsub.f32 %v1190, %v1161
        %v1234 = vsub.f32 %v1190, %v1162
        %v1235 = vsub.f32 %v1191, %v1161
        %v1236 = vsub.f32 %v1191, %v1162
        %v1237 = vsub.f32 %v1192, %v1161
        %v1238 = vsub.f32 %v1192, %v1162
        %v1239 = vsub.f32 %v1193, %v1161
        %v1240 = vsub.f32 %v1193, %v1162
        %v1241 = vsub.f32 %v1194, %v1161
        %v1242 = vsub.f32 %v1194, %v1162
        %v1243 = vmul.f32 %v1211, %v1211
        %v1244 = vmul.f32 %v1212, %v1212
        %v1245 = vmul.f32 %v1213, %v1213
        %v1246 = vmul.f32 %v1214, %v1214
        %v1247 = vmul.f32 %v1215, %v1215
        %v1248 = vmul.f32 %v1216, %v1216
        %v1249 = vmul.f32 %v1217, %v1217
        %v1250 = vmul.f32 %v1218, %v1218
        %v1251 = vmul.f32 %v1219, %v1219
        %v1252 = vmul.f32 %v1220, %v1220
        %v1253 = vmul.f32 %v1221, %v1221
        %v1254 = vmul.f32 %v1222, %v1222
        %v1255 = vmul.f32 %v1223, %v1223
        %v1256 = vmul.f32 %v1224, %v1224
        %v1257 = vmul.f32 %v1225, %v1225
        %v1258 = vmul.f32 %v1226, %v1226
        %v1259 = vmul.f32 %v1227, %v1227
        %v1260 = vmul.f32 %v1228, %v1228
        %v1261 = vmul.f32 %v1229, %v1229
        %v1262 = vmul.f32 %v1230, %v1230
        %v1263 = vmul.f32 %v1231, %v1231
        %v1264 = vmul.f32 %v1232, %v1232
        %v1265 = vmul.f32 %v1233, %v1233
        %v1266 = vmul.f32 %v1234, %v1234
        %v1267 = vmul.f32 %v1235, %v1235
        %v1268 = vmul.f32 %v1236, %v1236
        %v1269 = vmul.f32 %v1237, %v1237
        %v1270 = vmul.f32 %v1238, %v1238
        %v1271 = vmul.f32 %v1239, %v1239
        %v1272 = vmul.f32 %v1240, %v1240
        %v1273 = vmul.f32 %v1241, %v1241
        %v1274 = vmul.f32 %v1242, %v1242
        %1307 = vrot.lane.b32.xlu0 %v1243, 127
        %v1308 = vpop.permute.xlu0 %1307
        %1309 = vrot.lane.b32.xlu0 %v1244, 127
        %v1310 = vpop.permute.xlu0 %1309
        %1311 = vrot.lane.b32.xlu0 %v1245, 127
        %v1312 = vpop.permute.xlu0 %1311
        %1313 = vrot.lane.b32.xlu0 %v1246, 127
        %v1314 = vpop.permute.xlu0 %1313
        %1315 = vrot.lane.b32.xlu0 %v1247, 127
        %v1316 = vpop.permute.xlu0 %1315
        %1317 = vrot.lane.b32.xlu0 %v1248, 127
        %v1318 = vpop.permute.xlu0 %1317
        %1319 = vrot.lane.b32.xlu0 %v1249, 127
        %v1320 = vpop.permute.xlu0 %1319
        %1321 = vrot.lane.b32.xlu0 %v1250, 127
        %v1322 = vpop.permute.xlu0 %1321
        %1323 = vrot.lane.b32.xlu0 %v1251, 127
        %v1324 = vpop.permute.xlu0 %1323
        %1325 = vrot.lane.b32.xlu0 %v1252, 127
        %v1326 = vpop.permute.xlu0 %1325
        %1327 = vrot.lane.b32.xlu0 %v1253, 127
        %v1328 = vpop.permute.xlu0 %1327
        %1329 = vrot.lane.b32.xlu0 %v1254, 127
        %v1330 = vpop.permute.xlu0 %1329
        %1331 = vrot.lane.b32.xlu0 %v1255, 127
        %v1332 = vpop.permute.xlu0 %1331
        %1333 = vrot.lane.b32.xlu0 %v1256, 127
        %v1334 = vpop.permute.xlu0 %1333
        %1335 = vrot.lane.b32.xlu0 %v1257, 127
        %v1336 = vpop.permute.xlu0 %1335
        %1337 = vrot.lane.b32.xlu0 %v1258, 127
        %v1338 = vpop.permute.xlu0 %1337
        %1339 = vrot.lane.b32.xlu0 %v1259, 127
        %v1340 = vpop.permute.xlu0 %1339
        %1341 = vrot.lane.b32.xlu0 %v1260, 127
        %v1342 = vpop.permute.xlu0 %1341
        %1343 = vrot.lane.b32.xlu0 %v1261, 127
        %v1344 = vpop.permute.xlu0 %1343
        %1345 = vrot.lane.b32.xlu0 %v1262, 127
        %v1346 = vpop.permute.xlu0 %1345
        %1347 = vrot.lane.b32.xlu0 %v1263, 127
        %v1348 = vpop.permute.xlu0 %1347
        %1349 = vrot.lane.b32.xlu0 %v1264, 127
        %v1350 = vpop.permute.xlu0 %1349
        %1351 = vrot.lane.b32.xlu0 %v1265, 127
        %v1352 = vpop.permute.xlu0 %1351
        %1353 = vrot.lane.b32.xlu0 %v1266, 127
        %v1354 = vpop.permute.xlu0 %1353
        %1355 = vrot.lane.b32.xlu0 %v1267, 127
        %v1356 = vpop.permute.xlu0 %1355
        %1357 = vrot.lane.b32.xlu0 %v1268, 127
        %v1358 = vpop.permute.xlu0 %1357
        %1359 = vrot.lane.b32.xlu0 %v1269, 127
        %v1360 = vpop.permute.xlu0 %1359
        %1361 = vrot.lane.b32.xlu0 %v1270, 127
        %v1362 = vpop.permute.xlu0 %1361
        %1363 = vrot.lane.b32.xlu0 %v1271, 127
        %v1364 = vpop.permute.xlu0 %1363
        %1365 = vrot.lane.b32.xlu0 %v1272, 127
        %v1366 = vpop.permute.xlu0 %1365
        %1367 = vrot.lane.b32.xlu0 %v1273, 127
        %v1368 = vpop.permute.xlu0 %1367
        %1369 = vrot.lane.b32.xlu0 %v1274, 127
        %v1370 = vpop.permute.xlu0 %1369
        %v1403 = vadd.f32 %v1243, %v1308
        %v1404 = vadd.f32 %v1244, %v1310
        %v1405 = vadd.f32 %v1245, %v1312
        %v1406 = vadd.f32 %v1246, %v1314
        %v1407 = vadd.f32 %v1247, %v1316
        %v1408 = vadd.f32 %v1248, %v1318
        %v1409 = vadd.f32 %v1249, %v1320
        %v1410 = vadd.f32 %v1250, %v1322
        %v1411 = vadd.f32 %v1251, %v1324
        %v1412 = vadd.f32 %v1252, %v1326
        %v1413 = vadd.f32 %v1253, %v1328
        %v1414 = vadd.f32 %v1254, %v1330
        %v1415 = vadd.f32 %v1255, %v1332
        %v1416 = vadd.f32 %v1256, %v1334
        %v1417 = vadd.f32 %v1257, %v1336
        %v1418 = vadd.f32 %v1258, %v1338
        %v1419 = vadd.f32 %v1259, %v1340
        %v1420 = vadd.f32 %v1260, %v1342
        %v1421 = vadd.f32 %v1261, %v1344
        %v1422 = vadd.f32 %v1262, %v1346
        %v1423 = vadd.f32 %v1263, %v1348
        %v1424 = vadd.f32 %v1264, %v1350
        %v1425 = vadd.f32 %v1265, %v1352
        %v1426 = vadd.f32 %v1266, %v1354
        %v1427 = vadd.f32 %v1267, %v1356
        %v1428 = vadd.f32 %v1268, %v1358
        %v1429 = vadd.f32 %v1269, %v1360
        %v1430 = vadd.f32 %v1270, %v1362
        %v1431 = vadd.f32 %v1271, %v1364
        %v1432 = vadd.f32 %v1272, %v1366
        %v1433 = vadd.f32 %v1273, %v1368
        %v1434 = vadd.f32 %v1274, %v1370
        %1435 = vrot.lane.b32.xlu0 %v1243, 126
        %v1436 = vpop.permute.xlu0 %1435
        %1437 = vrot.lane.b32.xlu0 %v1244, 126
        %v1438 = vpop.permute.xlu0 %1437
        %1439 = vrot.lane.b32.xlu0 %v1245, 126
        %v1440 = vpop.permute.xlu0 %1439
        %1441 = vrot.lane.b32.xlu0 %v1246, 126
        %v1442 = vpop.permute.xlu0 %1441
        %1443 = vrot.lane.b32.xlu0 %v1247, 126
        %v1444 = vpop.permute.xlu0 %1443
        %1445 = vrot.lane.b32.xlu0 %v1248, 126
        %v1446 = vpop.permute.xlu0 %1445
        %1447 = vrot.lane.b32.xlu0 %v1249, 126
        %v1448 = vpop.permute.xlu0 %1447
        %1449 = vrot.lane.b32.xlu0 %v1250, 126
        %v1450 = vpop.permute.xlu0 %1449
        %1451 = vrot.lane.b32.xlu0 %v1251, 126
        %v1452 = vpop.permute.xlu0 %1451
        %1453 = vrot.lane.b32.xlu0 %v1252, 126
        %v1454 = vpop.permute.xlu0 %1453
        %1455 = vrot.lane.b32.xlu0 %v1253, 126
        %v1456 = vpop.permute.xlu0 %1455
        %1457 = vrot.lane.b32.xlu0 %v1254, 126
        %v1458 = vpop.permute.xlu0 %1457
        %1459 = vrot.lane.b32.xlu0 %v1255, 126
        %v1460 = vpop.permute.xlu0 %1459
        %1461 = vrot.lane.b32.xlu0 %v1256, 126
        %v1462 = vpop.permute.xlu0 %1461
        %1463 = vrot.lane.b32.xlu0 %v1257, 126
        %v1464 = vpop.permute.xlu0 %1463
        %1465 = vrot.lane.b32.xlu0 %v1258, 126
        %v1466 = vpop.permute.xlu0 %1465
        %1467 = vrot.lane.b32.xlu0 %v1259, 126
        %v1468 = vpop.permute.xlu0 %1467
        %1469 = vrot.lane.b32.xlu0 %v1260, 126
        %v1470 = vpop.permute.xlu0 %1469
        %1471 = vrot.lane.b32.xlu0 %v1261, 126
        %v1472 = vpop.permute.xlu0 %1471
        %1473 = vrot.lane.b32.xlu0 %v1262, 126
        %v1474 = vpop.permute.xlu0 %1473
        %1475 = vrot.lane.b32.xlu0 %v1263, 126
        %v1476 = vpop.permute.xlu0 %1475
        %1477 = vrot.lane.b32.xlu0 %v1264, 126
        %v1478 = vpop.permute.xlu0 %1477
        %1479 = vrot.lane.b32.xlu0 %v1265, 126
        %v1480 = vpop.permute.xlu0 %1479
        %1481 = vrot.lane.b32.xlu0 %v1266, 126
        %v1482 = vpop.permute.xlu0 %1481
        %1483 = vrot.lane.b32.xlu0 %v1267, 126
        %v1484 = vpop.permute.xlu0 %1483
        %1485 = vrot.lane.b32.xlu0 %v1268, 126
        %v1486 = vpop.permute.xlu0 %1485
        %1487 = vrot.lane.b32.xlu0 %v1269, 126
        %v1488 = vpop.permute.xlu0 %1487
        %1489 = vrot.lane.b32.xlu0 %v1270, 126
        %v1490 = vpop.permute.xlu0 %1489
        %1491 = vrot.lane.b32.xlu0 %v1271, 126
        %v1492 = vpop.permute.xlu0 %1491
        %1493 = vrot.lane.b32.xlu0 %v1272, 126
        %v1494 = vpop.permute.xlu0 %1493
        %1495 = vrot.lane.b32.xlu0 %v1273, 126
        %v1496 = vpop.permute.xlu0 %1495
        %1497 = vrot.lane.b32.xlu0 %v1274, 126
        %v1498 = vpop.permute.xlu0 %1497
        %v1531 = vadd.f32 %v1403, %v1436
        %v1532 = vadd.f32 %v1404, %v1438
        %v1533 = vadd.f32 %v1405, %v1440
        %v1534 = vadd.f32 %v1406, %v1442
        %v1535 = vadd.f32 %v1407, %v1444
        %v1536 = vadd.f32 %v1408, %v1446
        %v1537 = vadd.f32 %v1409, %v1448
        %v1538 = vadd.f32 %v1410, %v1450
        %v1539 = vadd.f32 %v1411, %v1452
        %v1540 = vadd.f32 %v1412, %v1454
        %v1541 = vadd.f32 %v1413, %v1456
        %v1542 = vadd.f32 %v1414, %v1458
        %v1543 = vadd.f32 %v1415, %v1460
        %v1544 = vadd.f32 %v1416, %v1462
        %v1545 = vadd.f32 %v1417, %v1464
        %v1546 = vadd.f32 %v1418, %v1466
        %v1547 = vadd.f32 %v1419, %v1468
        %v1548 = vadd.f32 %v1420, %v1470
        %v1549 = vadd.f32 %v1421, %v1472
        %v1550 = vadd.f32 %v1422, %v1474
        %v1551 = vadd.f32 %v1423, %v1476
        %v1552 = vadd.f32 %v1424, %v1478
        %v1553 = vadd.f32 %v1425, %v1480
        %v1554 = vadd.f32 %v1426, %v1482
        %v1555 = vadd.f32 %v1427, %v1484
        %v1556 = vadd.f32 %v1428, %v1486
        %v1557 = vadd.f32 %v1429, %v1488
        %v1558 = vadd.f32 %v1430, %v1490
        %v1559 = vadd.f32 %v1431, %v1492
        %v1560 = vadd.f32 %v1432, %v1494
        %v1561 = vadd.f32 %v1433, %v1496
        %v1562 = vadd.f32 %v1434, %v1498
        %1564 = vset.pattern.permute.xlu0 0
        %1565 = vperm.xlu0 %1564, %v1531
        %v1566 = vpop.permute.xlu0 %1565
        %1569 = vset.pattern.permute.xlu0 0
        %1570 = vperm.xlu0 %1569, %v1532
        %v1571 = vpop.permute.xlu0 %1570
        %1574 = vset.pattern.permute.xlu0 0
        %1575 = vperm.xlu0 %1574, %v1533
        %v1576 = vpop.permute.xlu0 %1575
        %1579 = vset.pattern.permute.xlu0 0
        %1580 = vperm.xlu0 %1579, %v1534
        %v1581 = vpop.permute.xlu0 %1580
        %1584 = vset.pattern.permute.xlu0 0
        %1585 = vperm.xlu0 %1584, %v1535
        %v1586 = vpop.permute.xlu0 %1585
        %1589 = vset.pattern.permute.xlu0 0
        %1590 = vperm.xlu0 %1589, %v1536
        %v1591 = vpop.permute.xlu0 %1590
        %1594 = vset.pattern.permute.xlu0 0
        %1595 = vperm.xlu0 %1594, %v1537
        %v1596 = vpop.permute.xlu0 %1595
        %1599 = vset.pattern.permute.xlu0 0
        %1600 = vperm.xlu0 %1599, %v1538
        %v1601 = vpop.permute.xlu0 %1600
        %1604 = vset.pattern.permute.xlu0 0
        %1605 = vperm.xlu0 %1604, %v1539
        %v1606 = vpop.permute.xlu0 %1605
        %1609 = vset.pattern.permute.xlu0 0
        %1610 = vperm.xlu0 %1609, %v1540
        %v1611 = vpop.permute.xlu0 %1610
        %1614 = vset.pattern.permute.xlu0 0
        %1615 = vperm.xlu0 %1614, %v1541
        %v1616 = vpop.permute.xlu0 %1615
        %1619 = vset.pattern.permute.xlu0 0
        %1620 = vperm.xlu0 %1619, %v1542
        %v1621 = vpop.permute.xlu0 %1620
        %1624 = vset.pattern.permute.xlu0 0
        %1625 = vperm.xlu0 %1624, %v1543
        %v1626 = vpop.permute.xlu0 %1625
        %1629 = vset.pattern.permute.xlu0 0
        %1630 = vperm.xlu0 %1629, %v1544
        %v1631 = vpop.permute.xlu0 %1630
        %1634 = vset.pattern.permute.xlu0 0
        %1635 = vperm.xlu0 %1634, %v1545
        %v1636 = vpop.permute.xlu0 %1635
        %1639 = vset.pattern.permute.xlu0 0
        %1640 = vperm.xlu0 %1639, %v1546
        %v1641 = vpop.permute.xlu0 %1640
        %1644 = vset.pattern.permute.xlu0 0
        %1645 = vperm.xlu0 %1644, %v1547
        %v1646 = vpop.permute.xlu0 %1645
        %1649 = vset.pattern.permute.xlu0 0
        %1650 = vperm.xlu0 %1649, %v1548
        %v1651 = vpop.permute.xlu0 %1650
        %1654 = vset.pattern.permute.xlu0 0
        %1655 = vperm.xlu0 %1654, %v1549
        %v1656 = vpop.permute.xlu0 %1655
        %1659 = vset.pattern.permute.xlu0 0
        %1660 = vperm.xlu0 %1659, %v1550
        %v1661 = vpop.permute.xlu0 %1660
        %1664 = vset.pattern.permute.xlu0 0
        %1665 = vperm.xlu0 %1664, %v1551
        %v1666 = vpop.permute.xlu0 %1665
        %1669 = vset.pattern.permute.xlu0 0
        %1670 = vperm.xlu0 %1669, %v1552
        %v1671 = vpop.permute.xlu0 %1670
        %1674 = vset.pattern.permute.xlu0 0
        %1675 = vperm.xlu0 %1674, %v1553
        %v1676 = vpop.permute.xlu0 %1675
        %1679 = vset.pattern.permute.xlu0 0
        %1680 = vperm.xlu0 %1679, %v1554
        %v1681 = vpop.permute.xlu0 %1680
        %1684 = vset.pattern.permute.xlu0 0
        %1685 = vperm.xlu0 %1684, %v1555
        %v1686 = vpop.permute.xlu0 %1685
        %1689 = vset.pattern.permute.xlu0 0
        %1690 = vperm.xlu0 %1689, %v1556
        %v1691 = vpop.permute.xlu0 %1690
        %1694 = vset.pattern.permute.xlu0 0
        %1695 = vperm.xlu0 %1694, %v1557
        %v1696 = vpop.permute.xlu0 %1695
        %1699 = vset.pattern.permute.xlu0 0
        %1700 = vperm.xlu0 %1699, %v1558
        %v1701 = vpop.permute.xlu0 %1700
        %1704 = vset.pattern.permute.xlu0 0
        %1705 = vperm.xlu0 %1704, %v1559
        %v1706 = vpop.permute.xlu0 %1705
        %1709 = vset.pattern.permute.xlu0 0
        %1710 = vperm.xlu0 %1709, %v1560
        %v1711 = vpop.permute.xlu0 %1710
        %1714 = vset.pattern.permute.xlu0 0
        %1715 = vperm.xlu0 %1714, %v1561
        %v1716 = vpop.permute.xlu0 %1715
        %1719 = vset.pattern.permute.xlu0 0
        %1720 = vperm.xlu0 %1719, %v1562
        %v1721 = vpop.permute.xlu0 %1720
        %v1723 = vperm.slane %v611, 0
        %vm1724 = vcmp.gt.f32.partialorder %v1566, %v1723
        %vm1725 = vcmp.gt.f32.partialorder %v1571, %v1723
        %vm1726 = vcmp.gt.f32.partialorder %v1576, %v1723
        %vm1727 = vcmp.gt.f32.partialorder %v1581, %v1723
        %vm1728 = vcmp.gt.f32.partialorder %v1586, %v1723
        %vm1729 = vcmp.gt.f32.partialorder %v1591, %v1723
        %vm1730 = vcmp.gt.f32.partialorder %v1596, %v1723
        %vm1731 = vcmp.gt.f32.partialorder %v1601, %v1723
        %vm1732 = vcmp.gt.f32.partialorder %v1606, %v1723
        %vm1733 = vcmp.gt.f32.partialorder %v1611, %v1723
        %vm1734 = vcmp.gt.f32.partialorder %v1616, %v1723
        %vm1735 = vcmp.gt.f32.partialorder %v1621, %v1723
        %vm1736 = vcmp.gt.f32.partialorder %v1626, %v1723
        %vm1737 = vcmp.gt.f32.partialorder %v1631, %v1723
        %vm1738 = vcmp.gt.f32.partialorder %v1636, %v1723
        %vm1739 = vcmp.gt.f32.partialorder %v1641, %v1723
        %vm1740 = vcmp.gt.f32.partialorder %v1646, %v1723
        %vm1741 = vcmp.gt.f32.partialorder %v1651, %v1723
        %vm1742 = vcmp.gt.f32.partialorder %v1656, %v1723
        %vm1743 = vcmp.gt.f32.partialorder %v1661, %v1723
        %vm1744 = vcmp.gt.f32.partialorder %v1666, %v1723
        %vm1745 = vcmp.gt.f32.partialorder %v1671, %v1723
        %vm1746 = vcmp.gt.f32.partialorder %v1676, %v1723
        %vm1747 = vcmp.gt.f32.partialorder %v1681, %v1723
        %vm1748 = vcmp.gt.f32.partialorder %v1686, %v1723
        %vm1749 = vcmp.gt.f32.partialorder %v1691, %v1723
        %vm1750 = vcmp.gt.f32.partialorder %v1696, %v1723
        %vm1751 = vcmp.gt.f32.partialorder %v1701, %v1723
        %vm1752 = vcmp.gt.f32.partialorder %v1706, %v1723
        %vm1753 = vcmp.gt.f32.partialorder %v1711, %v1723
        %vm1754 = vcmp.gt.f32.partialorder %v1716, %v1723
        %vm1755 = vcmp.gt.f32.partialorder %v1721, %v1723
        %v1756 = vperm.slane %v612, 0
        %vm1757 = vcmp.lt.f32.partialorder %v1566, %v1756
        %vm1758 = vcmp.lt.f32.partialorder %v1571, %v1756
        %vm1759 = vcmp.lt.f32.partialorder %v1576, %v1756
        %vm1760 = vcmp.lt.f32.partialorder %v1581, %v1756
        %vm1761 = vcmp.lt.f32.partialorder %v1586, %v1756
        %vm1762 = vcmp.lt.f32.partialorder %v1591, %v1756
        %vm1763 = vcmp.lt.f32.partialorder %v1596, %v1756
        %vm1764 = vcmp.lt.f32.partialorder %v1601, %v1756
        %vm1765 = vcmp.lt.f32.partialorder %v1606, %v1756
        %vm1766 = vcmp.lt.f32.partialorder %v1611, %v1756
        %vm1767 = vcmp.lt.f32.partialorder %v1616, %v1756
        %vm1768 = vcmp.lt.f32.partialorder %v1621, %v1756
        %vm1769 = vcmp.lt.f32.partialorder %v1626, %v1756
        %vm1770 = vcmp.lt.f32.partialorder %v1631, %v1756
        %vm1771 = vcmp.lt.f32.partialorder %v1636, %v1756
        %vm1772 = vcmp.lt.f32.partialorder %v1641, %v1756
        %vm1773 = vcmp.lt.f32.partialorder %v1646, %v1756
        %vm1774 = vcmp.lt.f32.partialorder %v1651, %v1756
        %vm1775 = vcmp.lt.f32.partialorder %v1656, %v1756
        %vm1776 = vcmp.lt.f32.partialorder %v1661, %v1756
        %vm1777 = vcmp.lt.f32.partialorder %v1666, %v1756
        %vm1778 = vcmp.lt.f32.partialorder %v1671, %v1756
        %vm1779 = vcmp.lt.f32.partialorder %v1676, %v1756
        %vm1780 = vcmp.lt.f32.partialorder %v1681, %v1756
        %vm1781 = vcmp.lt.f32.partialorder %v1686, %v1756
        %vm1782 = vcmp.lt.f32.partialorder %v1691, %v1756
        %vm1783 = vcmp.lt.f32.partialorder %v1696, %v1756
        %vm1784 = vcmp.lt.f32.partialorder %v1701, %v1756
        %vm1785 = vcmp.lt.f32.partialorder %v1706, %v1756
        %vm1786 = vcmp.lt.f32.partialorder %v1711, %v1756
        %vm1787 = vcmp.lt.f32.partialorder %v1716, %v1756
        %vm1788 = vcmp.lt.f32.partialorder %v1721, %v1756
        %vm1789 = vmand %vm1724, %vm1757
        %vm1790 = vmand %vm1725, %vm1758
        %vm1791 = vmand %vm1726, %vm1759
        %vm1792 = vmand %vm1727, %vm1760
        %vm1793 = vmand %vm1728, %vm1761
        %vm1794 = vmand %vm1729, %vm1762
        %vm1795 = vmand %vm1730, %vm1763
        %vm1796 = vmand %vm1731, %vm1764
        %vm1797 = vmand %vm1732, %vm1765
        %vm1798 = vmand %vm1733, %vm1766
        %vm1799 = vmand %vm1734, %vm1767
        %vm1800 = vmand %vm1735, %vm1768
        %vm1801 = vmand %vm1736, %vm1769
        %vm1802 = vmand %vm1737, %vm1770
        %vm1803 = vmand %vm1738, %vm1771
        %vm1804 = vmand %vm1739, %vm1772
        %vm1805 = vmand %vm1740, %vm1773
        %vm1806 = vmand %vm1741, %vm1774
        %vm1807 = vmand %vm1742, %vm1775
        %vm1808 = vmand %vm1743, %vm1776
        %vm1809 = vmand %vm1744, %vm1777
        %vm1810 = vmand %vm1745, %vm1778
        %vm1811 = vmand %vm1746, %vm1779
        %vm1812 = vmand %vm1747, %vm1780
        %vm1813 = vmand %vm1748, %vm1781
        %vm1814 = vmand %vm1749, %vm1782
        %vm1815 = vmand %vm1750, %vm1783
        %vm1816 = vmand %vm1751, %vm1784
        %vm1817 = vmand %vm1752, %vm1785
        %vm1818 = vmand %vm1753, %vm1786
        %vm1819 = vmand %vm1754, %vm1787
        %vm1820 = vmand %vm1755, %vm1788
        %v1821 = vsel %vm1789, 1.0, 0.0
        %v1822 = vsel %vm1790, 1.0, 0.0
        %v1823 = vsel %vm1791, 1.0, 0.0
        %v1824 = vsel %vm1792, 1.0, 0.0
        %v1825 = vsel %vm1793, 1.0, 0.0
        %v1826 = vsel %vm1794, 1.0, 0.0
        %v1827 = vsel %vm1795, 1.0, 0.0
        %v1828 = vsel %vm1796, 1.0, 0.0
        %v1829 = vsel %vm1797, 1.0, 0.0
        %v1830 = vsel %vm1798, 1.0, 0.0
        %v1831 = vsel %vm1799, 1.0, 0.0
        %v1832 = vsel %vm1800, 1.0, 0.0
        %v1833 = vsel %vm1801, 1.0, 0.0
        %v1834 = vsel %vm1802, 1.0, 0.0
        %v1835 = vsel %vm1803, 1.0, 0.0
        %v1836 = vsel %vm1804, 1.0, 0.0
        %v1837 = vsel %vm1805, 1.0, 0.0
        %v1838 = vsel %vm1806, 1.0, 0.0
        %v1839 = vsel %vm1807, 1.0, 0.0
        %v1840 = vsel %vm1808, 1.0, 0.0
        %v1841 = vsel %vm1809, 1.0, 0.0
        %v1842 = vsel %vm1810, 1.0, 0.0
        %v1843 = vsel %vm1811, 1.0, 0.0
        %v1844 = vsel %vm1812, 1.0, 0.0
        %v1845 = vsel %vm1813, 1.0, 0.0
        %v1846 = vsel %vm1814, 1.0, 0.0
        %v1847 = vsel %vm1815, 1.0, 0.0
        %v1848 = vsel %vm1816, 1.0, 0.0
        %v1849 = vsel %vm1817, 1.0, 0.0
        %v1850 = vsel %vm1818, 1.0, 0.0
        %v1851 = vsel %vm1819, 1.0, 0.0
        %v1852 = vsel %vm1820, 1.0, 0.0
        %v1853 = vpack.c.bf16 %v1821, %v1821
        %v1854 = vpack.c.bf16 %v1822, %v1822
        %v1855 = vpack.c.bf16 %v1823, %v1823
        %v1856 = vpack.c.bf16 %v1824, %v1824
        %v1857 = vpack.c.bf16 %v1825, %v1825
        %v1858 = vpack.c.bf16 %v1826, %v1826
        %v1859 = vpack.c.bf16 %v1827, %v1827
        %v1860 = vpack.c.bf16 %v1828, %v1828
        %v1861 = vpack.c.bf16 %v1829, %v1829
        %v1862 = vpack.c.bf16 %v1830, %v1830
        %v1863 = vpack.c.bf16 %v1831, %v1831
        %v1864 = vpack.c.bf16 %v1832, %v1832
        %v1865 = vpack.c.bf16 %v1833, %v1833
        %v1866 = vpack.c.bf16 %v1834, %v1834
        %v1867 = vpack.c.bf16 %v1835, %v1835
        %v1868 = vpack.c.bf16 %v1836, %v1836
        %v1869 = vpack.c.bf16 %v1837, %v1837
        %v1870 = vpack.c.bf16 %v1838, %v1838
        %v1871 = vpack.c.bf16 %v1839, %v1839
        %v1872 = vpack.c.bf16 %v1840, %v1840
        %v1873 = vpack.c.bf16 %v1841, %v1841
        %v1874 = vpack.c.bf16 %v1842, %v1842
        %v1875 = vpack.c.bf16 %v1843, %v1843
        %v1876 = vpack.c.bf16 %v1844, %v1844
        %v1877 = vpack.c.bf16 %v1845, %v1845
        %v1878 = vpack.c.bf16 %v1846, %v1846
        %v1879 = vpack.c.bf16 %v1847, %v1847
        %v1880 = vpack.c.bf16 %v1848, %v1848
        %v1881 = vpack.c.bf16 %v1849, %v1849
        %v1882 = vpack.c.bf16 %v1850, %v1850
        %v1883 = vpack.c.bf16 %v1851, %v1851
        %v1884 = vpack.c.bf16 %v1852, %v1852
        %v1885 = vld [vmem:[%s6] sm:$0xf]
        %v1886 = vld [vmem:[%s6 + $0x4] sm:$0xf]
        %v1887 = vld [vmem:[%s6 + $0x8] sm:$0xf]
        %v1888 = vld [vmem:[%s6 + $0xc] sm:$0xf]
        %v1921 = vunpack.c.l.b16 %v1127
        %v1922 = vunpack.c.l.b16 %v1128
        %v1923 = vunpack.c.l.b16 %v1129
        %v1924 = vunpack.c.l.b16 %v1130
        %v1925 = vunpack.c.l.b16 %v1131
        %v1926 = vunpack.c.l.b16 %v1132
        %v1927 = vunpack.c.l.b16 %v1133
        %v1928 = vunpack.c.l.b16 %v1134
        %v1929 = vunpack.c.l.b16 %v1135
        %v1930 = vunpack.c.l.b16 %v1136
        %v1931 = vunpack.c.l.b16 %v1137
        %v1932 = vunpack.c.l.b16 %v1138
        %v1933 = vunpack.c.l.b16 %v1139
        %v1934 = vunpack.c.l.b16 %v1140
        %v1935 = vunpack.c.l.b16 %v1141
        %v1936 = vunpack.c.l.b16 %v1142
        %v1937 = vunpack.c.l.b16 %v1143
        %v1938 = vunpack.c.l.b16 %v1144
        %v1939 = vunpack.c.l.b16 %v1145
        %v1940 = vunpack.c.l.b16 %v1146
        %v1941 = vunpack.c.l.b16 %v1147
        %v1942 = vunpack.c.l.b16 %v1148
        %v1943 = vunpack.c.l.b16 %v1149
        %v1944 = vunpack.c.l.b16 %v1150
        %v1945 = vunpack.c.l.b16 %v1151
        %v1946 = vunpack.c.l.b16 %v1152
        %v1947 = vunpack.c.l.b16 %v1153
        %v1948 = vunpack.c.l.b16 %v1154
        %v1949 = vunpack.c.l.b16 %v1155
        %v1950 = vunpack.c.l.b16 %v1156
        %v1951 = vunpack.c.l.b16 %v1157
        %v1952 = vunpack.c.l.b16 %v1158
        %v1953 = vpack.c.b16 %v1922, %v1921
        %v1954 = vpack.c.b16 %v1924, %v1923
        %v1955 = vpack.c.b16 %v1926, %v1925
        %v1956 = vpack.c.b16 %v1928, %v1927
        %v1957 = vpack.c.b16 %v1930, %v1929
        %v1958 = vpack.c.b16 %v1932, %v1931
        %v1959 = vpack.c.b16 %v1934, %v1933
        %v1960 = vpack.c.b16 %v1936, %v1935
        %v1961 = vpack.c.b16 %v1938, %v1937
        %v1962 = vpack.c.b16 %v1940, %v1939
        %v1963 = vpack.c.b16 %v1942, %v1941
        %v1964 = vpack.c.b16 %v1944, %v1943
        %v1965 = vpack.c.b16 %v1946, %v1945
        %v1966 = vpack.c.b16 %v1948, %v1947
        %v1967 = vpack.c.b16 %v1950, %v1949
        %v1968 = vpack.c.b16 %v1952, %v1951
        %1969 = vrot.lane.b32.xlu0 %v1953, 112
        %v1970 = vpop.permute.xlu0 %1969
        %1971 = vrot.lane.b32.xlu0 %v1954, 112
        %v1972 = vpop.permute.xlu0 %1971
        %1973 = vrot.lane.b32.xlu0 %v1955, 112
        %v1974 = vpop.permute.xlu0 %1973
        %1975 = vrot.lane.b32.xlu0 %v1956, 112
        %v1976 = vpop.permute.xlu0 %1975
        %1977 = vrot.lane.b32.xlu0 %v1957, 112
        %v1978 = vpop.permute.xlu0 %1977
        %1979 = vrot.lane.b32.xlu0 %v1958, 112
        %v1980 = vpop.permute.xlu0 %1979
        %1981 = vrot.lane.b32.xlu0 %v1959, 112
        %v1982 = vpop.permute.xlu0 %1981
        %1983 = vrot.lane.b32.xlu0 %v1960, 112
        %v1984 = vpop.permute.xlu0 %1983
        %1985 = vrot.lane.b32.xlu0 %v1961, 112
        %v1986 = vpop.permute.xlu0 %1985
        %1987 = vrot.lane.b32.xlu0 %v1962, 112
        %v1988 = vpop.permute.xlu0 %1987
        %1989 = vrot.lane.b32.xlu0 %v1963, 112
        %v1990 = vpop.permute.xlu0 %1989
        %1991 = vrot.lane.b32.xlu0 %v1964, 112
        %v1992 = vpop.permute.xlu0 %1991
        %1993 = vrot.lane.b32.xlu0 %v1965, 112
        %v1994 = vpop.permute.xlu0 %1993
        %1995 = vrot.lane.b32.xlu0 %v1966, 112
        %v1996 = vpop.permute.xlu0 %1995
        %1997 = vrot.lane.b32.xlu0 %v1967, 112
        %v1998 = vpop.permute.xlu0 %1997
        %1999 = vrot.lane.b32.xlu0 %v1968, 112
        %v2000 = vpop.permute.xlu0 %1999
        %v2003 = vunpack.c.l.b16 %v1887
        %v2004 = vunpack.c.l.b16 %v1888
        %v2005 = vpack.c.b16 %v2004, %v2003
        %vm2007 = vcmask 130048
        %v2009 = vsel %vm2007, %v1970, 0
        %v2012 = vsel %vm2007, %v1972, 0
        %v2015 = vsel %vm2007, %v1974, 0
        %v2018 = vsel %vm2007, %v1976, 0
        %v2021 = vsel %vm2007, %v1978, 0
        %v2024 = vsel %vm2007, %v1980, 0
        %v2027 = vsel %vm2007, %v1982, 0
        %v2030 = vsel %vm2007, %v1984, 0
        %v2033 = vsel %vm2007, %v1986, 0
        %v2036 = vsel %vm2007, %v1988, 0
        %v2039 = vsel %vm2007, %v1990, 0
        %v2042 = vsel %vm2007, %v1992, 0
        %v2045 = vsel %vm2007, %v1994, 0
        %v2048 = vsel %vm2007, %v1996, 0
        %v2051 = vsel %vm2007, %v1998, 0
        %v2054 = vsel %vm2007, %v2000, 0
        %2056 = vmatpush.bf16.msra.mxu0 0
        %2057 = vmatpush.bf16.msra.mxu0 0
        %2058 = vmatpush.bf16.msra.mxu0 0
        %2059 = vmatpush.bf16.msra.mxu0 0
        %2060 = vmatpush.bf16.msra.mxu0 0
        %2061 = vmatpush.bf16.msra.mxu0 0
        %2062 = vmatpush.bf16.msra.mxu0 0
        %2063 = vmatpush.bf16.msra.mxu0 %v2005
        %2064 = vmatmul.bf16.gmra.mxu0 %v2009
        %v2065 = vpop.f32.mrf.mxu0
        %v2066 = vadd.f32 0.0, %v2065
        %v2067 = vpop.f32.mrf.mxu0
        %v2068 = vadd.f32 0.0, %v2067
        %2069 = vmatmul.bf16.gmra.mxu0 %v2012
        %v2070 = vpop.f32.mrf.mxu0
        %v2071 = vadd.f32 0.0, %v2070
        %v2072 = vpop.f32.mrf.mxu0
        %v2073 = vadd.f32 0.0, %v2072
        %2074 = vmatmul.bf16.gmra.mxu0 %v2015
        %v2075 = vpop.f32.mrf.mxu0
        %v2076 = vadd.f32 0.0, %v2075
        %v2077 = vpop.f32.mrf.mxu0
        %v2078 = vadd.f32 0.0, %v2077
        %2079 = vmatmul.bf16.gmra.mxu0 %v2018
        %v2080 = vpop.f32.mrf.mxu0
        %v2081 = vadd.f32 0.0, %v2080
        %v2082 = vpop.f32.mrf.mxu0
        %v2083 = vadd.f32 0.0, %v2082
        %2084 = vmatmul.bf16.gmra.mxu0 %v2021
        %v2085 = vpop.f32.mrf.mxu0
        %v2086 = vadd.f32 0.0, %v2085
        %v2087 = vpop.f32.mrf.mxu0
        %v2088 = vadd.f32 0.0, %v2087
        %2089 = vmatmul.bf16.gmra.mxu0 %v2024
        %v2090 = vpop.f32.mrf.mxu0
        %v2091 = vadd.f32 0.0, %v2090
        %v2092 = vpop.f32.mrf.mxu0
        %v2093 = vadd.f32 0.0, %v2092
        %2094 = vmatmul.bf16.gmra.mxu0 %v2027
        %v2095 = vpop.f32.mrf.mxu0
        %v2096 = vadd.f32 0.0, %v2095
        %v2097 = vpop.f32.mrf.mxu0
        %v2098 = vadd.f32 0.0, %v2097
        %2099 = vmatmul.bf16.gmra.mxu0 %v2030
        %v2100 = vpop.f32.mrf.mxu0
        %v2101 = vadd.f32 0.0, %v2100
        %v2102 = vpop.f32.mrf.mxu0
        %v2103 = vadd.f32 0.0, %v2102
        %2104 = vmatmul.bf16.gmra.mxu0 %v2033
        %v2105 = vpop.f32.mrf.mxu0
        %v2106 = vadd.f32 0.0, %v2105
        %v2107 = vpop.f32.mrf.mxu0
        %v2108 = vadd.f32 0.0, %v2107
        %2109 = vmatmul.bf16.gmra.mxu0 %v2036
        %v2110 = vpop.f32.mrf.mxu0
        %v2111 = vadd.f32 0.0, %v2110
        %v2112 = vpop.f32.mrf.mxu0
        %v2113 = vadd.f32 0.0, %v2112
        %2114 = vmatmul.bf16.gmra.mxu0 %v2039
        %v2115 = vpop.f32.mrf.mxu0
        %v2116 = vadd.f32 0.0, %v2115
        %v2117 = vpop.f32.mrf.mxu0
        %v2118 = vadd.f32 0.0, %v2117
        %2119 = vmatmul.bf16.gmra.mxu0 %v2042
        %v2120 = vpop.f32.mrf.mxu0
        %v2121 = vadd.f32 0.0, %v2120
        %v2122 = vpop.f32.mrf.mxu0
        %v2123 = vadd.f32 0.0, %v2122
        %2124 = vmatmul.bf16.gmra.mxu0 %v2045
        %v2125 = vpop.f32.mrf.mxu0
        %v2126 = vadd.f32 0.0, %v2125
        %v2127 = vpop.f32.mrf.mxu0
        %v2128 = vadd.f32 0.0, %v2127
        %2129 = vmatmul.bf16.gmra.mxu0 %v2048
        %v2130 = vpop.f32.mrf.mxu0
        %v2131 = vadd.f32 0.0, %v2130
        %v2132 = vpop.f32.mrf.mxu0
        %v2133 = vadd.f32 0.0, %v2132
        %2134 = vmatmul.bf16.gmra.mxu0 %v2051
        %v2135 = vpop.f32.mrf.mxu0
        %v2136 = vadd.f32 0.0, %v2135
        %v2137 = vpop.f32.mrf.mxu0
        %v2138 = vadd.f32 0.0, %v2137
        %2139 = vmatmul.bf16.gmra.mxu0 %v2054
        %v2140 = vpop.f32.mrf.mxu0
        %v2141 = vadd.f32 0.0, %v2140
        %v2142 = vpop.f32.mrf.mxu0
        %v2143 = vadd.f32 0.0, %v2142
        %2144 = vdwg.mxu0
        %v2177 = vunpack.c.l.b16 %v903
        %v2178 = vunpack.c.l.b16 %v904
        %v2179 = vunpack.c.l.b16 %v905
        %v2180 = vunpack.c.l.b16 %v906
        %v2181 = vunpack.c.l.b16 %v907
        %v2182 = vunpack.c.l.b16 %v908
        %v2183 = vunpack.c.l.b16 %v909
        %v2184 = vunpack.c.l.b16 %v910
        %v2185 = vunpack.c.l.b16 %v911
        %v2186 = vunpack.c.l.b16 %v912
        %v2187 = vunpack.c.l.b16 %v913
        %v2188 = vunpack.c.l.b16 %v914
        %v2189 = vunpack.c.l.b16 %v915
        %v2190 = vunpack.c.l.b16 %v916
        %v2191 = vunpack.c.l.b16 %v917
        %v2192 = vunpack.c.l.b16 %v918
        %v2193 = vunpack.c.l.b16 %v919
        %v2194 = vunpack.c.l.b16 %v920
        %v2195 = vunpack.c.l.b16 %v921
        %v2196 = vunpack.c.l.b16 %v922
        %v2197 = vunpack.c.l.b16 %v923
        %v2198 = vunpack.c.l.b16 %v924
        %v2199 = vunpack.c.l.b16 %v925
        %v2200 = vunpack.c.l.b16 %v926
        %v2201 = vunpack.c.l.b16 %v927
        %v2202 = vunpack.c.l.b16 %v928
        %v2203 = vunpack.c.l.b16 %v929
        %v2204 = vunpack.c.l.b16 %v930
        %v2205 = vunpack.c.l.b16 %v931
        %v2206 = vunpack.c.l.b16 %v932
        %v2207 = vunpack.c.l.b16 %v933
        %v2208 = vunpack.c.l.b16 %v934
        %v2209 = vpack.c.b16 %v2178, %v2177
        %v2210 = vpack.c.b16 %v2180, %v2179
        %v2211 = vpack.c.b16 %v2182, %v2181
        %v2212 = vpack.c.b16 %v2184, %v2183
        %v2213 = vpack.c.b16 %v2186, %v2185
        %v2214 = vpack.c.b16 %v2188, %v2187
        %v2215 = vpack.c.b16 %v2190, %v2189
        %v2216 = vpack.c.b16 %v2192, %v2191
        %v2217 = vpack.c.b16 %v2194, %v2193
        %v2218 = vpack.c.b16 %v2196, %v2195
        %v2219 = vpack.c.b16 %v2198, %v2197
        %v2220 = vpack.c.b16 %v2200, %v2199
        %v2221 = vpack.c.b16 %v2202, %v2201
        %v2222 = vpack.c.b16 %v2204, %v2203
        %v2223 = vpack.c.b16 %v2206, %v2205
        %v2224 = vpack.c.b16 %v2208, %v2207
        %v2227 = vunpack.c.l.b16 %v1885
        %v2228 = vunpack.c.l.b16 %v1886
        %v2229 = vpack.c.b16 %v2228, %v2227
        %v2232 = vsel %vm2007, %v2209, 0
        %v2235 = vsel %vm2007, %v2210, 0
        %v2238 = vsel %vm2007, %v2211, 0
        %v2241 = vsel %vm2007, %v2212, 0
        %v2244 = vsel %vm2007, %v2213, 0
        %v2247 = vsel %vm2007, %v2214, 0
        %v2250 = vsel %vm2007, %v2215, 0
        %v2253 = vsel %vm2007, %v2216, 0
        %v2256 = vsel %vm2007, %v2217, 0
        %v2259 = vsel %vm2007, %v2218, 0
        %v2262 = vsel %vm2007, %v2219, 0
        %v2265 = vsel %vm2007, %v2220, 0
        %v2268 = vsel %vm2007, %v2221, 0
        %v2271 = vsel %vm2007, %v2222, 0
        %v2274 = vsel %vm2007, %v2223, 0
        %v2277 = vsel %vm2007, %v2224, 0
        %2279 = vmatpush.bf16.msra.mxu0 0
        %2280 = vmatpush.bf16.msra.mxu0 0
        %2281 = vmatpush.bf16.msra.mxu0 0
        %2282 = vmatpush.bf16.msra.mxu0 0
        %2283 = vmatpush.bf16.msra.mxu0 0
        %2284 = vmatpush.bf16.msra.mxu0 0
        %2285 = vmatpush.bf16.msra.mxu0 0
        %2286 = vmatpush.bf16.msra.mxu0 %v2229
        %2287 = vmatmul.bf16.gmra.mxu0 %v2232
        %v2288 = vpop.f32.mrf.mxu0
        %v2289 = vadd.f32 %v2066, %v2288
        %v2290 = vpop.f32.mrf.mxu0
        %v2291 = vadd.f32 %v2068, %v2290
        %2292 = vmatmul.bf16.gmra.mxu0 %v2235
        %v2293 = vpop.f32.mrf.mxu0
        %v2294 = vadd.f32 %v2071, %v2293
        %v2295 = vpop.f32.mrf.mxu0
        %v2296 = vadd.f32 %v2073, %v2295
        %2297 = vmatmul.bf16.gmra.mxu0 %v2238
        %v2298 = vpop.f32.mrf.mxu0
        %v2299 = vadd.f32 %v2076, %v2298
        %v2300 = vpop.f32.mrf.mxu0
        %v2301 = vadd.f32 %v2078, %v2300
        %2302 = vmatmul.bf16.gmra.mxu0 %v2241
        %v2303 = vpop.f32.mrf.mxu0
        %v2304 = vadd.f32 %v2081, %v2303
        %v2305 = vpop.f32.mrf.mxu0
        %v2306 = vadd.f32 %v2083, %v2305
        %2307 = vmatmul.bf16.gmra.mxu0 %v2244
        %v2308 = vpop.f32.mrf.mxu0
        %v2309 = vadd.f32 %v2086, %v2308
        %v2310 = vpop.f32.mrf.mxu0
        %v2311 = vadd.f32 %v2088, %v2310
        %2312 = vmatmul.bf16.gmra.mxu0 %v2247
        %v2313 = vpop.f32.mrf.mxu0
        %v2314 = vadd.f32 %v2091, %v2313
        %v2315 = vpop.f32.mrf.mxu0
        %v2316 = vadd.f32 %v2093, %v2315
        %2317 = vmatmul.bf16.gmra.mxu0 %v2250
        %v2318 = vpop.f32.mrf.mxu0
        %v2319 = vadd.f32 %v2096, %v2318
        %v2320 = vpop.f32.mrf.mxu0
        %v2321 = vadd.f32 %v2098, %v2320
        %2322 = vmatmul.bf16.gmra.mxu0 %v2253
        %v2323 = vpop.f32.mrf.mxu0
        %v2324 = vadd.f32 %v2101, %v2323
        %v2325 = vpop.f32.mrf.mxu0
        %v2326 = vadd.f32 %v2103, %v2325
        %2327 = vmatmul.bf16.gmra.mxu0 %v2256
        %v2328 = vpop.f32.mrf.mxu0
        %v2329 = vadd.f32 %v2106, %v2328
        %v2330 = vpop.f32.mrf.mxu0
        %v2331 = vadd.f32 %v2108, %v2330
        %2332 = vmatmul.bf16.gmra.mxu0 %v2259
        %v2333 = vpop.f32.mrf.mxu0
        %v2334 = vadd.f32 %v2111, %v2333
        %v2335 = vpop.f32.mrf.mxu0
        %v2336 = vadd.f32 %v2113, %v2335
        %2337 = vmatmul.bf16.gmra.mxu0 %v2262
        %v2338 = vpop.f32.mrf.mxu0
        %v2339 = vadd.f32 %v2116, %v2338
        %v2340 = vpop.f32.mrf.mxu0
        %v2341 = vadd.f32 %v2118, %v2340
        %2342 = vmatmul.bf16.gmra.mxu0 %v2265
        %v2343 = vpop.f32.mrf.mxu0
        %v2344 = vadd.f32 %v2121, %v2343
        %v2345 = vpop.f32.mrf.mxu0
        %v2346 = vadd.f32 %v2123, %v2345
        %2347 = vmatmul.bf16.gmra.mxu0 %v2268
        %v2348 = vpop.f32.mrf.mxu0
        %v2349 = vadd.f32 %v2126, %v2348
        %v2350 = vpop.f32.mrf.mxu0
        %v2351 = vadd.f32 %v2128, %v2350
        %2352 = vmatmul.bf16.gmra.mxu0 %v2271
        %v2353 = vpop.f32.mrf.mxu0
        %v2354 = vadd.f32 %v2131, %v2353
        %v2355 = vpop.f32.mrf.mxu0
        %v2356 = vadd.f32 %v2133, %v2355
        %2357 = vmatmul.bf16.gmra.mxu0 %v2274
        %v2358 = vpop.f32.mrf.mxu0
        %v2359 = vadd.f32 %v2136, %v2358
        %v2360 = vpop.f32.mrf.mxu0
        %v2361 = vadd.f32 %v2138, %v2360
        %2362 = vmatmul.bf16.gmra.mxu0 %v2277
        %v2363 = vpop.f32.mrf.mxu0
        %v2364 = vadd.f32 %v2141, %v2363
        %v2365 = vpop.f32.mrf.mxu0
        %v2366 = vadd.f32 %v2143, %v2365
        %2367 = vdwg.mxu0
        %v2368 = vld [vmem:[%s7] sm:$0xf]
        %v2369 = vld [vmem:[%s7 + $0x4] sm:$0xf]
        %v2370 = vld [vmem:[%s7 + $0x8] sm:$0x7]
        %v2403 = vunpack.c.l.b16 %v1853
        %v2404 = vunpack.c.l.b16 %v1854
        %v2405 = vunpack.c.l.b16 %v1855
        %v2406 = vunpack.c.l.b16 %v1856
        %v2407 = vunpack.c.l.b16 %v1857
        %v2408 = vunpack.c.l.b16 %v1858
        %v2409 = vunpack.c.l.b16 %v1859
        %v2410 = vunpack.c.l.b16 %v1860
        %v2411 = vunpack.c.l.b16 %v1861
        %v2412 = vunpack.c.l.b16 %v1862
        %v2413 = vunpack.c.l.b16 %v1863
        %v2414 = vunpack.c.l.b16 %v1864
        %v2415 = vunpack.c.l.b16 %v1865
        %v2416 = vunpack.c.l.b16 %v1866
        %v2417 = vunpack.c.l.b16 %v1867
        %v2418 = vunpack.c.l.b16 %v1868
        %v2419 = vunpack.c.l.b16 %v1869
        %v2420 = vunpack.c.l.b16 %v1870
        %v2421 = vunpack.c.l.b16 %v1871
        %v2422 = vunpack.c.l.b16 %v1872
        %v2423 = vunpack.c.l.b16 %v1873
        %v2424 = vunpack.c.l.b16 %v1874
        %v2425 = vunpack.c.l.b16 %v1875
        %v2426 = vunpack.c.l.b16 %v1876
        %v2427 = vunpack.c.l.b16 %v1877
        %v2428 = vunpack.c.l.b16 %v1878
        %v2429 = vunpack.c.l.b16 %v1879
        %v2430 = vunpack.c.l.b16 %v1880
        %v2431 = vunpack.c.l.b16 %v1881
        %v2432 = vunpack.c.l.b16 %v1882
        %v2433 = vunpack.c.l.b16 %v1883
        %v2434 = vunpack.c.l.b16 %v1884
        %v2435 = vpack.c.b16 %v2404, %v2403
        %v2436 = vpack.c.b16 %v2406, %v2405
        %v2437 = vpack.c.b16 %v2408, %v2407
        %v2438 = vpack.c.b16 %v2410, %v2409
        %v2439 = vpack.c.b16 %v2412, %v2411
        %v2440 = vpack.c.b16 %v2414, %v2413
        %v2441 = vpack.c.b16 %v2416, %v2415
        %v2442 = vpack.c.b16 %v2418, %v2417
        %v2443 = vpack.c.b16 %v2420, %v2419
        %v2444 = vpack.c.b16 %v2422, %v2421
        %v2445 = vpack.c.b16 %v2424, %v2423
        %v2446 = vpack.c.b16 %v2426, %v2425
        %v2447 = vpack.c.b16 %v2428, %v2427
        %v2448 = vpack.c.b16 %v2430, %v2429
        %v2449 = vpack.c.b16 %v2432, %v2431
        %v2450 = vpack.c.b16 %v2434, %v2433
        %v2454 = vunpack.c.l.b16 %v2368
        %v2455 = vunpack.c.l.b16 %v2369
        %v2456 = vunpack.c.l.b16 %v2370
        %v2457 = vpack.c.b16 %v2455, %v2454
        %v2458 = vpack.c.b16 %v2456, %v2456
        %vm2460 = vcmask 179200
        %v2462 = vsel %vm2460, %v2435, 0
        %v2465 = vsel %vm2460, %v2436, 0
        %v2468 = vsel %vm2460, %v2437, 0
        %v2471 = vsel %vm2460, %v2438, 0
        %v2474 = vsel %vm2460, %v2439, 0
        %v2477 = vsel %vm2460, %v2440, 0
        %v2480 = vsel %vm2460, %v2441, 0
        %v2483 = vsel %vm2460, %v2442, 0
        %v2486 = vsel %vm2460, %v2443, 0
        %v2489 = vsel %vm2460, %v2444, 0
        %v2492 = vsel %vm2460, %v2445, 0
        %v2495 = vsel %vm2460, %v2446, 0
        %v2498 = vsel %vm2460, %v2447, 0
        %v2501 = vsel %vm2460, %v2448, 0
        %v2504 = vsel %vm2460, %v2449, 0
        %v2507 = vsel %vm2460, %v2450, 0
        %vm2509 = vcmask 1042432
        %v2511 = vsel %vm2509, %v2458, 0
        %2513 = vmatpush.bf16.msra.mxu0 0
        %2514 = vmatpush.bf16.msra.mxu0 0
        %2515 = vmatpush.bf16.msra.mxu0 0
        %2516 = vmatpush.bf16.msra.mxu0 0
        %2517 = vmatpush.bf16.msra.mxu0 0
        %2518 = vmatpush.bf16.msra.mxu0 0
        %2519 = vmatpush.bf16.msra.mxu0 %v2511
        %2520 = vmatpush.bf16.msra.mxu0 %v2457
        %2521 = vmatmul.bf16.gmra.mxu0 %v2462
        %v2522 = vpop.f32.mrf.mxu0
        %v2523 = vadd.f32 0.0, %v2522
        %v2524 = vpop.f32.mrf.mxu0
        %v2525 = vadd.f32 0.0, %v2524
        %2526 = vmatmul.bf16.gmra.mxu0 %v2465
        %v2527 = vpop.f32.mrf.mxu0
        %v2528 = vadd.f32 0.0, %v2527
        %v2529 = vpop.f32.mrf.mxu0
        %v2530 = vadd.f32 0.0, %v2529
        %2531 = vmatmul.bf16.gmra.mxu0 %v2468
        %v2532 = vpop.f32.mrf.mxu0
        %v2533 = vadd.f32 0.0, %v2532
        %v2534 = vpop.f32.mrf.mxu0
        %v2535 = vadd.f32 0.0, %v2534
        %2536 = vmatmul.bf16.gmra.mxu0 %v2471
        %v2537 = vpop.f32.mrf.mxu0
        %v2538 = vadd.f32 0.0, %v2537
        %v2539 = vpop.f32.mrf.mxu0
        %v2540 = vadd.f32 0.0, %v2539
        %2541 = vmatmul.bf16.gmra.mxu0 %v2474
        %v2542 = vpop.f32.mrf.mxu0
        %v2543 = vadd.f32 0.0, %v2542
        %v2544 = vpop.f32.mrf.mxu0
        %v2545 = vadd.f32 0.0, %v2544
        %2546 = vmatmul.bf16.gmra.mxu0 %v2477
        %v2547 = vpop.f32.mrf.mxu0
        %v2548 = vadd.f32 0.0, %v2547
        %v2549 = vpop.f32.mrf.mxu0
        %v2550 = vadd.f32 0.0, %v2549
        %2551 = vmatmul.bf16.gmra.mxu0 %v2480
        %v2552 = vpop.f32.mrf.mxu0
        %v2553 = vadd.f32 0.0, %v2552
        %v2554 = vpop.f32.mrf.mxu0
        %v2555 = vadd.f32 0.0, %v2554
        %2556 = vmatmul.bf16.gmra.mxu0 %v2483
        %v2557 = vpop.f32.mrf.mxu0
        %v2558 = vadd.f32 0.0, %v2557
        %v2559 = vpop.f32.mrf.mxu0
        %v2560 = vadd.f32 0.0, %v2559
        %2561 = vmatmul.bf16.gmra.mxu0 %v2486
        %v2562 = vpop.f32.mrf.mxu0
        %v2563 = vadd.f32 0.0, %v2562
        %v2564 = vpop.f32.mrf.mxu0
        %v2565 = vadd.f32 0.0, %v2564
        %2566 = vmatmul.bf16.gmra.mxu0 %v2489
        %v2567 = vpop.f32.mrf.mxu0
        %v2568 = vadd.f32 0.0, %v2567
        %v2569 = vpop.f32.mrf.mxu0
        %v2570 = vadd.f32 0.0, %v2569
        %2571 = vmatmul.bf16.gmra.mxu0 %v2492
        %v2572 = vpop.f32.mrf.mxu0
        %v2573 = vadd.f32 0.0, %v2572
        %v2574 = vpop.f32.mrf.mxu0
        %v2575 = vadd.f32 0.0, %v2574
        %2576 = vmatmul.bf16.gmra.mxu0 %v2495
        %v2577 = vpop.f32.mrf.mxu0
        %v2578 = vadd.f32 0.0, %v2577
        %v2579 = vpop.f32.mrf.mxu0
        %v2580 = vadd.f32 0.0, %v2579
        %2581 = vmatmul.bf16.gmra.mxu0 %v2498
        %v2582 = vpop.f32.mrf.mxu0
        %v2583 = vadd.f32 0.0, %v2582
        %v2584 = vpop.f32.mrf.mxu0
        %v2585 = vadd.f32 0.0, %v2584
        %2586 = vmatmul.bf16.gmra.mxu0 %v2501
        %v2587 = vpop.f32.mrf.mxu0
        %v2588 = vadd.f32 0.0, %v2587
        %v2589 = vpop.f32.mrf.mxu0
        %v2590 = vadd.f32 0.0, %v2589
        %2591 = vmatmul.bf16.gmra.mxu0 %v2504
        %v2592 = vpop.f32.mrf.mxu0
        %v2593 = vadd.f32 0.0, %v2592
        %v2594 = vpop.f32.mrf.mxu0
        %v2595 = vadd.f32 0.0, %v2594
        %2596 = vmatmul.bf16.gmra.mxu0 %v2507
        %v2597 = vpop.f32.mrf.mxu0
        %v2598 = vadd.f32 0.0, %v2597
        %v2599 = vpop.f32.mrf.mxu0
        %v2600 = vadd.f32 0.0, %v2599
        %2601 = vdwg.mxu0
        %v2602 = vadd.f32 %v2289, %v2523
        %v2603 = vadd.f32 %v2291, %v2525
        %v2604 = vadd.f32 %v2294, %v2528
        %v2605 = vadd.f32 %v2296, %v2530
        %v2606 = vadd.f32 %v2299, %v2533
        %v2607 = vadd.f32 %v2301, %v2535
        %v2608 = vadd.f32 %v2304, %v2538
        %v2609 = vadd.f32 %v2306, %v2540
        %v2610 = vadd.f32 %v2309, %v2543
        %v2611 = vadd.f32 %v2311, %v2545
        %v2612 = vadd.f32 %v2314, %v2548
        %v2613 = vadd.f32 %v2316, %v2550
        %v2614 = vadd.f32 %v2319, %v2553
        %v2615 = vadd.f32 %v2321, %v2555
        %v2616 = vadd.f32 %v2324, %v2558
        %v2617 = vadd.f32 %v2326, %v2560
        %v2618 = vadd.f32 %v2329, %v2563
        %v2619 = vadd.f32 %v2331, %v2565
        %v2620 = vadd.f32 %v2334, %v2568
        %v2621 = vadd.f32 %v2336, %v2570
        %v2622 = vadd.f32 %v2339, %v2573
        %v2623 = vadd.f32 %v2341, %v2575
        %v2624 = vadd.f32 %v2344, %v2578
        %v2625 = vadd.f32 %v2346, %v2580
        %v2626 = vadd.f32 %v2349, %v2583
        %v2627 = vadd.f32 %v2351, %v2585
        %v2628 = vadd.f32 %v2354, %v2588
        %v2629 = vadd.f32 %v2356, %v2590
        %v2630 = vadd.f32 %v2359, %v2593
        %v2631 = vadd.f32 %v2361, %v2595
        %v2632 = vadd.f32 %v2364, %v2598
        %v2633 = vadd.f32 %v2366, %v2600
        %v2634 = vld [vmem:[%s552] sm:$0xff]
        %v2635 = vld [vmem:[%s552 + $0x8] sm:$0xff]
        %v2638 = vrot.slane %v2634, 1
        %v2639 = vrot.slane %v2634, 2
        %v2640 = vrot.slane %v2634, 3
        %v2641 = vrot.slane %v2634, 4
        %v2642 = vrot.slane %v2634, 5
        %v2643 = vrot.slane %v2634, 6
        %v2644 = vrot.slane %v2634, 7
        %v2645 = vrot.slane %v2635, 1
        %v2646 = vrot.slane %v2635, 2
        %v2647 = vrot.slane %v2635, 3
        %v2648 = vrot.slane %v2635, 4
        %v2649 = vrot.slane %v2635, 5
        %v2650 = vrot.slane %v2635, 6
        %v2651 = vrot.slane %v2635, 7
        %v2652 = vperm.slane %v2634, 0
        %v2653 = vperm.slane %v2638, 0
        %v2654 = vperm.slane %v2639, 0
        %v2655 = vperm.slane %v2640, 0
        %v2656 = vperm.slane %v2641, 0
        %v2657 = vperm.slane %v2642, 0
        %v2658 = vperm.slane %v2643, 0
        %v2659 = vperm.slane %v2644, 0
        %v2660 = vperm.slane %v2635, 0
        %v2661 = vperm.slane %v2645, 0
        %v2662 = vperm.slane %v2646, 0
        %v2663 = vperm.slane %v2647, 0
        %v2664 = vperm.slane %v2648, 0
        %v2665 = vperm.slane %v2649, 0
        %v2666 = vperm.slane %v2650, 0
        %v2667 = vperm.slane %v2651, 0
        %v2684 = vadd.f32 %v2602, %v2652
        %v2685 = vadd.f32 %v2603, %v2652
        %v2686 = vadd.f32 %v2604, %v2653
        %v2687 = vadd.f32 %v2605, %v2653
        %v2688 = vadd.f32 %v2606, %v2654
        %v2689 = vadd.f32 %v2607, %v2654
        %v2690 = vadd.f32 %v2608, %v2655
        %v2691 = vadd.f32 %v2609, %v2655
        %v2692 = vadd.f32 %v2610, %v2656
        %v2693 = vadd.f32 %v2611, %v2656
        %v2694 = vadd.f32 %v2612, %v2657
        %v2695 = vadd.f32 %v2613, %v2657
        %v2696 = vadd.f32 %v2614, %v2658
        %v2697 = vadd.f32 %v2615, %v2658
        %v2698 = vadd.f32 %v2616, %v2659
        %v2699 = vadd.f32 %v2617, %v2659
        %v2700 = vadd.f32 %v2618, %v2660
        %v2701 = vadd.f32 %v2619, %v2660
        %v2702 = vadd.f32 %v2620, %v2661
        %v2703 = vadd.f32 %v2621, %v2661
        %v2704 = vadd.f32 %v2622, %v2662
        %v2705 = vadd.f32 %v2623, %v2662
        %v2706 = vadd.f32 %v2624, %v2663
        %v2707 = vadd.f32 %v2625, %v2663
        %v2708 = vadd.f32 %v2626, %v2664
        %v2709 = vadd.f32 %v2627, %v2664
        %v2710 = vadd.f32 %v2628, %v2665
        %v2711 = vadd.f32 %v2629, %v2665
        %v2712 = vadd.f32 %v2630, %v2666
        %v2713 = vadd.f32 %v2631, %v2666
        %v2714 = vadd.f32 %v2632, %v2667
        %v2715 = vadd.f32 %v2633, %v2667
        %v2716 = vld [vmem:[%s562] sm:$0xff]
        %v2717 = vld [vmem:[%s562 + $0x8] sm:$0xff]
        %v2718 = vadd.f32 %v2684, %v2716
        %v2719 = vadd.f32 %v2685, %v2717
        %v2720 = vadd.f32 %v2686, %v2716
        %v2721 = vadd.f32 %v2687, %v2717
        %v2722 = vadd.f32 %v2688, %v2716
        %v2723 = vadd.f32 %v2689, %v2717
        %v2724 = vadd.f32 %v2690, %v2716
        %v2725 = vadd.f32 %v2691, %v2717
        %v2726 = vadd.f32 %v2692, %v2716
        %v2727 = vadd.f32 %v2693, %v2717
        %v2728 = vadd.f32 %v2694, %v2716
        %v2729 = vadd.f32 %v2695, %v2717
        %v2730 = vadd.f32 %v2696, %v2716
        %v2731 = vadd.f32 %v2697, %v2717
        %v2732 = vadd.f32 %v2698, %v2716
        %v2733 = vadd.f32 %v2699, %v2717
        %v2734 = vadd.f32 %v2700, %v2716
        %v2735 = vadd.f32 %v2701, %v2717
        %v2736 = vadd.f32 %v2702, %v2716
        %v2737 = vadd.f32 %v2703, %v2717
        %v2738 = vadd.f32 %v2704, %v2716
        %v2739 = vadd.f32 %v2705, %v2717
        %v2740 = vadd.f32 %v2706, %v2716
        %v2741 = vadd.f32 %v2707, %v2717
        %v2742 = vadd.f32 %v2708, %v2716
        %v2743 = vadd.f32 %v2709, %v2717
        %v2744 = vadd.f32 %v2710, %v2716
        %v2745 = vadd.f32 %v2711, %v2717
        %v2746 = vadd.f32 %v2712, %v2716
        %v2747 = vadd.f32 %v2713, %v2717
        %v2748 = vadd.f32 %v2714, %v2716
        %v2749 = vadd.f32 %v2715, %v2717
        %v2750 = vmax.f32 %v2718, 0.0
        %v2751 = vmax.f32 %v2719, 0.0
        %v2752 = vmax.f32 %v2720, 0.0
        %v2753 = vmax.f32 %v2721, 0.0
        %v2754 = vmax.f32 %v2722, 0.0
        %v2755 = vmax.f32 %v2723, 0.0
        %v2756 = vmax.f32 %v2724, 0.0
        %v2757 = vmax.f32 %v2725, 0.0
        %v2758 = vmax.f32 %v2726, 0.0
        %v2759 = vmax.f32 %v2727, 0.0
        %v2760 = vmax.f32 %v2728, 0.0
        %v2761 = vmax.f32 %v2729, 0.0
        %v2762 = vmax.f32 %v2730, 0.0
        %v2763 = vmax.f32 %v2731, 0.0
        %v2764 = vmax.f32 %v2732, 0.0
        %v2765 = vmax.f32 %v2733, 0.0
        %v2766 = vmax.f32 %v2734, 0.0
        %v2767 = vmax.f32 %v2735, 0.0
        %v2768 = vmax.f32 %v2736, 0.0
        %v2769 = vmax.f32 %v2737, 0.0
        %v2770 = vmax.f32 %v2738, 0.0
        %v2771 = vmax.f32 %v2739, 0.0
        %v2772 = vmax.f32 %v2740, 0.0
        %v2773 = vmax.f32 %v2741, 0.0
        %v2774 = vmax.f32 %v2742, 0.0
        %v2775 = vmax.f32 %v2743, 0.0
        %v2776 = vmax.f32 %v2744, 0.0
        %v2777 = vmax.f32 %v2745, 0.0
        %v2778 = vmax.f32 %v2746, 0.0
        %v2779 = vmax.f32 %v2747, 0.0
        %v2780 = vmax.f32 %v2748, 0.0
        %v2781 = vmax.f32 %v2749, 0.0
        %v2782 = vpack.c.bf16 %v2750, %v2750
        %v2783 = vpack.c.bf16 %v2751, %v2751
        %v2784 = vpack.c.bf16 %v2752, %v2752
        %v2785 = vpack.c.bf16 %v2753, %v2753
        %v2786 = vpack.c.bf16 %v2754, %v2754
        %v2787 = vpack.c.bf16 %v2755, %v2755
        %v2788 = vpack.c.bf16 %v2756, %v2756
        %v2789 = vpack.c.bf16 %v2757, %v2757
        %v2790 = vpack.c.bf16 %v2758, %v2758
        %v2791 = vpack.c.bf16 %v2759, %v2759
        %v2792 = vpack.c.bf16 %v2760, %v2760
        %v2793 = vpack.c.bf16 %v2761, %v2761
        %v2794 = vpack.c.bf16 %v2762, %v2762
        %v2795 = vpack.c.bf16 %v2763, %v2763
        %v2796 = vpack.c.bf16 %v2764, %v2764
        %v2797 = vpack.c.bf16 %v2765, %v2765
        %v2798 = vpack.c.bf16 %v2766, %v2766
        %v2799 = vpack.c.bf16 %v2767, %v2767
        %v2800 = vpack.c.bf16 %v2768, %v2768
        %v2801 = vpack.c.bf16 %v2769, %v2769
        %v2802 = vpack.c.bf16 %v2770, %v2770
        %v2803 = vpack.c.bf16 %v2771, %v2771
        %v2804 = vpack.c.bf16 %v2772, %v2772
        %v2805 = vpack.c.bf16 %v2773, %v2773
        %v2806 = vpack.c.bf16 %v2774, %v2774
        %v2807 = vpack.c.bf16 %v2775, %v2775
        %v2808 = vpack.c.bf16 %v2776, %v2776
        %v2809 = vpack.c.bf16 %v2777, %v2777
        %v2810 = vpack.c.bf16 %v2778, %v2778
        %v2811 = vpack.c.bf16 %v2779, %v2779
        %v2812 = vpack.c.bf16 %v2780, %v2780
        %v2813 = vpack.c.bf16 %v2781, %v2781
        %v2814 = vld [vmem:[%s8] sm:$0xf]
        %v2815 = vld [vmem:[%s8 + $0x4] sm:$0xf]
        %v2816 = vld [vmem:[%s8 + $0x8] sm:$0xf]
        %v2817 = vld [vmem:[%s8 + $0xc] sm:$0xf]
        %v2818 = vld [vmem:[%s8 + $0x10] sm:$0xf]
        %v2819 = vld [vmem:[%s8 + $0x14] sm:$0xf]
        %v2820 = vld [vmem:[%s8 + $0x18] sm:$0xf]
        %v2821 = vld [vmem:[%s8 + $0x1c] sm:$0xf]
        %v2822 = vld [vmem:[%s8 + $0x20] sm:$0xf]
        %v2823 = vld [vmem:[%s8 + $0x24] sm:$0xf]
        %v2824 = vld [vmem:[%s8 + $0x28] sm:$0xf]
        %v2825 = vld [vmem:[%s8 + $0x2c] sm:$0xf]
        %v2826 = vld [vmem:[%s8 + $0x30] sm:$0xf]
        %v2827 = vld [vmem:[%s8 + $0x34] sm:$0xf]
        %v2828 = vld [vmem:[%s8 + $0x38] sm:$0xf]
        %v2829 = vld [vmem:[%s8 + $0x3c] sm:$0xf]
        %v2830 = vperm.slane %v607, 0
        %v2863 = vunpack.c.l.b16 %v2782
        %v2864 = vunpack.c.l.b16 %v2783
        %v2865 = vunpack.c.l.b16 %v2784
        %v2866 = vunpack.c.l.b16 %v2785
        %v2867 = vunpack.c.l.b16 %v2786
        %v2868 = vunpack.c.l.b16 %v2787
        %v2869 = vunpack.c.l.b16 %v2788
        %v2870 = vunpack.c.l.b16 %v2789
        %v2871 = vunpack.c.l.b16 %v2790
        %v2872 = vunpack.c.l.b16 %v2791
        %v2873 = vunpack.c.l.b16 %v2792
        %v2874 = vunpack.c.l.b16 %v2793
        %v2875 = vunpack.c.l.b16 %v2794
        %v2876 = vunpack.c.l.b16 %v2795
        %v2877 = vunpack.c.l.b16 %v2796
        %v2878 = vunpack.c.l.b16 %v2797
        %v2879 = vunpack.c.l.b16 %v2798
        %v2880 = vunpack.c.l.b16 %v2799
        %v2881 = vunpack.c.l.b16 %v2800
        %v2882 = vunpack.c.l.b16 %v2801
        %v2883 = vunpack.c.l.b16 %v2802
        %v2884 = vunpack.c.l.b16 %v2803
        %v2885 = vunpack.c.l.b16 %v2804
        %v2886 = vunpack.c.l.b16 %v2805
        %v2887 = vunpack.c.l.b16 %v2806
        %v2888 = vunpack.c.l.b16 %v2807
        %v2889 = vunpack.c.l.b16 %v2808
        %v2890 = vunpack.c.l.b16 %v2809
        %v2891 = vunpack.c.l.b16 %v2810
        %v2892 = vunpack.c.l.b16 %v2811
        %v2893 = vunpack.c.l.b16 %v2812
        %v2894 = vunpack.c.l.b16 %v2813
        %v2895 = vpack.c.b16 %v2864, %v2863
        %v2896 = vpack.c.b16 %v2866, %v2865
        %v2897 = vpack.c.b16 %v2868, %v2867
        %v2898 = vpack.c.b16 %v2870, %v2869
        %v2899 = vpack.c.b16 %v2872, %v2871
        %v2900 = vpack.c.b16 %v2874, %v2873
        %v2901 = vpack.c.b16 %v2876, %v2875
        %v2902 = vpack.c.b16 %v2878, %v2877
        %v2903 = vpack.c.b16 %v2880, %v2879
        %v2904 = vpack.c.b16 %v2882, %v2881
        %v2905 = vpack.c.b16 %v2884, %v2883
        %v2906 = vpack.c.b16 %v2886, %v2885
        %v2907 = vpack.c.b16 %v2888, %v2887
        %v2908 = vpack.c.b16 %v2890, %v2889
        %v2909 = vpack.c.b16 %v2892, %v2891
        %v2910 = vpack.c.b16 %v2894, %v2893
        %v2943 = vunpack.c.l.b16 %v2814
        %v2944 = vunpack.c.l.b16 %v2815
        %v2945 = vunpack.c.l.b16 %v2816
        %v2946 = vunpack.c.l.b16 %v2817
        %v2947 = vunpack.c.l.b16 %v2818
        %v2948 = vunpack.c.l.b16 %v2819
        %v2949 = vunpack.c.l.b16 %v2820
        %v2950 = vunpack.c.l.b16 %v2821
        %v2951 = vunpack.c.l.b16 %v2822
        %v2952 = vunpack.c.l.b16 %v2823
        %v2953 = vunpack.c.l.b16 %v2824
        %v2954 = vunpack.c.l.b16 %v2825
        %v2955 = vunpack.c.l.b16 %v2826
        %v2956 = vunpack.c.l.b16 %v2827
        %v2957 = vunpack.c.l.b16 %v2828
        %v2958 = vunpack.c.l.b16 %v2829
        %v2959 = vpack.c.b16 %v2944, %v2943
        %v2960 = vpack.c.b16 %v2946, %v2945
        %v2961 = vpack.c.b16 %v2948, %v2947
        %v2962 = vpack.c.b16 %v2950, %v2949
        %v2963 = vpack.c.b16 %v2952, %v2951
        %v2964 = vpack.c.b16 %v2954, %v2953
        %v2965 = vpack.c.b16 %v2956, %v2955
        %v2966 = vpack.c.b16 %v2958, %v2957
        %2975 = vmatpush.bf16.msra.mxu0 %v2966
        %2976 = vmatpush.bf16.msra.mxu0 %v2965
        %2977 = vmatpush.bf16.msra.mxu0 %v2964
        %2978 = vmatpush.bf16.msra.mxu0 %v2963
        %2979 = vmatpush.bf16.msra.mxu0 %v2962
        %2980 = vmatpush.bf16.msra.mxu0 %v2961
        %2981 = vmatpush.bf16.msra.mxu0 %v2960
        %2982 = vmatpush.bf16.msra.mxu0 %v2959
        %2983 = vmatmul.bf16.gmra.mxu0 %v2895
        %v2984 = vpop.f32.mrf.mxu0
        %v2985 = vadd.f32 %v2830, %v2984
        %v2986 = vpop.f32.mrf.mxu0
        %v2987 = vadd.f32 %v2830, %v2986
        %2988 = vmatmul.bf16.gmra.mxu0 %v2896
        %v2989 = vpop.f32.mrf.mxu0
        %v2990 = vadd.f32 %v2830, %v2989
        %v2991 = vpop.f32.mrf.mxu0
        %v2992 = vadd.f32 %v2830, %v2991
        %2993 = vmatmul.bf16.gmra.mxu0 %v2897
        %v2994 = vpop.f32.mrf.mxu0
        %v2995 = vadd.f32 %v2830, %v2994
        %v2996 = vpop.f32.mrf.mxu0
        %v2997 = vadd.f32 %v2830, %v2996
        %2998 = vmatmul.bf16.gmra.mxu0 %v2898
        %v2999 = vpop.f32.mrf.mxu0
        %v3000 = vadd.f32 %v2830, %v2999
        %v3001 = vpop.f32.mrf.mxu0
        %v3002 = vadd.f32 %v2830, %v3001
        %3003 = vmatmul.bf16.gmra.mxu0 %v2899
        %v3004 = vpop.f32.mrf.mxu0
        %v3005 = vadd.f32 %v2830, %v3004
        %v3006 = vpop.f32.mrf.mxu0
        %v3007 = vadd.f32 %v2830, %v3006
        %3008 = vmatmul.bf16.gmra.mxu0 %v2900
        %v3009 = vpop.f32.mrf.mxu0
        %v3010 = vadd.f32 %v2830, %v3009
        %v3011 = vpop.f32.mrf.mxu0
        %v3012 = vadd.f32 %v2830, %v3011
        %3013 = vmatmul.bf16.gmra.mxu0 %v2901
        %v3014 = vpop.f32.mrf.mxu0
        %v3015 = vadd.f32 %v2830, %v3014
        %v3016 = vpop.f32.mrf.mxu0
        %v3017 = vadd.f32 %v2830, %v3016
        %3018 = vmatmul.bf16.gmra.mxu0 %v2902
        %v3019 = vpop.f32.mrf.mxu0
        %v3020 = vadd.f32 %v2830, %v3019
        %v3021 = vpop.f32.mrf.mxu0
        %v3022 = vadd.f32 %v2830, %v3021
        %3023 = vmatmul.bf16.gmra.mxu0 %v2903
        %v3024 = vpop.f32.mrf.mxu0
        %v3025 = vadd.f32 %v2830, %v3024
        %v3026 = vpop.f32.mrf.mxu0
        %v3027 = vadd.f32 %v2830, %v3026
        %3028 = vmatmul.bf16.gmra.mxu0 %v2904
        %v3029 = vpop.f32.mrf.mxu0
        %v3030 = vadd.f32 %v2830, %v3029
        %v3031 = vpop.f32.mrf.mxu0
        %v3032 = vadd.f32 %v2830, %v3031
        %3033 = vmatmul.bf16.gmra.mxu0 %v2905
        %v3034 = vpop.f32.mrf.mxu0
        %v3035 = vadd.f32 %v2830, %v3034
        %v3036 = vpop.f32.mrf.mxu0
        %v3037 = vadd.f32 %v2830, %v3036
        %3038 = vmatmul.bf16.gmra.mxu0 %v2906
        %v3039 = vpop.f32.mrf.mxu0
        %v3040 = vadd.f32 %v2830, %v3039
        %v3041 = vpop.f32.mrf.mxu0
        %v3042 = vadd.f32 %v2830, %v3041
        %3043 = vmatmul.bf16.gmra.mxu0 %v2907
        %v3044 = vpop.f32.mrf.mxu0
        %v3045 = vadd.f32 %v2830, %v3044
        %v3046 = vpop.f32.mrf.mxu0
        %v3047 = vadd.f32 %v2830, %v3046
        %3048 = vmatmul.bf16.gmra.mxu0 %v2908
        %v3049 = vpop.f32.mrf.mxu0
        %v3050 = vadd.f32 %v2830, %v3049
        %v3051 = vpop.f32.mrf.mxu0
        %v3052 = vadd.f32 %v2830, %v3051
        %3053 = vmatmul.bf16.gmra.mxu0 %v2909
        %v3054 = vpop.f32.mrf.mxu0
        %v3055 = vadd.f32 %v2830, %v3054
        %v3056 = vpop.f32.mrf.mxu0
        %v3057 = vadd.f32 %v2830, %v3056
        %3058 = vmatmul.bf16.gmra.mxu0 %v2910
        %v3059 = vpop.f32.mrf.mxu0
        %v3060 = vadd.f32 %v2830, %v3059
        %v3061 = vpop.f32.mrf.mxu0
        %v3062 = vadd.f32 %v2830, %v3061
        %3063 = vdwg.mxu0
        %v3064 = vmax.f32 %v2985, 0.0
        %v3065 = vmax.f32 %v2987, 0.0
        %v3066 = vmax.f32 %v2990, 0.0
        %v3067 = vmax.f32 %v2992, 0.0
        %v3068 = vmax.f32 %v2995, 0.0
        %v3069 = vmax.f32 %v2997, 0.0
        %v3070 = vmax.f32 %v3000, 0.0
        %v3071 = vmax.f32 %v3002, 0.0
        %v3072 = vmax.f32 %v3005, 0.0
        %v3073 = vmax.f32 %v3007, 0.0
        %v3074 = vmax.f32 %v3010, 0.0
        %v3075 = vmax.f32 %v3012, 0.0
        %v3076 = vmax.f32 %v3015, 0.0
        %v3077 = vmax.f32 %v3017, 0.0
        %v3078 = vmax.f32 %v3020, 0.0
        %v3079 = vmax.f32 %v3022, 0.0
        %v3080 = vmax.f32 %v3025, 0.0
        %v3081 = vmax.f32 %v3027, 0.0
        %v3082 = vmax.f32 %v3030, 0.0
        %v3083 = vmax.f32 %v3032, 0.0
        %v3084 = vmax.f32 %v3035, 0.0
        %v3085 = vmax.f32 %v3037, 0.0
        %v3086 = vmax.f32 %v3040, 0.0
        %v3087 = vmax.f32 %v3042, 0.0
        %v3088 = vmax.f32 %v3045, 0.0
        %v3089 = vmax.f32 %v3047, 0.0
        %v3090 = vmax.f32 %v3050, 0.0
        %v3091 = vmax.f32 %v3052, 0.0
        %v3092 = vmax.f32 %v3055, 0.0
        %v3093 = vmax.f32 %v3057, 0.0
        %v3094 = vmax.f32 %v3060, 0.0
        %v3095 = vmax.f32 %v3062, 0.0
        %v3096 = vpack.c.bf16 %v3065, %v3064
        %v3097 = vpack.c.bf16 %v3067, %v3066
        %v3098 = vpack.c.bf16 %v3069, %v3068
        %v3099 = vpack.c.bf16 %v3071, %v3070
        %v3100 = vpack.c.bf16 %v3073, %v3072
        %v3101 = vpack.c.bf16 %v3075, %v3074
        %v3102 = vpack.c.bf16 %v3077, %v3076
        %v3103 = vpack.c.bf16 %v3079, %v3078
        %v3104 = vpack.c.bf16 %v3081, %v3080
        %v3105 = vpack.c.bf16 %v3083, %v3082
        %v3106 = vpack.c.bf16 %v3085, %v3084
        %v3107 = vpack.c.bf16 %v3087, %v3086
        %v3108 = vpack.c.bf16 %v3089, %v3088
        %v3109 = vpack.c.bf16 %v3091, %v3090
        %v3110 = vpack.c.bf16 %v3093, %v3092
        %v3111 = vpack.c.bf16 %v3095, %v3094
        %v3112 = vld [vmem:[%s9] sm:$0xf]
        %v3113 = vld [vmem:[%s9 + $0x4] sm:$0xf]
        %v3114 = vld [vmem:[%s9 + $0x8] sm:$0xf]
        %v3115 = vld [vmem:[%s9 + $0xc] sm:$0xf]
        %v3116 = vld [vmem:[%s9 + $0x10] sm:$0xf]
        %v3117 = vld [vmem:[%s9 + $0x14] sm:$0xf]
        %v3118 = vld [vmem:[%s9 + $0x18] sm:$0xf]
        %v3119 = vld [vmem:[%s9 + $0x1c] sm:$0xf]
        %v3120 = vld [vmem:[%s9 + $0x20] sm:$0xf]
        %v3121 = vld [vmem:[%s9 + $0x24] sm:$0xf]
        %v3122 = vld [vmem:[%s9 + $0x28] sm:$0xf]
        %v3123 = vld [vmem:[%s9 + $0x2c] sm:$0xf]
        %v3124 = vld [vmem:[%s9 + $0x30] sm:$0xf]
        %v3125 = vld [vmem:[%s9 + $0x34] sm:$0xf]
        %v3126 = vld [vmem:[%s9 + $0x38] sm:$0xf]
        %v3127 = vld [vmem:[%s9 + $0x3c] sm:$0xf]
        %v3128 = vperm.slane %v608, 0
        %v3145 = vunpack.c.l.b16 %v3112
        %v3146 = vunpack.c.l.b16 %v3113
        %v3147 = vunpack.c.l.b16 %v3114
        %v3148 = vunpack.c.l.b16 %v3115
        %v3149 = vunpack.c.l.b16 %v3116
        %v3150 = vunpack.c.l.b16 %v3117
        %v3151 = vunpack.c.l.b16 %v3118
        %v3152 = vunpack.c.l.b16 %v3119
        %v3153 = vunpack.c.l.b16 %v3120
        %v3154 = vunpack.c.l.b16 %v3121
        %v3155 = vunpack.c.l.b16 %v3122
        %v3156 = vunpack.c.l.b16 %v3123
        %v3157 = vunpack.c.l.b16 %v3124
        %v3158 = vunpack.c.l.b16 %v3125
        %v3159 = vunpack.c.l.b16 %v3126
        %v3160 = vunpack.c.l.b16 %v3127
        %v3161 = vpack.c.b16 %v3146, %v3145
        %v3162 = vpack.c.b16 %v3148, %v3147
        %v3163 = vpack.c.b16 %v3150, %v3149
        %v3164 = vpack.c.b16 %v3152, %v3151
        %v3165 = vpack.c.b16 %v3154, %v3153
        %v3166 = vpack.c.b16 %v3156, %v3155
        %v3167 = vpack.c.b16 %v3158, %v3157
        %v3168 = vpack.c.b16 %v3160, %v3159
        %3177 = vmatpush.bf16.msra.mxu0 %v3168
        %3178 = vmatpush.bf16.msra.mxu0 %v3167
        %3179 = vmatpush.bf16.msra.mxu0 %v3166
        %3180 = vmatpush.bf16.msra.mxu0 %v3165
        %3181 = vmatpush.bf16.msra.mxu0 %v3164
        %3182 = vmatpush.bf16.msra.mxu0 %v3163
        %3183 = vmatpush.bf16.msra.mxu0 %v3162
        %3184 = vmatpush.bf16.msra.mxu0 %v3161
        %3185 = vmatmul.bf16.gmra.mxu0 %v3096
        %v3186 = vpop.f32.mrf.mxu0
        %v3187 = vadd.f32 %v3128, %v3186
        %v3188 = vpop.f32.mrf.mxu0
        %v3189 = vadd.f32 %v3128, %v3188
        %3190 = vmatmul.bf16.gmra.mxu0 %v3097
        %v3191 = vpop.f32.mrf.mxu0
        %v3192 = vadd.f32 %v3128, %v3191
        %v3193 = vpop.f32.mrf.mxu0
        %v3194 = vadd.f32 %v3128, %v3193
        %3195 = vmatmul.bf16.gmra.mxu0 %v3098
        %v3196 = vpop.f32.mrf.mxu0
        %v3197 = vadd.f32 %v3128, %v3196
        %v3198 = vpop.f32.mrf.mxu0
        %v3199 = vadd.f32 %v3128, %v3198
        %3200 = vmatmul.bf16.gmra.mxu0 %v3099
        %v3201 = vpop.f32.mrf.mxu0
        %v3202 = vadd.f32 %v3128, %v3201
        %v3203 = vpop.f32.mrf.mxu0
        %v3204 = vadd.f32 %v3128, %v3203
        %3205 = vmatmul.bf16.gmra.mxu0 %v3100
        %v3206 = vpop.f32.mrf.mxu0
        %v3207 = vadd.f32 %v3128, %v3206
        %v3208 = vpop.f32.mrf.mxu0
        %v3209 = vadd.f32 %v3128, %v3208
        %3210 = vmatmul.bf16.gmra.mxu0 %v3101
        %v3211 = vpop.f32.mrf.mxu0
        %v3212 = vadd.f32 %v3128, %v3211
        %v3213 = vpop.f32.mrf.mxu0
        %v3214 = vadd.f32 %v3128, %v3213
        %3215 = vmatmul.bf16.gmra.mxu0 %v3102
        %v3216 = vpop.f32.mrf.mxu0
        %v3217 = vadd.f32 %v3128, %v3216
        %v3218 = vpop.f32.mrf.mxu0
        %v3219 = vadd.f32 %v3128, %v3218
        %3220 = vmatmul.bf16.gmra.mxu0 %v3103
        %v3221 = vpop.f32.mrf.mxu0
        %v3222 = vadd.f32 %v3128, %v3221
        %v3223 = vpop.f32.mrf.mxu0
        %v3224 = vadd.f32 %v3128, %v3223
        %3225 = vmatmul.bf16.gmra.mxu0 %v3104
        %v3226 = vpop.f32.mrf.mxu0
        %v3227 = vadd.f32 %v3128, %v3226
        %v3228 = vpop.f32.mrf.mxu0
        %v3229 = vadd.f32 %v3128, %v3228
        %3230 = vmatmul.bf16.gmra.mxu0 %v3105
        %v3231 = vpop.f32.mrf.mxu0
        %v3232 = vadd.f32 %v3128, %v3231
        %v3233 = vpop.f32.mrf.mxu0
        %v3234 = vadd.f32 %v3128, %v3233
        %3235 = vmatmul.bf16.gmra.mxu0 %v3106
        %v3236 = vpop.f32.mrf.mxu0
        %v3237 = vadd.f32 %v3128, %v3236
        %v3238 = vpop.f32.mrf.mxu0
        %v3239 = vadd.f32 %v3128, %v3238
        %3240 = vmatmul.bf16.gmra.mxu0 %v3107
        %v3241 = vpop.f32.mrf.mxu0
        %v3242 = vadd.f32 %v3128, %v3241
        %v3243 = vpop.f32.mrf.mxu0
        %v3244 = vadd.f32 %v3128, %v3243
        %3245 = vmatmul.bf16.gmra.mxu0 %v3108
        %v3246 = vpop.f32.mrf.mxu0
        %v3247 = vadd.f32 %v3128, %v3246
        %v3248 = vpop.f32.mrf.mxu0
        %v3249 = vadd.f32 %v3128, %v3248
        %3250 = vmatmul.bf16.gmra.mxu0 %v3109
        %v3251 = vpop.f32.mrf.mxu0
        %v3252 = vadd.f32 %v3128, %v3251
        %v3253 = vpop.f32.mrf.mxu0
        %v3254 = vadd.f32 %v3128, %v3253
        %3255 = vmatmul.bf16.gmra.mxu0 %v3110
        %v3256 = vpop.f32.mrf.mxu0
        %v3257 = vadd.f32 %v3128, %v3256
        %v3258 = vpop.f32.mrf.mxu0
        %v3259 = vadd.f32 %v3128, %v3258
        %3260 = vmatmul.bf16.gmra.mxu0 %v3111
        %v3261 = vpop.f32.mrf.mxu0
        %v3262 = vadd.f32 %v3128, %v3261
        %v3263 = vpop.f32.mrf.mxu0
        %v3264 = vadd.f32 %v3128, %v3263
        %3265 = vdwg.mxu0
        %3266 = vadd.xlane.f32.xlu0 %v3187
        %v3267 = vpop.xlane.xlu0 %3266
        %3268 = vadd.xlane.f32.xlu0 %v3189
        %v3269 = vpop.xlane.xlu0 %3268
        %3270 = vadd.xlane.f32.xlu0 %v3192
        %v3271 = vpop.xlane.xlu0 %3270
        %3272 = vadd.xlane.f32.xlu0 %v3194
        %v3273 = vpop.xlane.xlu0 %3272
        %3274 = vadd.xlane.f32.xlu0 %v3197
        %v3275 = vpop.xlane.xlu0 %3274
        %3276 = vadd.xlane.f32.xlu0 %v3199
        %v3277 = vpop.xlane.xlu0 %3276
        %3278 = vadd.xlane.f32.xlu0 %v3202
        %v3279 = vpop.xlane.xlu0 %3278
        %3280 = vadd.xlane.f32.xlu0 %v3204
        %v3281 = vpop.xlane.xlu0 %3280
        %3282 = vadd.xlane.f32.xlu0 %v3207
        %v3283 = vpop.xlane.xlu0 %3282
        %3284 = vadd.xlane.f32.xlu0 %v3209
        %v3285 = vpop.xlane.xlu0 %3284
        %3286 = vadd.xlane.f32.xlu0 %v3212
        %v3287 = vpop.xlane.xlu0 %3286
        %3288 = vadd.xlane.f32.xlu0 %v3214
        %v3289 = vpop.xlane.xlu0 %3288
        %3290 = vadd.xlane.f32.xlu0 %v3217
        %v3291 = vpop.xlane.xlu0 %3290
        %3292 = vadd.xlane.f32.xlu0 %v3219
        %v3293 = vpop.xlane.xlu0 %3292
        %3294 = vadd.xlane.f32.xlu0 %v3222
        %v3295 = vpop.xlane.xlu0 %3294
        %3296 = vadd.xlane.f32.xlu0 %v3224
        %v3297 = vpop.xlane.xlu0 %3296
        %3298 = vadd.xlane.f32.xlu0 %v3227
        %v3299 = vpop.xlane.xlu0 %3298
        %3300 = vadd.xlane.f32.xlu0 %v3229
        %v3301 = vpop.xlane.xlu0 %3300
        %3302 = vadd.xlane.f32.xlu0 %v3232
        %v3303 = vpop.xlane.xlu0 %3302
        %3304 = vadd.xlane.f32.xlu0 %v3234
        %v3305 = vpop.xlane.xlu0 %3304
        %3306 = vadd.xlane.f32.xlu0 %v3237
        %v3307 = vpop.xlane.xlu0 %3306
        %3308 = vadd.xlane.f32.xlu0 %v3239
        %v3309 = vpop.xlane.xlu0 %3308
        %3310 = vadd.xlane.f32.xlu0 %v3242
        %v3311 = vpop.xlane.xlu0 %3310
        %3312 = vadd.xlane.f32.xlu0 %v3244
        %v3313 = vpop.xlane.xlu0 %3312
        %3314 = vadd.xlane.f32.xlu0 %v3247
        %v3315 = vpop.xlane.xlu0 %3314
        %3316 = vadd.xlane.f32.xlu0 %v3249
        %v3317 = vpop.xlane.xlu0 %3316
        %3318 = vadd.xlane.f32.xlu0 %v3252
        %v3319 = vpop.xlane.xlu0 %3318
        %3320 = vadd.xlane.f32.xlu0 %v3254
        %v3321 = vpop.xlane.xlu0 %3320
        %3322 = vadd.xlane.f32.xlu0 %v3257
        %v3323 = vpop.xlane.xlu0 %3322
        %3324 = vadd.xlane.f32.xlu0 %v3259
        %v3325 = vpop.xlane.xlu0 %3324
        %3326 = vadd.xlane.f32.xlu0 %v3262
        %v3327 = vpop.xlane.xlu0 %3326
        %3328 = vadd.xlane.f32.xlu0 %v3264
        %v3329 = vpop.xlane.xlu0 %3328
        %v3330 = vmul.f32 %v3267, 0.0078125
        %v3331 = vmul.f32 %v3269, 0.0078125
        %v3332 = vmul.f32 %v3271, 0.0078125
        %v3333 = vmul.f32 %v3273, 0.0078125
        %v3334 = vmul.f32 %v3275, 0.0078125
        %v3335 = vmul.f32 %v3277, 0.0078125
        %v3336 = vmul.f32 %v3279, 0.0078125
        %v3337 = vmul.f32 %v3281, 0.0078125
        %v3338 = vmul.f32 %v3283, 0.0078125
        %v3339 = vmul.f32 %v3285, 0.0078125
        %v3340 = vmul.f32 %v3287, 0.0078125
        %v3341 = vmul.f32 %v3289, 0.0078125
        %v3342 = vmul.f32 %v3291, 0.0078125
        %v3343 = vmul.f32 %v3293, 0.0078125
        %v3344 = vmul.f32 %v3295, 0.0078125
        %v3345 = vmul.f32 %v3297, 0.0078125
        %v3346 = vmul.f32 %v3299, 0.0078125
        %v3347 = vmul.f32 %v3301, 0.0078125
        %v3348 = vmul.f32 %v3303, 0.0078125
        %v3349 = vmul.f32 %v3305, 0.0078125
        %v3350 = vmul.f32 %v3307, 0.0078125
        %v3351 = vmul.f32 %v3309, 0.0078125
        %v3352 = vmul.f32 %v3311, 0.0078125
        %v3353 = vmul.f32 %v3313, 0.0078125
        %v3354 = vmul.f32 %v3315, 0.0078125
        %v3355 = vmul.f32 %v3317, 0.0078125
        %v3356 = vmul.f32 %v3319, 0.0078125
        %v3357 = vmul.f32 %v3321, 0.0078125
        %v3358 = vmul.f32 %v3323, 0.0078125
        %v3359 = vmul.f32 %v3325, 0.0078125
        %v3360 = vmul.f32 %v3327, 0.0078125
        %v3361 = vmul.f32 %v3329, 0.0078125
        %v3362 = vmul.f32 %v3187, %v3187
        %v3363 = vmul.f32 %v3189, %v3189
        %v3364 = vmul.f32 %v3192, %v3192
        %v3365 = vmul.f32 %v3194, %v3194
        %v3366 = vmul.f32 %v3197, %v3197
        %v3367 = vmul.f32 %v3199, %v3199
        %v3368 = vmul.f32 %v3202, %v3202
        %v3369 = vmul.f32 %v3204, %v3204
        %v3370 = vmul.f32 %v3207, %v3207
        %v3371 = vmul.f32 %v3209, %v3209
        %v3372 = vmul.f32 %v3212, %v3212
        %v3373 = vmul.f32 %v3214, %v3214
        %v3374 = vmul.f32 %v3217, %v3217
        %v3375 = vmul.f32 %v3219, %v3219
        %v3376 = vmul.f32 %v3222, %v3222
        %v3377 = vmul.f32 %v3224, %v3224
        %v3378 = vmul.f32 %v3227, %v3227
        %v3379 = vmul.f32 %v3229, %v3229
        %v3380 = vmul.f32 %v3232, %v3232
        %v3381 = vmul.f32 %v3234, %v3234
        %v3382 = vmul.f32 %v3237, %v3237
        %v3383 = vmul.f32 %v3239, %v3239
        %v3384 = vmul.f32 %v3242, %v3242
        %v3385 = vmul.f32 %v3244, %v3244
        %v3386 = vmul.f32 %v3247, %v3247
        %v3387 = vmul.f32 %v3249, %v3249
        %v3388 = vmul.f32 %v3252, %v3252
        %v3389 = vmul.f32 %v3254, %v3254
        %v3390 = vmul.f32 %v3257, %v3257
        %v3391 = vmul.f32 %v3259, %v3259
        %v3392 = vmul.f32 %v3262, %v3262
        %v3393 = vmul.f32 %v3264, %v3264
        %3394 = vadd.xlane.f32.xlu0 %v3362
        %v3395 = vpop.xlane.xlu0 %3394
        %3396 = vadd.xlane.f32.xlu0 %v3363
        %v3397 = vpop.xlane.xlu0 %3396
        %3398 = vadd.xlane.f32.xlu0 %v3364
        %v3399 = vpop.xlane.xlu0 %3398
        %3400 = vadd.xlane.f32.xlu0 %v3365
        %v3401 = vpop.xlane.xlu0 %3400
        %3402 = vadd.xlane.f32.xlu0 %v3366
        %v3403 = vpop.xlane.xlu0 %3402
        %3404 = vadd.xlane.f32.xlu0 %v3367
        %v3405 = vpop.xlane.xlu0 %3404
        %3406 = vadd.xlane.f32.xlu0 %v3368
        %v3407 = vpop.xlane.xlu0 %3406
        %3408 = vadd.xlane.f32.xlu0 %v3369
        %v3409 = vpop.xlane.xlu0 %3408
        %3410 = vadd.xlane.f32.xlu0 %v3370
        %v3411 = vpop.xlane.xlu0 %3410
        %3412 = vadd.xlane.f32.xlu0 %v3371
        %v3413 = vpop.xlane.xlu0 %3412
        %3414 = vadd.xlane.f32.xlu0 %v3372
        %v3415 = vpop.xlane.xlu0 %3414
        %3416 = vadd.xlane.f32.xlu0 %v3373
        %v3417 = vpop.xlane.xlu0 %3416
        %3418 = vadd.xlane.f32.xlu0 %v3374
        %v3419 = vpop.xlane.xlu0 %3418
        %3420 = vadd.xlane.f32.xlu0 %v3375
        %v3421 = vpop.xlane.xlu0 %3420
        %3422 = vadd.xlane.f32.xlu0 %v3376
        %v3423 = vpop.xlane.xlu0 %3422
        %3424 = vadd.xlane.f32.xlu0 %v3377
        %v3425 = vpop.xlane.xlu0 %3424
        %3426 = vadd.xlane.f32.xlu0 %v3378
        %v3427 = vpop.xlane.xlu0 %3426
        %3428 = vadd.xlane.f32.xlu0 %v3379
        %v3429 = vpop.xlane.xlu0 %3428
        %3430 = vadd.xlane.f32.xlu0 %v3380
        %v3431 = vpop.xlane.xlu0 %3430
        %3432 = vadd.xlane.f32.xlu0 %v3381
        %v3433 = vpop.xlane.xlu0 %3432
        %3434 = vadd.xlane.f32.xlu0 %v3382
        %v3435 = vpop.xlane.xlu0 %3434
        %3436 = vadd.xlane.f32.xlu0 %v3383
        %v3437 = vpop.xlane.xlu0 %3436
        %3438 = vadd.xlane.f32.xlu0 %v3384
        %v3439 = vpop.xlane.xlu0 %3438
        %3440 = vadd.xlane.f32.xlu0 %v3385
        %v3441 = vpop.xlane.xlu0 %3440
        %3442 = vadd.xlane.f32.xlu0 %v3386
        %v3443 = vpop.xlane.xlu0 %3442
        %3444 = vadd.xlane.f32.xlu0 %v3387
        %v3445 = vpop.xlane.xlu0 %3444
        %3446 = vadd.xlane.f32.xlu0 %v3388
        %v3447 = vpop.xlane.xlu0 %3446
        %3448 = vadd.xlane.f32.xlu0 %v3389
        %v3449 = vpop.xlane.xlu0 %3448
        %3450 = vadd.xlane.f32.xlu0 %v3390
        %v3451 = vpop.xlane.xlu0 %3450
        %3452 = vadd.xlane.f32.xlu0 %v3391
        %v3453 = vpop.xlane.xlu0 %3452
        %3454 = vadd.xlane.f32.xlu0 %v3392
        %v3455 = vpop.xlane.xlu0 %3454
        %3456 = vadd.xlane.f32.xlu0 %v3393
        %v3457 = vpop.xlane.xlu0 %3456
        %v3458 = vmul.f32 %v3395, 0.0078125
        %v3459 = vmul.f32 %v3397, 0.0078125
        %v3460 = vmul.f32 %v3399, 0.0078125
        %v3461 = vmul.f32 %v3401, 0.0078125
        %v3462 = vmul.f32 %v3403, 0.0078125
        %v3463 = vmul.f32 %v3405, 0.0078125
        %v3464 = vmul.f32 %v3407, 0.0078125
        %v3465 = vmul.f32 %v3409, 0.0078125
        %v3466 = vmul.f32 %v3411, 0.0078125
        %v3467 = vmul.f32 %v3413, 0.0078125
        %v3468 = vmul.f32 %v3415, 0.0078125
        %v3469 = vmul.f32 %v3417, 0.0078125
        %v3470 = vmul.f32 %v3419, 0.0078125
        %v3471 = vmul.f32 %v3421, 0.0078125
        %v3472 = vmul.f32 %v3423, 0.0078125
        %v3473 = vmul.f32 %v3425, 0.0078125
        %v3474 = vmul.f32 %v3427, 0.0078125
        %v3475 = vmul.f32 %v3429, 0.0078125
        %v3476 = vmul.f32 %v3431, 0.0078125
        %v3477 = vmul.f32 %v3433, 0.0078125
        %v3478 = vmul.f32 %v3435, 0.0078125
        %v3479 = vmul.f32 %v3437, 0.0078125
        %v3480 = vmul.f32 %v3439, 0.0078125
        %v3481 = vmul.f32 %v3441, 0.0078125
        %v3482 = vmul.f32 %v3443, 0.0078125
        %v3483 = vmul.f32 %v3445, 0.0078125
        %v3484 = vmul.f32 %v3447, 0.0078125
        %v3485 = vmul.f32 %v3449, 0.0078125
        %v3486 = vmul.f32 %v3451, 0.0078125
        %v3487 = vmul.f32 %v3453, 0.0078125
        %v3488 = vmul.f32 %v3455, 0.0078125
        %v3489 = vmul.f32 %v3457, 0.0078125
        %v3490 = vmul.f32 %v3330, %v3330
        %v3491 = vmul.f32 %v3331, %v3331
        %v3492 = vmul.f32 %v3332, %v3332
        %v3493 = vmul.f32 %v3333, %v3333
        %v3494 = vmul.f32 %v3334, %v3334
        %v3495 = vmul.f32 %v3335, %v3335
        %v3496 = vmul.f32 %v3336, %v3336
        %v3497 = vmul.f32 %v3337, %v3337
        %v3498 = vmul.f32 %v3338, %v3338
        %v3499 = vmul.f32 %v3339, %v3339
        %v3500 = vmul.f32 %v3340, %v3340
        %v3501 = vmul.f32 %v3341, %v3341
        %v3502 = vmul.f32 %v3342, %v3342
        %v3503 = vmul.f32 %v3343, %v3343
        %v3504 = vmul.f32 %v3344, %v3344
        %v3505 = vmul.f32 %v3345, %v3345
        %v3506 = vmul.f32 %v3346, %v3346
        %v3507 = vmul.f32 %v3347, %v3347
        %v3508 = vmul.f32 %v3348, %v3348
        %v3509 = vmul.f32 %v3349, %v3349
        %v3510 = vmul.f32 %v3350, %v3350
        %v3511 = vmul.f32 %v3351, %v3351
        %v3512 = vmul.f32 %v3352, %v3352
        %v3513 = vmul.f32 %v3353, %v3353
        %v3514 = vmul.f32 %v3354, %v3354
        %v3515 = vmul.f32 %v3355, %v3355
        %v3516 = vmul.f32 %v3356, %v3356
        %v3517 = vmul.f32 %v3357, %v3357
        %v3518 = vmul.f32 %v3358, %v3358
        %v3519 = vmul.f32 %v3359, %v3359
        %v3520 = vmul.f32 %v3360, %v3360
        %v3521 = vmul.f32 %v3361, %v3361
        %v3522 = vsub.f32 %v3458, %v3490
        %v3523 = vsub.f32 %v3459, %v3491
        %v3524 = vsub.f32 %v3460, %v3492
        %v3525 = vsub.f32 %v3461, %v3493
        %v3526 = vsub.f32 %v3462, %v3494
        %v3527 = vsub.f32 %v3463, %v3495
        %v3528 = vsub.f32 %v3464, %v3496
        %v3529 = vsub.f32 %v3465, %v3497
        %v3530 = vsub.f32 %v3466, %v3498
        %v3531 = vsub.f32 %v3467, %v3499
        %v3532 = vsub.f32 %v3468, %v3500
        %v3533 = vsub.f32 %v3469, %v3501
        %v3534 = vsub.f32 %v3470, %v3502
        %v3535 = vsub.f32 %v3471, %v3503
        %v3536 = vsub.f32 %v3472, %v3504
        %v3537 = vsub.f32 %v3473, %v3505
        %v3538 = vsub.f32 %v3474, %v3506
        %v3539 = vsub.f32 %v3475, %v3507
        %v3540 = vsub.f32 %v3476, %v3508
        %v3541 = vsub.f32 %v3477, %v3509
        %v3542 = vsub.f32 %v3478, %v3510
        %v3543 = vsub.f32 %v3479, %v3511
        %v3544 = vsub.f32 %v3480, %v3512
        %v3545 = vsub.f32 %v3481, %v3513
        %v3546 = vsub.f32 %v3482, %v3514
        %v3547 = vsub.f32 %v3483, %v3515
        %v3548 = vsub.f32 %v3484, %v3516
        %v3549 = vsub.f32 %v3485, %v3517
        %v3550 = vsub.f32 %v3486, %v3518
        %v3551 = vsub.f32 %v3487, %v3519
        %v3552 = vsub.f32 %v3488, %v3520
        %v3553 = vsub.f32 %v3489, %v3521
        %v3554 = vmax.f32 %v3522, 0.0
        %v3555 = vmax.f32 %v3523, 0.0
        %v3556 = vmax.f32 %v3524, 0.0
        %v3557 = vmax.f32 %v3525, 0.0
        %v3558 = vmax.f32 %v3526, 0.0
        %v3559 = vmax.f32 %v3527, 0.0
        %v3560 = vmax.f32 %v3528, 0.0
        %v3561 = vmax.f32 %v3529, 0.0
        %v3562 = vmax.f32 %v3530, 0.0
        %v3563 = vmax.f32 %v3531, 0.0
        %v3564 = vmax.f32 %v3532, 0.0
        %v3565 = vmax.f32 %v3533, 0.0
        %v3566 = vmax.f32 %v3534, 0.0
        %v3567 = vmax.f32 %v3535, 0.0
        %v3568 = vmax.f32 %v3536, 0.0
        %v3569 = vmax.f32 %v3537, 0.0
        %v3570 = vmax.f32 %v3538, 0.0
        %v3571 = vmax.f32 %v3539, 0.0
        %v3572 = vmax.f32 %v3540, 0.0
        %v3573 = vmax.f32 %v3541, 0.0
        %v3574 = vmax.f32 %v3542, 0.0
        %v3575 = vmax.f32 %v3543, 0.0
        %v3576 = vmax.f32 %v3544, 0.0
        %v3577 = vmax.f32 %v3545, 0.0
        %v3578 = vmax.f32 %v3546, 0.0
        %v3579 = vmax.f32 %v3547, 0.0
        %v3580 = vmax.f32 %v3548, 0.0
        %v3581 = vmax.f32 %v3549, 0.0
        %v3582 = vmax.f32 %v3550, 0.0
        %v3583 = vmax.f32 %v3551, 0.0
        %v3584 = vmax.f32 %v3552, 0.0
        %v3585 = vmax.f32 %v3553, 0.0
        %v3586 = vsub.f32 %v3187, %v3330
        %v3587 = vsub.f32 %v3189, %v3331
        %v3588 = vsub.f32 %v3192, %v3332
        %v3589 = vsub.f32 %v3194, %v3333
        %v3590 = vsub.f32 %v3197, %v3334
        %v3591 = vsub.f32 %v3199, %v3335
        %v3592 = vsub.f32 %v3202, %v3336
        %v3593 = vsub.f32 %v3204, %v3337
        %v3594 = vsub.f32 %v3207, %v3338
        %v3595 = vsub.f32 %v3209, %v3339
        %v3596 = vsub.f32 %v3212, %v3340
        %v3597 = vsub.f32 %v3214, %v3341
        %v3598 = vsub.f32 %v3217, %v3342
        %v3599 = vsub.f32 %v3219, %v3343
        %v3600 = vsub.f32 %v3222, %v3344
        %v3601 = vsub.f32 %v3224, %v3345
        %v3602 = vsub.f32 %v3227, %v3346
        %v3603 = vsub.f32 %v3229, %v3347
        %v3604 = vsub.f32 %v3232, %v3348
        %v3605 = vsub.f32 %v3234, %v3349
        %v3606 = vsub.f32 %v3237, %v3350
        %v3607 = vsub.f32 %v3239, %v3351
        %v3608 = vsub.f32 %v3242, %v3352
        %v3609 = vsub.f32 %v3244, %v3353
        %v3610 = vsub.f32 %v3247, %v3354
        %v3611 = vsub.f32 %v3249, %v3355
        %v3612 = vsub.f32 %v3252, %v3356
        %v3613 = vsub.f32 %v3254, %v3357
        %v3614 = vsub.f32 %v3257, %v3358
        %v3615 = vsub.f32 %v3259, %v3359
        %v3616 = vsub.f32 %v3262, %v3360
        %v3617 = vsub.f32 %v3264, %v3361
        %v3618 = vadd.f32 %v3554, 1e-05
        %v3619 = vadd.f32 %v3555, 1e-05
        %v3620 = vadd.f32 %v3556, 1e-05
        %v3621 = vadd.f32 %v3557, 1e-05
        %v3622 = vadd.f32 %v3558, 1e-05
        %v3623 = vadd.f32 %v3559, 1e-05
        %v3624 = vadd.f32 %v3560, 1e-05
        %v3625 = vadd.f32 %v3561, 1e-05
        %v3626 = vadd.f32 %v3562, 1e-05
        %v3627 = vadd.f32 %v3563, 1e-05
        %v3628 = vadd.f32 %v3564, 1e-05
        %v3629 = vadd.f32 %v3565, 1e-05
        %v3630 = vadd.f32 %v3566, 1e-05
        %v3631 = vadd.f32 %v3567, 1e-05
        %v3632 = vadd.f32 %v3568, 1e-05
        %v3633 = vadd.f32 %v3569, 1e-05
        %v3634 = vadd.f32 %v3570, 1e-05
        %v3635 = vadd.f32 %v3571, 1e-05
        %v3636 = vadd.f32 %v3572, 1e-05
        %v3637 = vadd.f32 %v3573, 1e-05
        %v3638 = vadd.f32 %v3574, 1e-05
        %v3639 = vadd.f32 %v3575, 1e-05
        %v3640 = vadd.f32 %v3576, 1e-05
        %v3641 = vadd.f32 %v3577, 1e-05
        %v3642 = vadd.f32 %v3578, 1e-05
        %v3643 = vadd.f32 %v3579, 1e-05
        %v3644 = vadd.f32 %v3580, 1e-05
        %v3645 = vadd.f32 %v3581, 1e-05
        %v3646 = vadd.f32 %v3582, 1e-05
        %v3647 = vadd.f32 %v3583, 1e-05
        %v3648 = vadd.f32 %v3584, 1e-05
        %v3649 = vadd.f32 %v3585, 1e-05
        %v3650 = vrsqrt.pop %v3618
        %v3651 = vmul.f32 %v3650, %v3618
        %v3652 = vmul.f32 %v3651, %v3650
        %v3653 = vmul.f32 0.5, %v3652
        %v3654 = vsub.f32 1.5, %v3653
        %v3655 = vmul.f32 %v3650, %v3654
        %vm3656 = vweird.f32 %v3618
        %vm3657 = vweird.f32 %v3650
        %vm3658 = vmor %vm3656, %vm3657
        %v3659 = vsel %vm3658, %v3650, %v3655
        %v3660 = vrsqrt.pop %v3619
        %v3661 = vmul.f32 %v3660, %v3619
        %v3662 = vmul.f32 %v3661, %v3660
        %v3663 = vmul.f32 0.5, %v3662
        %v3664 = vsub.f32 1.5, %v3663
        %v3665 = vmul.f32 %v3660, %v3664
        %vm3666 = vweird.f32 %v3619
        %vm3667 = vweird.f32 %v3660
        %vm3668 = vmor %vm3666, %vm3667
        %v3669 = vsel %vm3668, %v3660, %v3665
        %v3670 = vrsqrt.pop %v3620
        %v3671 = vmul.f32 %v3670, %v3620
        %v3672 = vmul.f32 %v3671, %v3670
        %v3673 = vmul.f32 0.5, %v3672
        %v3674 = vsub.f32 1.5, %v3673
        %v3675 = vmul.f32 %v3670, %v3674
        %vm3676 = vweird.f32 %v3620
        %vm3677 = vweird.f32 %v3670
        %vm3678 = vmor %vm3676, %vm3677
        %v3679 = vsel %vm3678, %v3670, %v3675
        %v3680 = vrsqrt.pop %v3621
        %v3681 = vmul.f32 %v3680, %v3621
        %v3682 = vmul.f32 %v3681, %v3680
        %v3683 = vmul.f32 0.5, %v3682
        %v3684 = vsub.f32 1.5, %v3683
        %v3685 = vmul.f32 %v3680, %v3684
        %vm3686 = vweird.f32 %v3621
        %vm3687 = vweird.f32 %v3680
        %vm3688 = vmor %vm3686, %vm3687
        %v3689 = vsel %vm3688, %v3680, %v3685
        %v3690 = vrsqrt.pop %v3622
        %v3691 = vmul.f32 %v3690, %v3622
        %v3692 = vmul.f32 %v3691, %v3690
        %v3693 = vmul.f32 0.5, %v3692
        %v3694 = vsub.f32 1.5, %v3693
        %v3695 = vmul.f32 %v3690, %v3694
        %vm3696 = vweird.f32 %v3622
        %vm3697 = vweird.f32 %v3690
        %vm3698 = vmor %vm3696, %vm3697
        %v3699 = vsel %vm3698, %v3690, %v3695
        %v3700 = vrsqrt.pop %v3623
        %v3701 = vmul.f32 %v3700, %v3623
        %v3702 = vmul.f32 %v3701, %v3700
        %v3703 = vmul.f32 0.5, %v3702
        %v3704 = vsub.f32 1.5, %v3703
        %v3705 = vmul.f32 %v3700, %v3704
        %vm3706 = vweird.f32 %v3623
        %vm3707 = vweird.f32 %v3700
        %vm3708 = vmor %vm3706, %vm3707
        %v3709 = vsel %vm3708, %v3700, %v3705
        %v3710 = vrsqrt.pop %v3624
        %v3711 = vmul.f32 %v3710, %v3624
        %v3712 = vmul.f32 %v3711, %v3710
        %v3713 = vmul.f32 0.5, %v3712
        %v3714 = vsub.f32 1.5, %v3713
        %v3715 = vmul.f32 %v3710, %v3714
        %vm3716 = vweird.f32 %v3624
        %vm3717 = vweird.f32 %v3710
        %vm3718 = vmor %vm3716, %vm3717
        %v3719 = vsel %vm3718, %v3710, %v3715
        %v3720 = vrsqrt.pop %v3625
        %v3721 = vmul.f32 %v3720, %v3625
        %v3722 = vmul.f32 %v3721, %v3720
        %v3723 = vmul.f32 0.5, %v3722
        %v3724 = vsub.f32 1.5, %v3723
        %v3725 = vmul.f32 %v3720, %v3724
        %vm3726 = vweird.f32 %v3625
        %vm3727 = vweird.f32 %v3720
        %vm3728 = vmor %vm3726, %vm3727
        %v3729 = vsel %vm3728, %v3720, %v3725
        %v3730 = vrsqrt.pop %v3626
        %v3731 = vmul.f32 %v3730, %v3626
        %v3732 = vmul.f32 %v3731, %v3730
        %v3733 = vmul.f32 0.5, %v3732
        %v3734 = vsub.f32 1.5, %v3733
        %v3735 = vmul.f32 %v3730, %v3734
        %vm3736 = vweird.f32 %v3626
        %vm3737 = vweird.f32 %v3730
        %vm3738 = vmor %vm3736, %vm3737
        %v3739 = vsel %vm3738, %v3730, %v3735
        %v3740 = vrsqrt.pop %v3627
        %v3741 = vmul.f32 %v3740, %v3627
        %v3742 = vmul.f32 %v3741, %v3740
        %v3743 = vmul.f32 0.5, %v3742
        %v3744 = vsub.f32 1.5, %v3743
        %v3745 = vmul.f32 %v3740, %v3744
        %vm3746 = vweird.f32 %v3627
        %vm3747 = vweird.f32 %v3740
        %vm3748 = vmor %vm3746, %vm3747
        %v3749 = vsel %vm3748, %v3740, %v3745
        %v3750 = vrsqrt.pop %v3628
        %v3751 = vmul.f32 %v3750, %v3628
        %v3752 = vmul.f32 %v3751, %v3750
        %v3753 = vmul.f32 0.5, %v3752
        %v3754 = vsub.f32 1.5, %v3753
        %v3755 = vmul.f32 %v3750, %v3754
        %vm3756 = vweird.f32 %v3628
        %vm3757 = vweird.f32 %v3750
        %vm3758 = vmor %vm3756, %vm3757
        %v3759 = vsel %vm3758, %v3750, %v3755
        %v3760 = vrsqrt.pop %v3629
        %v3761 = vmul.f32 %v3760, %v3629
        %v3762 = vmul.f32 %v3761, %v3760
        %v3763 = vmul.f32 0.5, %v3762
        %v3764 = vsub.f32 1.5, %v3763
        %v3765 = vmul.f32 %v3760, %v3764
        %vm3766 = vweird.f32 %v3629
        %vm3767 = vweird.f32 %v3760
        %vm3768 = vmor %vm3766, %vm3767
        %v3769 = vsel %vm3768, %v3760, %v3765
        %v3770 = vrsqrt.pop %v3630
        %v3771 = vmul.f32 %v3770, %v3630
        %v3772 = vmul.f32 %v3771, %v3770
        %v3773 = vmul.f32 0.5, %v3772
        %v3774 = vsub.f32 1.5, %v3773
        %v3775 = vmul.f32 %v3770, %v3774
        %vm3776 = vweird.f32 %v3630
        %vm3777 = vweird.f32 %v3770
        %vm3778 = vmor %vm3776, %vm3777
        %v3779 = vsel %vm3778, %v3770, %v3775
        %v3780 = vrsqrt.pop %v3631
        %v3781 = vmul.f32 %v3780, %v3631
        %v3782 = vmul.f32 %v3781, %v3780
        %v3783 = vmul.f32 0.5, %v3782
        %v3784 = vsub.f32 1.5, %v3783
        %v3785 = vmul.f32 %v3780, %v3784
        %vm3786 = vweird.f32 %v3631
        %vm3787 = vweird.f32 %v3780
        %vm3788 = vmor %vm3786, %vm3787
        %v3789 = vsel %vm3788, %v3780, %v3785
        %v3790 = vrsqrt.pop %v3632
        %v3791 = vmul.f32 %v3790, %v3632
        %v3792 = vmul.f32 %v3791, %v3790
        %v3793 = vmul.f32 0.5, %v3792
        %v3794 = vsub.f32 1.5, %v3793
        %v3795 = vmul.f32 %v3790, %v3794
        %vm3796 = vweird.f32 %v3632
        %vm3797 = vweird.f32 %v3790
        %vm3798 = vmor %vm3796, %vm3797
        %v3799 = vsel %vm3798, %v3790, %v3795
        %v3800 = vrsqrt.pop %v3633
        %v3801 = vmul.f32 %v3800, %v3633
        %v3802 = vmul.f32 %v3801, %v3800
        %v3803 = vmul.f32 0.5, %v3802
        %v3804 = vsub.f32 1.5, %v3803
        %v3805 = vmul.f32 %v3800, %v3804
        %vm3806 = vweird.f32 %v3633
        %vm3807 = vweird.f32 %v3800
        %vm3808 = vmor %vm3806, %vm3807
        %v3809 = vsel %vm3808, %v3800, %v3805
        %v3810 = vrsqrt.pop %v3634
        %v3811 = vmul.f32 %v3810, %v3634
        %v3812 = vmul.f32 %v3811, %v3810
        %v3813 = vmul.f32 0.5, %v3812
        %v3814 = vsub.f32 1.5, %v3813
        %v3815 = vmul.f32 %v3810, %v3814
        %vm3816 = vweird.f32 %v3634
        %vm3817 = vweird.f32 %v3810
        %vm3818 = vmor %vm3816, %vm3817
        %v3819 = vsel %vm3818, %v3810, %v3815
        %v3820 = vrsqrt.pop %v3635
        %v3821 = vmul.f32 %v3820, %v3635
        %v3822 = vmul.f32 %v3821, %v3820
        %v3823 = vmul.f32 0.5, %v3822
        %v3824 = vsub.f32 1.5, %v3823
        %v3825 = vmul.f32 %v3820, %v3824
        %vm3826 = vweird.f32 %v3635
        %vm3827 = vweird.f32 %v3820
        %vm3828 = vmor %vm3826, %vm3827
        %v3829 = vsel %vm3828, %v3820, %v3825
        %v3830 = vrsqrt.pop %v3636
        %v3831 = vmul.f32 %v3830, %v3636
        %v3832 = vmul.f32 %v3831, %v3830
        %v3833 = vmul.f32 0.5, %v3832
        %v3834 = vsub.f32 1.5, %v3833
        %v3835 = vmul.f32 %v3830, %v3834
        %vm3836 = vweird.f32 %v3636
        %vm3837 = vweird.f32 %v3830
        %vm3838 = vmor %vm3836, %vm3837
        %v3839 = vsel %vm3838, %v3830, %v3835
        %v3840 = vrsqrt.pop %v3637
        %v3841 = vmul.f32 %v3840, %v3637
        %v3842 = vmul.f32 %v3841, %v3840
        %v3843 = vmul.f32 0.5, %v3842
        %v3844 = vsub.f32 1.5, %v3843
        %v3845 = vmul.f32 %v3840, %v3844
        %vm3846 = vweird.f32 %v3637
        %vm3847 = vweird.f32 %v3840
        %vm3848 = vmor %vm3846, %vm3847
        %v3849 = vsel %vm3848, %v3840, %v3845
        %v3850 = vrsqrt.pop %v3638
        %v3851 = vmul.f32 %v3850, %v3638
        %v3852 = vmul.f32 %v3851, %v3850
        %v3853 = vmul.f32 0.5, %v3852
        %v3854 = vsub.f32 1.5, %v3853
        %v3855 = vmul.f32 %v3850, %v3854
        %vm3856 = vweird.f32 %v3638
        %vm3857 = vweird.f32 %v3850
        %vm3858 = vmor %vm3856, %vm3857
        %v3859 = vsel %vm3858, %v3850, %v3855
        %v3860 = vrsqrt.pop %v3639
        %v3861 = vmul.f32 %v3860, %v3639
        %v3862 = vmul.f32 %v3861, %v3860
        %v3863 = vmul.f32 0.5, %v3862
        %v3864 = vsub.f32 1.5, %v3863
        %v3865 = vmul.f32 %v3860, %v3864
        %vm3866 = vweird.f32 %v3639
        %vm3867 = vweird.f32 %v3860
        %vm3868 = vmor %vm3866, %vm3867
        %v3869 = vsel %vm3868, %v3860, %v3865
        %v3870 = vrsqrt.pop %v3640
        %v3871 = vmul.f32 %v3870, %v3640
        %v3872 = vmul.f32 %v3871, %v3870
        %v3873 = vmul.f32 0.5, %v3872
        %v3874 = vsub.f32 1.5, %v3873
        %v3875 = vmul.f32 %v3870, %v3874
        %vm3876 = vweird.f32 %v3640
        %vm3877 = vweird.f32 %v3870
        %vm3878 = vmor %vm3876, %vm3877
        %v3879 = vsel %vm3878, %v3870, %v3875
        %v3880 = vrsqrt.pop %v3641
        %v3881 = vmul.f32 %v3880, %v3641
        %v3882 = vmul.f32 %v3881, %v3880
        %v3883 = vmul.f32 0.5, %v3882
        %v3884 = vsub.f32 1.5, %v3883
        %v3885 = vmul.f32 %v3880, %v3884
        %vm3886 = vweird.f32 %v3641
        %vm3887 = vweird.f32 %v3880
        %vm3888 = vmor %vm3886, %vm3887
        %v3889 = vsel %vm3888, %v3880, %v3885
        %v3890 = vrsqrt.pop %v3642
        %v3891 = vmul.f32 %v3890, %v3642
        %v3892 = vmul.f32 %v3891, %v3890
        %v3893 = vmul.f32 0.5, %v3892
        %v3894 = vsub.f32 1.5, %v3893
        %v3895 = vmul.f32 %v3890, %v3894
        %vm3896 = vweird.f32 %v3642
        %vm3897 = vweird.f32 %v3890
        %vm3898 = vmor %vm3896, %vm3897
        %v3899 = vsel %vm3898, %v3890, %v3895
        %v3900 = vrsqrt.pop %v3643
        %v3901 = vmul.f32 %v3900, %v3643
        %v3902 = vmul.f32 %v3901, %v3900
        %v3903 = vmul.f32 0.5, %v3902
        %v3904 = vsub.f32 1.5, %v3903
        %v3905 = vmul.f32 %v3900, %v3904
        %vm3906 = vweird.f32 %v3643
        %vm3907 = vweird.f32 %v3900
        %vm3908 = vmor %vm3906, %vm3907
        %v3909 = vsel %vm3908, %v3900, %v3905
        %v3910 = vrsqrt.pop %v3644
        %v3911 = vmul.f32 %v3910, %v3644
        %v3912 = vmul.f32 %v3911, %v3910
        %v3913 = vmul.f32 0.5, %v3912
        %v3914 = vsub.f32 1.5, %v3913
        %v3915 = vmul.f32 %v3910, %v3914
        %vm3916 = vweird.f32 %v3644
        %vm3917 = vweird.f32 %v3910
        %vm3918 = vmor %vm3916, %vm3917
        %v3919 = vsel %vm3918, %v3910, %v3915
        %v3920 = vrsqrt.pop %v3645
        %v3921 = vmul.f32 %v3920, %v3645
        %v3922 = vmul.f32 %v3921, %v3920
        %v3923 = vmul.f32 0.5, %v3922
        %v3924 = vsub.f32 1.5, %v3923
        %v3925 = vmul.f32 %v3920, %v3924
        %vm3926 = vweird.f32 %v3645
        %vm3927 = vweird.f32 %v3920
        %vm3928 = vmor %vm3926, %vm3927
        %v3929 = vsel %vm3928, %v3920, %v3925
        %v3930 = vrsqrt.pop %v3646
        %v3931 = vmul.f32 %v3930, %v3646
        %v3932 = vmul.f32 %v3931, %v3930
        %v3933 = vmul.f32 0.5, %v3932
        %v3934 = vsub.f32 1.5, %v3933
        %v3935 = vmul.f32 %v3930, %v3934
        %vm3936 = vweird.f32 %v3646
        %vm3937 = vweird.f32 %v3930
        %vm3938 = vmor %vm3936, %vm3937
        %v3939 = vsel %vm3938, %v3930, %v3935
        %v3940 = vrsqrt.pop %v3647
        %v3941 = vmul.f32 %v3940, %v3647
        %v3942 = vmul.f32 %v3941, %v3940
        %v3943 = vmul.f32 0.5, %v3942
        %v3944 = vsub.f32 1.5, %v3943
        %v3945 = vmul.f32 %v3940, %v3944
        %vm3946 = vweird.f32 %v3647
        %vm3947 = vweird.f32 %v3940
        %vm3948 = vmor %vm3946, %vm3947
        %v3949 = vsel %vm3948, %v3940, %v3945
        %v3950 = vrsqrt.pop %v3648
        %v3951 = vmul.f32 %v3950, %v3648
        %v3952 = vmul.f32 %v3951, %v3950
        %v3953 = vmul.f32 0.5, %v3952
        %v3954 = vsub.f32 1.5, %v3953
        %v3955 = vmul.f32 %v3950, %v3954
        %vm3956 = vweird.f32 %v3648
        %vm3957 = vweird.f32 %v3950
        %vm3958 = vmor %vm3956, %vm3957
        %v3959 = vsel %vm3958, %v3950, %v3955
        %v3960 = vrsqrt.pop %v3649
        %v3961 = vmul.f32 %v3960, %v3649
        %v3962 = vmul.f32 %v3961, %v3960
        %v3963 = vmul.f32 0.5, %v3962
        %v3964 = vsub.f32 1.5, %v3963
        %v3965 = vmul.f32 %v3960, %v3964
        %vm3966 = vweird.f32 %v3649
        %vm3967 = vweird.f32 %v3960
        %vm3968 = vmor %vm3966, %vm3967
        %v3969 = vsel %vm3968, %v3960, %v3965
        %v3970 = vmul.f32 %v3586, %v3659
        %v3971 = vmul.f32 %v3587, %v3669
        %v3972 = vmul.f32 %v3588, %v3679
        %v3973 = vmul.f32 %v3589, %v3689
        %v3974 = vmul.f32 %v3590, %v3699
        %v3975 = vmul.f32 %v3591, %v3709
        %v3976 = vmul.f32 %v3592, %v3719
        %v3977 = vmul.f32 %v3593, %v3729
        %v3978 = vmul.f32 %v3594, %v3739
        %v3979 = vmul.f32 %v3595, %v3749
        %v3980 = vmul.f32 %v3596, %v3759
        %v3981 = vmul.f32 %v3597, %v3769
        %v3982 = vmul.f32 %v3598, %v3779
        %v3983 = vmul.f32 %v3599, %v3789
        %v3984 = vmul.f32 %v3600, %v3799
        %v3985 = vmul.f32 %v3601, %v3809
        %v3986 = vmul.f32 %v3602, %v3819
        %v3987 = vmul.f32 %v3603, %v3829
        %v3988 = vmul.f32 %v3604, %v3839
        %v3989 = vmul.f32 %v3605, %v3849
        %v3990 = vmul.f32 %v3606, %v3859
        %v3991 = vmul.f32 %v3607, %v3869
        %v3992 = vmul.f32 %v3608, %v3879
        %v3993 = vmul.f32 %v3609, %v3889
        %v3994 = vmul.f32 %v3610, %v3899
        %v3995 = vmul.f32 %v3611, %v3909
        %v3996 = vmul.f32 %v3612, %v3919
        %v3997 = vmul.f32 %v3613, %v3929
        %v3998 = vmul.f32 %v3614, %v3939
        %v3999 = vmul.f32 %v3615, %v3949
        %v4000 = vmul.f32 %v3616, %v3959
        %v4001 = vmul.f32 %v3617, %v3969
        %v4002 = vperm.slane %v609, 0
        %v4003 = vmul.f32 %v3970, %v4002
        %v4004 = vmul.f32 %v3971, %v4002
        %v4005 = vmul.f32 %v3972, %v4002
        %v4006 = vmul.f32 %v3973, %v4002
        %v4007 = vmul.f32 %v3974, %v4002
        %v4008 = vmul.f32 %v3975, %v4002
        %v4009 = vmul.f32 %v3976, %v4002
        %v4010 = vmul.f32 %v3977, %v4002
        %v4011 = vmul.f32 %v3978, %v4002
        %v4012 = vmul.f32 %v3979, %v4002
        %v4013 = vmul.f32 %v3980, %v4002
        %v4014 = vmul.f32 %v3981, %v4002
        %v4015 = vmul.f32 %v3982, %v4002
        %v4016 = vmul.f32 %v3983, %v4002
        %v4017 = vmul.f32 %v3984, %v4002
        %v4018 = vmul.f32 %v3985, %v4002
        %v4019 = vmul.f32 %v3986, %v4002
        %v4020 = vmul.f32 %v3987, %v4002
        %v4021 = vmul.f32 %v3988, %v4002
        %v4022 = vmul.f32 %v3989, %v4002
        %v4023 = vmul.f32 %v3990, %v4002
        %v4024 = vmul.f32 %v3991, %v4002
        %v4025 = vmul.f32 %v3992, %v4002
        %v4026 = vmul.f32 %v3993, %v4002
        %v4027 = vmul.f32 %v3994, %v4002
        %v4028 = vmul.f32 %v3995, %v4002
        %v4029 = vmul.f32 %v3996, %v4002
        %v4030 = vmul.f32 %v3997, %v4002
        %v4031 = vmul.f32 %v3998, %v4002
        %v4032 = vmul.f32 %v3999, %v4002
        %v4033 = vmul.f32 %v4000, %v4002
        %v4034 = vmul.f32 %v4001, %v4002
        %v4035 = vperm.slane %v610, 0
        %v4036 = vadd.f32 %v4003, %v4035
        %v4037 = vadd.f32 %v4004, %v4035
        %v4038 = vadd.f32 %v4005, %v4035
        %v4039 = vadd.f32 %v4006, %v4035
        %v4040 = vadd.f32 %v4007, %v4035
        %v4041 = vadd.f32 %v4008, %v4035
        %v4042 = vadd.f32 %v4009, %v4035
        %v4043 = vadd.f32 %v4010, %v4035
        %v4044 = vadd.f32 %v4011, %v4035
        %v4045 = vadd.f32 %v4012, %v4035
        %v4046 = vadd.f32 %v4013, %v4035
        %v4047 = vadd.f32 %v4014, %v4035
        %v4048 = vadd.f32 %v4015, %v4035
        %v4049 = vadd.f32 %v4016, %v4035
        %v4050 = vadd.f32 %v4017, %v4035
        %v4051 = vadd.f32 %v4018, %v4035
        %v4052 = vadd.f32 %v4019, %v4035
        %v4053 = vadd.f32 %v4020, %v4035
        %v4054 = vadd.f32 %v4021, %v4035
        %v4055 = vadd.f32 %v4022, %v4035
        %v4056 = vadd.f32 %v4023, %v4035
        %v4057 = vadd.f32 %v4024, %v4035
        %v4058 = vadd.f32 %v4025, %v4035
        %v4059 = vadd.f32 %v4026, %v4035
        %v4060 = vadd.f32 %v4027, %v4035
        %v4061 = vadd.f32 %v4028, %v4035
        %v4062 = vadd.f32 %v4029, %v4035
        %v4063 = vadd.f32 %v4030, %v4035
        %v4064 = vadd.f32 %v4031, %v4035
        %v4065 = vadd.f32 %v4032, %v4035
        %v4066 = vadd.f32 %v4033, %v4035
        %v4067 = vadd.f32 %v4034, %v4035
        %v4068 = vpack.c.bf16 %v4036, %v4036
        %v4069 = vpack.c.bf16 %v4037, %v4037
        %v4070 = vpack.c.bf16 %v4038, %v4038
        %v4071 = vpack.c.bf16 %v4039, %v4039
        %v4072 = vpack.c.bf16 %v4040, %v4040
        %v4073 = vpack.c.bf16 %v4041, %v4041
        %v4074 = vpack.c.bf16 %v4042, %v4042
        %v4075 = vpack.c.bf16 %v4043, %v4043
        %v4076 = vpack.c.bf16 %v4044, %v4044
        %v4077 = vpack.c.bf16 %v4045, %v4045
        %v4078 = vpack.c.bf16 %v4046, %v4046
        %v4079 = vpack.c.bf16 %v4047, %v4047
        %v4080 = vpack.c.bf16 %v4048, %v4048
        %v4081 = vpack.c.bf16 %v4049, %v4049
        %v4082 = vpack.c.bf16 %v4050, %v4050
        %v4083 = vpack.c.bf16 %v4051, %v4051
        %v4084 = vpack.c.bf16 %v4052, %v4052
        %v4085 = vpack.c.bf16 %v4053, %v4053
        %v4086 = vpack.c.bf16 %v4054, %v4054
        %v4087 = vpack.c.bf16 %v4055, %v4055
        %v4088 = vpack.c.bf16 %v4056, %v4056
        %v4089 = vpack.c.bf16 %v4057, %v4057
        %v4090 = vpack.c.bf16 %v4058, %v4058
        %v4091 = vpack.c.bf16 %v4059, %v4059
        %v4092 = vpack.c.bf16 %v4060, %v4060
        %v4093 = vpack.c.bf16 %v4061, %v4061
        %v4094 = vpack.c.bf16 %v4062, %v4062
        %v4095 = vpack.c.bf16 %v4063, %v4063
        %v4096 = vpack.c.bf16 %v4064, %v4064
        %v4097 = vpack.c.bf16 %v4065, %v4065
        %v4098 = vpack.c.bf16 %v4066, %v4066
        %v4099 = vpack.c.bf16 %v4067, %v4067
        %4100 = vst [vmem:[%s543] sm:$0xf] %v4068
        %4101 = vst [vmem:[%s543 + $0x4] sm:$0xf] %v4069
        %4102 = vst [vmem:[%s543 + $0x8] sm:$0xf] %v4070
        %4103 = vst [vmem:[%s543 + $0xc] sm:$0xf] %v4071
        %4104 = vst [vmem:[%s543 + $0x10] sm:$0xf] %v4072
        %4105 = vst [vmem:[%s543 + $0x14] sm:$0xf] %v4073
        %4106 = vst [vmem:[%s543 + $0x18] sm:$0xf] %v4074
        %4107 = vst [vmem:[%s543 + $0x1c] sm:$0xf] %v4075
        %4108 = vst [vmem:[%s543 + $0x20] sm:$0xf] %v4076
        %4109 = vst [vmem:[%s543 + $0x24] sm:$0xf] %v4077
        %4110 = vst [vmem:[%s543 + $0x28] sm:$0xf] %v4078
        %4111 = vst [vmem:[%s543 + $0x2c] sm:$0xf] %v4079
        %4112 = vst [vmem:[%s543 + $0x30] sm:$0xf] %v4080
        %4113 = vst [vmem:[%s543 + $0x34] sm:$0xf] %v4081
        %4114 = vst [vmem:[%s543 + $0x38] sm:$0xf] %v4082
        %4115 = vst [vmem:[%s543 + $0x3c] sm:$0xf] %v4083
        %4116 = vst [vmem:[%s543 + $0x40] sm:$0xf] %v4084
        %4117 = vst [vmem:[%s543 + $0x44] sm:$0xf] %v4085
        %4118 = vst [vmem:[%s543 + $0x48] sm:$0xf] %v4086
        %4119 = vst [vmem:[%s543 + $0x4c] sm:$0xf] %v4087
        %4120 = vst [vmem:[%s543 + $0x50] sm:$0xf] %v4088
        %4121 = vst [vmem:[%s543 + $0x54] sm:$0xf] %v4089
        %4122 = vst [vmem:[%s543 + $0x58] sm:$0xf] %v4090
        %4123 = vst [vmem:[%s543 + $0x5c] sm:$0xf] %v4091
        %4124 = vst [vmem:[%s543 + $0x60] sm:$0xf] %v4092
        %4125 = vst [vmem:[%s543 + $0x64] sm:$0xf] %v4093
        %4126 = vst [vmem:[%s543 + $0x68] sm:$0xf] %v4094
        %4127 = vst [vmem:[%s543 + $0x6c] sm:$0xf] %v4095
        %4128 = vst [vmem:[%s543 + $0x70] sm:$0xf] %v4096
        %4129 = vst [vmem:[%s543 + $0x74] sm:$0xf] %v4097
        %4130 = vst [vmem:[%s543 + $0x78] sm:$0xf] %v4098
        %4131 = vst [vmem:[%s543 + $0x7c] sm:$0xf] %v4099
        %s4132 = sand.u32 %s329, 1
        %s4133 = scalar_lea.sflag [#allocation3], %s4132
        %s4134 = sand.u32 %s329, 1
        %s4135 = smul.addr %s4134, 128
        %s4136 = scalar_lea.vmem [#allocation2], %s4135
        // Predicated region
        $region65: #{embedder_forward.1} parent=63 // pred_check
          %p4137 = pneg %p339
        $region66: #{embedder_forward.1} parent=63 // pred_check_branch
          %4139 = sbr.rel (%p4137) target = $region68
        $region67: #{embedder_forward.1} parent=63 // pred_region
          %s4140 = smul.u32 16, %s31
          %s4141 = smul.u32 2, %s32
          %4143 = vsyncadd %s4133, 0
          %s4144 = smul.addr %s4140, 2
          %s4145 = sadd.s32 %s4141, %s4144
          %s4146 = smul.addr %s30, 32
          %s4147 = sadd.s32 %s4145, %s4146
          %s4148 = smul.addr %s4147, 4
          %s4149 = scalar_lea.hbm %s11, %s4148
          %s4150 = sshll.u32 %s4136, 4
          %s4151 = int_to_ptr.vmem [resolvable:$true] %s4150
          %s4152 = sshll.u32 %s4149, 4
          %s4153 = int_to_ptr.hbm [resolvable:$true] %s4152
          %4158 = dma.vmem_to_hbm [thread:$0]  %s4151, 2048, %s4153, %s4133, 64, 64, 4
        $region68: #{embedder_forward.1} parent=63 // pred_fallthru
          _
      $region64: #{embedder_forward.1} parent=5 // pred_fallthru
        _
      %p4159 = scmp.le.s32.totalorder 2, %s20
      // Predicated region
      $region69: #{embedder_forward.1} parent=5 // pred_check
        %p4160 = pneg %p4159
      $region70: #{embedder_forward.1} parent=5 // pred_check_branch
        %4162 = sbr.rel (%p4160) target = $region72
      $region71: #{embedder_forward.1} parent=5 // pred_region
        %s4163 = ssub.s32 %s20, 2
        // Predicated region
        $region73: #{embedder_forward.1} parent=71 // pred_check
          %p4164 = pneg %p345
        $region74: #{embedder_forward.1} parent=71 // pred_check_branch
          %4166 = sbr.rel (%p4164) target = $region76
        $region75: #{embedder_forward.1} parent=71 // pred_region
          %s4167 = sand.u32 %s330, 1
          %s4168 = scalar_lea.sflag [#allocation3], %s4167
          %s4169 = sand.u32 %s330, 1
          %s4170 = smul.addr %s4169, 128
          %s4171 = scalar_lea.vmem [#allocation2], %s4170
          %4173 = dma.done %s4168, 2048
        $region76: #{embedder_forward.1} parent=71 // pred_fallthru
          _
      $region72: #{embedder_forward.1} parent=5 // pred_fallthru
        _
    $region6: #{embedder_forward.1} parent=1 // loop_footer
      %s24 = sadd.s32 1, %s20
    $region7: #{embedder_forward.1} parent=1 // loop_footer_branch
      %19 = sbr.rel target = $region3
    $region8: #{embedder_forward.1} parent=1 // loop_exit
      _
    %4174 = vsyncpa [#allocation3], 1
    %s4175 = scalar_lea.sflag [#allocation3], 1
    %4176 = vsyncpa %s4175, 1

</llo_original>
